<compile_context>
chip_gen: v7x
topology: tpu7x:2x2x1
jax: 0.10.0
libtpu: 0.0.40
codegen_flags: <defaults>
</compile_context>

<pallas_src>
import functools

import jax
import jax.numpy as jnp
from jax import lax
from jax.experimental import pallas as pl
from jax.experimental.pallas import tpu as pltpu


# ----------------------------- configuration -----------------------------
B = 2            # batch (serving tip: batch >= 8 amortizes the serial recurrence)
T_ENC = 8        # history horizon length
T_DEC = 6        # forecast horizon length
ENC_FEAT = 3     # encoder main features
ENC_AUX = 1      # encoder aux features
DEC_FEAT = 3     # decoder main features
DEC_AUX = 1      # decoder aux features

ENC_SIZE = ENC_FEAT + ENC_AUX            # 4  (Encoder GRU input size)
DEC_SIZE = DEC_FEAT + DEC_AUX            # 4  (Decoder GRU input size)
REL_LINEAR_HIDDEN = 1.0
REL_CORE_HIDDEN = 1.0
LINEAR_HIDDEN = int(REL_LINEAR_HIDDEN * (ENC_SIZE + DEC_SIZE))   # 8
CORE_HIDDEN = int(REL_CORE_HIDDEN * (ENC_SIZE + DEC_SIZE))       # 8
OUT_SIZE = 2
N_TARGET_FEATURES = 1
OUT_TOTAL = OUT_SIZE * N_TARGET_FEATURES  # decoder fc2 output dim
RELU_LEAK = 0.01
# core_layers = 1 (single-layer GRU, the module default)


# ------------------------------ Pallas kernel -----------------------------
def _encdec_kernel(
    # inputs (batch-first, as handed to the nn.Module)
    enc_main_ref, enc_aux_ref, dec_main_ref, dec_aux_ref,
    # encoder GRU params (gate axis 0 = r, z, n)
    enc_wih_ref, enc_whh_ref, enc_bih_ref, enc_bhh_ref,
    # decoder GRU params
    dec_wih_ref, dec_whh_ref, dec_bih_ref, dec_bhh_ref,
    # decoder fc params
    fc1_w_ref, fc1_b_ref, fc2_w_ref, fc2_b_ref,
    # outputs
    pred_ref, state_ref,
    *, t_enc, t_dec, hidden, relu_leak,
):
    batch = enc_main_ref.shape[0]

    # ---- load the (tiny) parameters into values ----
    e_wi, e_wh = enc_wih_ref[...], enc_whh_ref[...]     # (3, E, H), (3, H, H)
    e_bi, e_bh = enc_bih_ref[...], enc_bhh_ref[...]     # (3, 1, H), (3, 1, H)
    d_wi, d_wh = dec_wih_ref[...], dec_whh_ref[...]     # (3, D, H), (3, H, H)
    d_bi, d_bh = dec_bih_ref[...], dec_bhh_ref[...]     # (3, 1, H), (3, 1, H)

    # ---- feature concat happens in VMEM, once (not as XLA ops in the wrapper)
    ex = jnp.concatenate([enc_main_ref[...], enc_aux_ref[...]], axis=2)  # (B, Te, E)
    dx = jnp.concatenate([dec_main_ref[...], dec_aux_ref[...]], axis=2)  # (B, Td, D)

    # ---- hoisted input-side gate pre-activations for every time step ----
    def precompute(x, wi, bi, bh, t_len):
        x2 = x.reshape(batch * t_len, x.shape[2])        # (B*T, F), row = b*T + t
        pre = []
        for g in range(3):
            p = jnp.dot(x2, wi[g], preferred_element_type=jnp.float32) + bi[g]
            if g < 2:                                    # recurrent bias of r/z folds in
                p = p + bh[g]
            pre.append(p.reshape(batch, t_len, hidden))  # (B, T, H)
        return pre                                       # [pre_r, pre_z, pre_n]

    e_pre_r, e_pre_z, e_pre_n = precompute(ex, e_wi, e_bi, e_bh, t_enc)
    d_pre_r, d_pre_z, d_pre_n = precompute(dx, d_wi, d_bi, d_bh, t_dec)

    # ---- one GRU step: only the hidden-side dots are on the serial path ----
    def gru_step(h, pre_r_t, pre_z_t, pre_n_t, wh, b_hn):
        hr = jnp.dot(h, wh[0], preferred_element_type=jnp.float32)
        hz = jnp.dot(h, wh[1], preferred_element_type=jnp.float32)
        hn = jnp.dot(h, wh[2], preferred_element_type=jnp.float32) + b_hn
        r = jax.nn.sigmoid(pre_r_t + hr)
        z = jax.nn.sigmoid(pre_z_t + hz)
        n = jnp.tanh(pre_n_t + r * hn)
        return (1.0 - z) * n + z * h

    # ---- encoder recurrence (statically unrolled, zero initial state) ----
    h = jnp.zeros((batch, hidden), jnp.float32)
    for t in range(t_enc):
        h = gru_step(h, e_pre_r[:, t], e_pre_z[:, t], e_pre_n[:, t], e_wh, e_bh[2])

    # ---- decoder recurrence (statically unrolled), keep every hidden state --
    hs = []
    for t in range(t_dec):
        h = gru_step(h, d_pre_r[:, t], d_pre_z[:, t], d_pre_n[:, t], d_wh, d_bh[2])
        hs.append(h)
    state_ref[...] = h                                    # (B, H)

    # ---- fc1 -> LeakyReLU -> fc2 over all decoder steps (dropout p = 0) ----
    hs_all = jnp.stack(hs, axis=1)                        # (B, Td, H), batch-first
    flat = hs_all.reshape(batch * t_dec, hidden)          # row = b*Td + t
    o1 = jnp.dot(flat, fc1_w_ref[...],
                 preferred_element_type=jnp.float32) + fc1_b_ref[...]
    o1 = jnp.where(o1 >= 0.0, o1, relu_leak * o1)         # LeakyReLU
    o2 = jnp.dot(o1, fc2_w_ref[...],
                 preferred_element_type=jnp.float32) + fc2_b_ref[...]
    pred_ref[...] = o2.reshape(batch, t_dec, o2.shape[-1])  # (B, Td, OUT) batch-first


# ------------------------------ parameters --------------------------------
def init_params(key):
    """Deterministic init mimicking PyTorch's uniform(-1/sqrt(H), 1/sqrt(H)).

    GRU weights are stored pre-transposed and per-gate: axis 0 = (r, z, n),
    each gate block shaped (in_features, H) / (H, H); biases (3, 1, H).
    fc weights are stored pre-transposed (in, out); biases (1, out).
    """
    ks = jax.random.split(key, 12)
    b_gru = 1.0 / (CORE_HIDDEN ** 0.5)
    b_fc1 = 1.0 / (CORE_HIDDEN ** 0.5)
    b_fc2 = 1.0 / (LINEAR_HIDDEN ** 0.5)

    def u(k, shape, bound):
        return jax.random.uniform(k, shape, jnp.float32, -bound, bound)

    return dict(
        enc_wih_t=u(ks[0], (3, ENC_SIZE, CORE_HIDDEN), b_gru),
        enc_whh_t=u(ks[1], (3, CORE_HIDDEN, CORE_HIDDEN), b_gru),
        enc_bih=u(ks[2], (3, 1, CORE_HIDDEN), b_gru),
        enc_bhh=u(ks[3], (3, 1, CORE_HIDDEN), b_gru),
        dec_wih_t=u(ks[4], (3, DEC_SIZE, CORE_HIDDEN), b_gru),
        dec_whh_t=u(ks[5], (3, CORE_HIDDEN, CORE_HIDDEN), b_gru),
        dec_bih=u(ks[6], (3, 1, CORE_HIDDEN), b_gru),
        dec_bhh=u(ks[7], (3, 1, CORE_HIDDEN), b_gru),
        fc1_w_t=u(ks[8], (CORE_HIDDEN, LINEAR_HIDDEN), b_fc1),
        fc1_b=u(ks[9], (1, LINEAR_HIDDEN), b_fc1),
        fc2_w_t=u(ks[10], (LINEAR_HIDDEN, OUT_TOTAL), b_fc2),
        fc2_b=u(ks[11], (1, OUT_TOTAL), b_fc2),
    )


# ------------------------------ JAX wrapper -------------------------------
@jax.jit
def encoder_decoder_forward(params, inputs_enc, inputs_enc_aux,
                            inputs_dec, inputs_dec_aux, last_value):
    # `last_value` is accepted but unused: the reference forward overwrites it
    # immediately (out = last_value; out, states = self.core(...)).
    del last_value

    kernel = functools.partial(
        _encdec_kernel,
        t_enc=T_ENC, t_dec=T_DEC, hidden=CORE_HIDDEN, relu_leak=RELU_LEAK,
    )
    vmem = pl.BlockSpec(memory_space=pltpu.MemorySpace.VMEM)

    pred, state = pl.pallas_call(
        kernel,
        out_shape=(
            jax.ShapeDtypeStruct((B, T_DEC, OUT_TOTAL), jnp.float32),
            jax.ShapeDtypeStruct((B, CORE_HIDDEN), jnp.float32),
        ),
        in_specs=[vmem] * 16,
        out_specs=(vmem, vmem),
    )(
        inputs_enc.astype(jnp.float32), inputs_enc_aux.astype(jnp.float32),
        inputs_dec.astype(jnp.float32), inputs_dec_aux.astype(jnp.float32),
        params["enc_wih_t"], params["enc_whh_t"],
        params["enc_bih"], params["enc_bhh"],
        params["dec_wih_t"], params["dec_whh_t"],
        params["dec_bih"], params["dec_bhh"],
        params["fc1_w_t"], params["fc1_b"],
        params["fc2_w_t"], params["fc2_b"],
    )

    # Free metadata-only reshapes (kernel output is already batch-first):
    pred = pred.reshape(B, T_DEC, N_TARGET_FEATURES, OUT_SIZE)
    states_decoder = state[None]            # (num_layers=1, B, core_hidden)
    return pred, states_decoder


# -------------------- pure-JAX reference (for validation) ------------------
def _reference_forward(params, inputs_enc, inputs_enc_aux, inputs_dec, inputs_dec_aux):
    hi = jax.lax.Precision.HIGHEST

    def gru_seq(x_seq, h0, wi, wh, bi, bh):
        def step(h, x_t):
            r = jax.nn.sigmoid(jnp.dot(x_t, wi[0], precision=hi) + bi[0]
                               + jnp.dot(h, wh[0], precision=hi) + bh[0])
            z = jax.nn.sigmoid(jnp.dot(x_t, wi[1], precision=hi) + bi[1]
                               + jnp.dot(h, wh[1], precision=hi) + bh[1])
            n = jnp.tanh(jnp.dot(x_t, wi[2], precision=hi) + bi[2]
                         + r * (jnp.dot(h, wh[2], precision=hi) + bh[2]))
            h_new = (1.0 - z) * n + z * h
            return h_new, h_new
        h_last, hs = lax.scan(step, h0, jnp.swapaxes(x_seq, 0, 1))
        return h_last, jnp.swapaxes(hs, 0, 1)            # (B, H), (B, T, H)

    ex = jnp.concatenate([inputs_enc, inputs_enc_aux], axis=2)
    dx = jnp.concatenate([inputs_dec, inputs_dec_aux], axis=2)
    h0 = jnp.zeros((ex.shape[0], CORE_HIDDEN), jnp.float32)
    h_enc, _ = gru_seq(ex, h0, params["enc_wih_t"], params["enc_whh_t"],
                       params["enc_bih"], params["enc_bhh"])
    h_dec, hs = gru_seq(dx, h_enc, params["dec_wih_t"], params["dec_whh_t"],
                        params["dec_bih"], params["dec_bhh"])
    o1 = jnp.matmul(hs, params["fc1_w_t"], precision=hi) + params["fc1_b"]
    o1 = jnp.where(o1 >= 0.0, o1, RELU_LEAK * o1)
    o2 = jnp.matmul(o1, params["fc2_w_t"], precision=hi) + params["fc2_b"]
    pred = o2.reshape(ex.shape[0], dx.shape[1], N_TARGET_FEATURES, OUT_SIZE)
    return pred, h_dec[None]


# --------------------------------- main -----------------------------------
if __name__ == "__main__":
    key = jax.random.PRNGKey(0)
    k_p, k1, k2, k3, k4, k5 = jax.random.split(key, 6)

    params = init_params(k_p)

    inputs_enc = jax.random.normal(k1, (B, T_ENC, ENC_FEAT), jnp.float32)
    inputs_enc_aux = jax.random.normal(k2, (B, T_ENC, ENC_AUX), jnp.float32)
    inputs_dec = jax.random.normal(k3, (B, T_DEC, DEC_FEAT), jnp.float32)
    inputs_dec_aux = jax.random.normal(k4, (B, T_DEC, DEC_AUX), jnp.float32)
    last_value = jax.random.normal(k5, (B, N_TARGET_FEATURES), jnp.float32)

    pred, states = encoder_decoder_forward(
        params, inputs_enc, inputs_enc_aux, inputs_dec, inputs_dec_aux, last_value)
    jax.block_until_ready((pred, states))

    assert pred.shape == (B, T_DEC, N_TARGET_FEATURES, OUT_SIZE), pred.shape
    assert states.shape == (1, B, CORE_HIDDEN), states.shape
    assert bool(jnp.all(jnp.isfinite(pred))) and bool(jnp.all(jnp.isfinite(states)))

    # Validate against a pure-JAX reference of the same GRU/fc math.
    ref_pred, ref_states = _reference_forward(
        params, inputs_enc, inputs_enc_aux, inputs_dec, inputs_dec_aux)
    assert bool(jnp.allclose(pred, ref_pred, rtol=1e-3, atol=1e-3)), (
        float(jnp.max(jnp.abs(pred - ref_pred))))
    assert bool(jnp.allclose(states, ref_states, rtol=1e-3, atol=1e-3)), (
        float(jnp.max(jnp.abs(states - ref_states))))

    print("KERNEL_OK")
</pallas_src>

<mosaic_0001>
module attributes {stable_mosaic.version = 11 : i64} {
  func.func @_encdec_kernel(%arg0: memref<2x8x3xf32, #tpu.memory_space<vmem>>, %arg1: memref<2x8x1xf32, #tpu.memory_space<vmem>>, %arg2: memref<2x6x3xf32, #tpu.memory_space<vmem>>, %arg3: memref<2x6x1xf32, #tpu.memory_space<vmem>>, %arg4: memref<3x4x8xf32, #tpu.memory_space<vmem>>, %arg5: memref<3x8x8xf32, #tpu.memory_space<vmem>>, %arg6: memref<3x1x8xf32, #tpu.memory_space<vmem>>, %arg7: memref<3x1x8xf32, #tpu.memory_space<vmem>>, %arg8: memref<3x4x8xf32, #tpu.memory_space<vmem>>, %arg9: memref<3x8x8xf32, #tpu.memory_space<vmem>>, %arg10: memref<3x1x8xf32, #tpu.memory_space<vmem>>, %arg11: memref<3x1x8xf32, #tpu.memory_space<vmem>>, %arg12: memref<8x8xf32, #tpu.memory_space<vmem>>, %arg13: memref<1x8xf32, #tpu.memory_space<vmem>>, %arg14: memref<8x2xf32, #tpu.memory_space<vmem>>, %arg15: memref<1x2xf32, #tpu.memory_space<vmem>>, %arg16: memref<2x6x2xf32, #tpu.memory_space<vmem>>, %arg17: memref<2x8xf32, #tpu.memory_space<vmem>>) attributes {dimension_semantics = [], scalar_prefetch = 0 : i64, scratch_operands = 0 : i64, tpu.core_type = #tpu.core_type<tc>} {
    %c0 = arith.constant 0 : index
    %c0_0 = arith.constant 0 : index
    %c0_1 = arith.constant 0 : index
    %0 = vector.load %arg4[%c0, %c0_0, %c0_1] : memref<3x4x8xf32, #tpu.memory_space<vmem>>, vector<3x4x8xf32>
    %c0_2 = arith.constant 0 : index
    %c0_3 = arith.constant 0 : index
    %c0_4 = arith.constant 0 : index
    %1 = vector.load %arg5[%c0_2, %c0_3, %c0_4] : memref<3x8x8xf32, #tpu.memory_space<vmem>>, vector<3x8x8xf32>
    %c0_5 = arith.constant 0 : index
    %c0_6 = arith.constant 0 : index
    %c0_7 = arith.constant 0 : index
    %2 = vector.load %arg6[%c0_5, %c0_6, %c0_7] : memref<3x1x8xf32, #tpu.memory_space<vmem>>, vector<3x1x8xf32>
    %c0_8 = arith.constant 0 : index
    %c0_9 = arith.constant 0 : index
    %c0_10 = arith.constant 0 : index
    %3 = vector.load %arg7[%c0_8, %c0_9, %c0_10] : memref<3x1x8xf32, #tpu.memory_space<vmem>>, vector<3x1x8xf32>
    %c0_11 = arith.constant 0 : index
    %c0_12 = arith.constant 0 : index
    %c0_13 = arith.constant 0 : index
    %4 = vector.load %arg8[%c0_11, %c0_12, %c0_13] : memref<3x4x8xf32, #tpu.memory_space<vmem>>, vector<3x4x8xf32>
    %c0_14 = arith.constant 0 : index
    %c0_15 = arith.constant 0 : index
    %c0_16 = arith.constant 0 : index
    %5 = vector.load %arg9[%c0_14, %c0_15, %c0_16] : memref<3x8x8xf32, #tpu.memory_space<vmem>>, vector<3x8x8xf32>
    %c0_17 = arith.constant 0 : index
    %c0_18 = arith.constant 0 : index
    %c0_19 = arith.constant 0 : index
    %6 = vector.load %arg10[%c0_17, %c0_18, %c0_19] : memref<3x1x8xf32, #tpu.memory_space<vmem>>, vector<3x1x8xf32>
    %c0_20 = arith.constant 0 : index
    %c0_21 = arith.constant 0 : index
    %c0_22 = arith.constant 0 : index
    %7 = vector.load %arg11[%c0_20, %c0_21, %c0_22] : memref<3x1x8xf32, #tpu.memory_space<vmem>>, vector<3x1x8xf32>
    %c0_23 = arith.constant 0 : index
    %c0_24 = arith.constant 0 : index
    %c0_25 = arith.constant 0 : index
    %8 = vector.load %arg0[%c0_23, %c0_24, %c0_25] : memref<2x8x3xf32, #tpu.memory_space<vmem>>, vector<2x8x3xf32>
    %c0_26 = arith.constant 0 : index
    %c0_27 = arith.constant 0 : index
    %c0_28 = arith.constant 0 : index
    %9 = vector.load %arg1[%c0_26, %c0_27, %c0_28] : memref<2x8x1xf32, #tpu.memory_space<vmem>>, vector<2x8x1xf32>
    %10 = tpu.concatenate %8, %9 in 2 : vector<2x8x3xf32>, vector<2x8x1xf32> -> vector<2x8x4xf32>
    %c0_29 = arith.constant 0 : index
    %c0_30 = arith.constant 0 : index
    %c0_31 = arith.constant 0 : index
    %11 = vector.load %arg2[%c0_29, %c0_30, %c0_31] : memref<2x6x3xf32, #tpu.memory_space<vmem>>, vector<2x6x3xf32>
    %c0_32 = arith.constant 0 : index
    %c0_33 = arith.constant 0 : index
    %c0_34 = arith.constant 0 : index
    %12 = vector.load %arg3[%c0_32, %c0_33, %c0_34] : memref<2x6x1xf32, #tpu.memory_space<vmem>>, vector<2x6x1xf32>
    %13 = tpu.concatenate %11, %12 in 2 : vector<2x6x3xf32>, vector<2x6x1xf32> -> vector<2x6x4xf32>
    %14 = vector.shape_cast %10 : vector<2x8x4xf32> to vector<16x4xf32>
    %15 = vector.extract_strided_slice %0 {offsets = [0, 0, 0], sizes = [1, 4, 8], strides = [1, 1, 1]} : vector<3x4x8xf32> to vector<1x4x8xf32>
    %16 = vector.shape_cast %15 : vector<1x4x8xf32> to vector<4x8xf32>
    %cst = arith.constant dense<0.000000e+00> : vector<16x8xf32>
    %17 = tpu.matmul %14, %16, %cst {dimension_numbers = #tpu.dot_dimension_numbers<[1], [0], [0], [1], [0, 0, 1, 1], [], []>} : vector<16x4xf32>, vector<4x8xf32>, vector<16x8xf32> -> vector<16x8xf32>
    %18 = vector.extract_strided_slice %2 {offsets = [0, 0, 0], sizes = [1, 1, 8], strides = [1, 1, 1]} : vector<3x1x8xf32> to vector<1x1x8xf32>
    %19 = vector.shape_cast %18 : vector<1x1x8xf32> to vector<1x8xf32>
    %20 = vector.broadcast %19 : vector<1x8xf32> to vector<16x8xf32>
    %21 = arith.addf %17, %20 : vector<16x8xf32>
    %22 = vector.extract_strided_slice %3 {offsets = [0, 0, 0], sizes = [1, 1, 8], strides = [1, 1, 1]} : vector<3x1x8xf32> to vector<1x1x8xf32>
    %23 = vector.shape_cast %22 : vector<1x1x8xf32> to vector<1x8xf32>
    %24 = vector.broadcast %23 : vector<1x8xf32> to vector<16x8xf32>
    %25 = arith.addf %21, %24 : vector<16x8xf32>
    %26 = vector.shape_cast %25 : vector<16x8xf32> to vector<2x8x8xf32>
    %27 = vector.extract_strided_slice %0 {offsets = [1, 0, 0], sizes = [1, 4, 8], strides = [1, 1, 1]} : vector<3x4x8xf32> to vector<1x4x8xf32>
    %28 = vector.shape_cast %27 : vector<1x4x8xf32> to vector<4x8xf32>
    %cst_35 = arith.constant dense<0.000000e+00> : vector<16x8xf32>
    %29 = tpu.matmul %14, %28, %cst_35 {dimension_numbers = #tpu.dot_dimension_numbers<[1], [0], [0], [1], [0, 0, 1, 1], [], []>} : vector<16x4xf32>, vector<4x8xf32>, vector<16x8xf32> -> vector<16x8xf32>
    %30 = vector.extract_strided_slice %2 {offsets = [1, 0, 0], sizes = [1, 1, 8], strides = [1, 1, 1]} : vector<3x1x8xf32> to vector<1x1x8xf32>
    %31 = vector.shape_cast %30 : vector<1x1x8xf32> to vector<1x8xf32>
    %32 = vector.broadcast %31 : vector<1x8xf32> to vector<16x8xf32>
    %33 = arith.addf %29, %32 : vector<16x8xf32>
    %34 = vector.extract_strided_slice %3 {offsets = [1, 0, 0], sizes = [1, 1, 8], strides = [1, 1, 1]} : vector<3x1x8xf32> to vector<1x1x8xf32>
    %35 = vector.shape_cast %34 : vector<1x1x8xf32> to vector<1x8xf32>
    %36 = vector.broadcast %35 : vector<1x8xf32> to vector<16x8xf32>
    %37 = arith.addf %33, %36 : vector<16x8xf32>
    %38 = vector.shape_cast %37 : vector<16x8xf32> to vector<2x8x8xf32>
    %39 = vector.extract_strided_slice %0 {offsets = [2, 0, 0], sizes = [1, 4, 8], strides = [1, 1, 1]} : vector<3x4x8xf32> to vector<1x4x8xf32>
    %40 = vector.shape_cast %39 : vector<1x4x8xf32> to vector<4x8xf32>
    %cst_36 = arith.constant dense<0.000000e+00> : vector<16x8xf32>
    %41 = tpu.matmul %14, %40, %cst_36 {dimension_numbers = #tpu.dot_dimension_numbers<[1], [0], [0], [1], [0, 0, 1, 1], [], []>} : vector<16x4xf32>, vector<4x8xf32>, vector<16x8xf32> -> vector<16x8xf32>
    %42 = vector.extract_strided_slice %2 {offsets = [2, 0, 0], sizes = [1, 1, 8], strides = [1, 1, 1]} : vector<3x1x8xf32> to vector<1x1x8xf32>
    %43 = vector.shape_cast %42 : vector<1x1x8xf32> to vector<1x8xf32>
    %44 = vector.broadcast %43 : vector<1x8xf32> to vector<16x8xf32>
    %45 = arith.addf %41, %44 : vector<16x8xf32>
    %46 = vector.shape_cast %45 : vector<16x8xf32> to vector<2x8x8xf32>
    %47 = vector.shape_cast %13 : vector<2x6x4xf32> to vector<12x4xf32>
    %48 = vector.extract_strided_slice %4 {offsets = [0, 0, 0], sizes = [1, 4, 8], strides = [1, 1, 1]} : vector<3x4x8xf32> to vector<1x4x8xf32>
    %49 = vector.shape_cast %48 : vector<1x4x8xf32> to vector<4x8xf32>
    %cst_37 = arith.constant dense<0.000000e+00> : vector<12x8xf32>
    %50 = tpu.matmul %47, %49, %cst_37 {dimension_numbers = #tpu.dot_dimension_numbers<[1], [0], [0], [1], [0, 0, 1, 1], [], []>} : vector<12x4xf32>, vector<4x8xf32>, vector<12x8xf32> -> vector<12x8xf32>
    %51 = vector.extract_strided_slice %6 {offsets = [0, 0, 0], sizes = [1, 1, 8], strides = [1, 1, 1]} : vector<3x1x8xf32> to vector<1x1x8xf32>
    %52 = vector.shape_cast %51 : vector<1x1x8xf32> to vector<1x8xf32>
    %53 = vector.broadcast %52 : vector<1x8xf32> to vector<12x8xf32>
    %54 = arith.addf %50, %53 : vector<12x8xf32>
    %55 = vector.extract_strided_slice %7 {offsets = [0, 0, 0], sizes = [1, 1, 8], strides = [1, 1, 1]} : vector<3x1x8xf32> to vector<1x1x8xf32>
    %56 = vector.shape_cast %55 : vector<1x1x8xf32> to vector<1x8xf32>
    %57 = vector.broadcast %56 : vector<1x8xf32> to vector<12x8xf32>
    %58 = arith.addf %54, %57 : vector<12x8xf32>
    %59 = vector.shape_cast %58 : vector<12x8xf32> to vector<2x6x8xf32>
    %60 = vector.extract_strided_slice %4 {offsets = [1, 0, 0], sizes = [1, 4, 8], strides = [1, 1, 1]} : vector<3x4x8xf32> to vector<1x4x8xf32>
    %61 = vector.shape_cast %60 : vector<1x4x8xf32> to vector<4x8xf32>
    %cst_38 = arith.constant dense<0.000000e+00> : vector<12x8xf32>
    %62 = tpu.matmul %47, %61, %cst_38 {dimension_numbers = #tpu.dot_dimension_numbers<[1], [0], [0], [1], [0, 0, 1, 1], [], []>} : vector<12x4xf32>, vector<4x8xf32>, vector<12x8xf32> -> vector<12x8xf32>
    %63 = vector.extract_strided_slice %6 {offsets = [1, 0, 0], sizes = [1, 1, 8], strides = [1, 1, 1]} : vector<3x1x8xf32> to vector<1x1x8xf32>
    %64 = vector.shape_cast %63 : vector<1x1x8xf32> to vector<1x8xf32>
    %65 = vector.broadcast %64 : vector<1x8xf32> to vector<12x8xf32>
    %66 = arith.addf %62, %65 : vector<12x8xf32>
    %67 = vector.extract_strided_slice %7 {offsets = [1, 0, 0], sizes = [1, 1, 8], strides = [1, 1, 1]} : vector<3x1x8xf32> to vector<1x1x8xf32>
    %68 = vector.shape_cast %67 : vector<1x1x8xf32> to vector<1x8xf32>
    %69 = vector.broadcast %68 : vector<1x8xf32> to vector<12x8xf32>
    %70 = arith.addf %66, %69 : vector<12x8xf32>
    %71 = vector.shape_cast %70 : vector<12x8xf32> to vector<2x6x8xf32>
    %72 = vector.extract_strided_slice %4 {offsets = [2, 0, 0], sizes = [1, 4, 8], strides = [1, 1, 1]} : vector<3x4x8xf32> to vector<1x4x8xf32>
    %73 = vector.shape_cast %72 : vector<1x4x8xf32> to vector<4x8xf32>
    %cst_39 = arith.constant dense<0.000000e+00> : vector<12x8xf32>
    %74 = tpu.matmul %47, %73, %cst_39 {dimension_numbers = #tpu.dot_dimension_numbers<[1], [0], [0], [1], [0, 0, 1, 1], [], []>} : vector<12x4xf32>, vector<4x8xf32>, vector<12x8xf32> -> vector<12x8xf32>
    %75 = vector.extract_strided_slice %6 {offsets = [2, 0, 0], sizes = [1, 1, 8], strides = [1, 1, 1]} : vector<3x1x8xf32> to vector<1x1x8xf32>
    %76 = vector.shape_cast %75 : vector<1x1x8xf32> to vector<1x8xf32>
    %77 = vector.broadcast %76 : vector<1x8xf32> to vector<12x8xf32>
    %78 = arith.addf %74, %77 : vector<12x8xf32>
    %79 = vector.shape_cast %78 : vector<12x8xf32> to vector<2x6x8xf32>
    %cst_40 = arith.constant 0.000000e+00 : f32
    %80 = vector.broadcast %cst_40 : f32 to vector<2x8xf32>
    %81 = vector.extract_strided_slice %26 {offsets = [0, 0, 0], sizes = [2, 1, 8], strides = [1, 1, 1]} : vector<2x8x8xf32> to vector<2x1x8xf32>
    %82 = vector.shape_cast %81 : vector<2x1x8xf32> to vector<2x8xf32>
    %83 = vector.extract_strided_slice %38 {offsets = [0, 0, 0], sizes = [2, 1, 8], strides = [1, 1, 1]} : vector<2x8x8xf32> to vector<2x1x8xf32>
    %84 = vector.shape_cast %83 : vector<2x1x8xf32> to vector<2x8xf32>
    %85 = vector.extract_strided_slice %46 {offsets = [0, 0, 0], sizes = [2, 1, 8], strides = [1, 1, 1]} : vector<2x8x8xf32> to vector<2x1x8xf32>
    %86 = vector.shape_cast %85 : vector<2x1x8xf32> to vector<2x8xf32>
    %87 = vector.extract_strided_slice %3 {offsets = [2, 0, 0], sizes = [1, 1, 8], strides = [1, 1, 1]} : vector<3x1x8xf32> to vector<1x1x8xf32>
    %88 = vector.shape_cast %87 : vector<1x1x8xf32> to vector<1x8xf32>
    %89 = vector.extract_strided_slice %1 {offsets = [0, 0, 0], sizes = [1, 8, 8], strides = [1, 1, 1]} : vector<3x8x8xf32> to vector<1x8x8xf32>
    %90 = vector.shape_cast %89 : vector<1x8x8xf32> to vector<8x8xf32>
    %cst_41 = arith.constant dense<0.000000e+00> : vector<2x8xf32>
    %91 = tpu.matmul %80, %90, %cst_41 {dimension_numbers = #tpu.dot_dimension_numbers<[1], [0], [0], [1], [0, 0, 1, 1], [], []>} : vector<2x8xf32>, vector<8x8xf32>, vector<2x8xf32> -> vector<2x8xf32>
    %92 = vector.extract_strided_slice %1 {offsets = [1, 0, 0], sizes = [1, 8, 8], strides = [1, 1, 1]} : vector<3x8x8xf32> to vector<1x8x8xf32>
    %93 = vector.shape_cast %92 : vector<1x8x8xf32> to vector<8x8xf32>
    %cst_42 = arith.constant dense<0.000000e+00> : vector<2x8xf32>
    %94 = tpu.matmul %80, %93, %cst_42 {dimension_numbers = #tpu.dot_dimension_numbers<[1], [0], [0], [1], [0, 0, 1, 1], [], []>} : vector<2x8xf32>, vector<8x8xf32>, vector<2x8xf32> -> vector<2x8xf32>
    %95 = vector.extract_strided_slice %1 {offsets = [2, 0, 0], sizes = [1, 8, 8], strides = [1, 1, 1]} : vector<3x8x8xf32> to vector<1x8x8xf32>
    %96 = vector.shape_cast %95 : vector<1x8x8xf32> to vector<8x8xf32>
    %cst_43 = arith.constant dense<0.000000e+00> : vector<2x8xf32>
    %97 = tpu.matmul %80, %96, %cst_43 {dimension_numbers = #tpu.dot_dimension_numbers<[1], [0], [0], [1], [0, 0, 1, 1], [], []>} : vector<2x8xf32>, vector<8x8xf32>, vector<2x8xf32> -> vector<2x8xf32>
    %98 = vector.broadcast %88 : vector<1x8xf32> to vector<2x8xf32>
    %99 = arith.addf %97, %98 : vector<2x8xf32>
    %100 = arith.addf %82, %91 : vector<2x8xf32>
    %101 = arith.negf %100 : vector<2x8xf32>
    %102 = math.exp %101 : vector<2x8xf32>
    %cst_44 = arith.constant 1.000000e+00 : f32
    %103 = vector.broadcast %cst_44 : f32 to vector<2x8xf32>
    %104 = arith.addf %103, %102 : vector<2x8xf32>
    %105 = arith.divf %103, %104 : vector<2x8xf32>
    %106 = arith.addf %84, %94 : vector<2x8xf32>
    %107 = arith.negf %106 : vector<2x8xf32>
    %108 = math.exp %107 : vector<2x8xf32>
    %cst_45 = arith.constant 1.000000e+00 : f32
    %109 = vector.broadcast %cst_45 : f32 to vector<2x8xf32>
    %110 = arith.addf %109, %108 : vector<2x8xf32>
    %111 = arith.divf %109, %110 : vector<2x8xf32>
    %112 = arith.mulf %105, %99 : vector<2x8xf32>
    %113 = arith.addf %86, %112 : vector<2x8xf32>
    %114 = math.tanh %113 : vector<2x8xf32>
    %cst_46 = arith.constant 1.000000e+00 : f32
    %115 = vector.broadcast %cst_46 : f32 to vector<2x8xf32>
    %116 = arith.subf %115, %111 : vector<2x8xf32>
    %117 = arith.mulf %116, %114 : vector<2x8xf32>
    %118 = arith.mulf %111, %80 : vector<2x8xf32>
    %119 = arith.addf %117, %118 : vector<2x8xf32>
    %120 = vector.extract_strided_slice %26 {offsets = [0, 1, 0], sizes = [2, 1, 8], strides = [1, 1, 1]} : vector<2x8x8xf32> to vector<2x1x8xf32>
    %121 = vector.shape_cast %120 : vector<2x1x8xf32> to vector<2x8xf32>
    %122 = vector.extract_strided_slice %38 {offsets = [0, 1, 0], sizes = [2, 1, 8], strides = [1, 1, 1]} : vector<2x8x8xf32> to vector<2x1x8xf32>
    %123 = vector.shape_cast %122 : vector<2x1x8xf32> to vector<2x8xf32>
    %124 = vector.extract_strided_slice %46 {offsets = [0, 1, 0], sizes = [2, 1, 8], strides = [1, 1, 1]} : vector<2x8x8xf32> to vector<2x1x8xf32>
    %125 = vector.shape_cast %124 : vector<2x1x8xf32> to vector<2x8xf32>
    %126 = vector.extract_strided_slice %3 {offsets = [2, 0, 0], sizes = [1, 1, 8], strides = [1, 1, 1]} : vector<3x1x8xf32> to vector<1x1x8xf32>
    %127 = vector.shape_cast %126 : vector<1x1x8xf32> to vector<1x8xf32>
    %128 = vector.extract_strided_slice %1 {offsets = [0, 0, 0], sizes = [1, 8, 8], strides = [1, 1, 1]} : vector<3x8x8xf32> to vector<1x8x8xf32>
    %129 = vector.shape_cast %128 : vector<1x8x8xf32> to vector<8x8xf32>
    %cst_47 = arith.constant dense<0.000000e+00> : vector<2x8xf32>
    %130 = tpu.matmul %119, %129, %cst_47 {dimension_numbers = #tpu.dot_dimension_numbers<[1], [0], [0], [1], [0, 0, 1, 1], [], []>} : vector<2x8xf32>, vector<8x8xf32>, vector<2x8xf32> -> vector<2x8xf32>
    %131 = vector.extract_strided_slice %1 {offsets = [1, 0, 0], sizes = [1, 8, 8], strides = [1, 1, 1]} : vector<3x8x8xf32> to vector<1x8x8xf32>
    %132 = vector.shape_cast %131 : vector<1x8x8xf32> to vector<8x8xf32>
    %cst_48 = arith.constant dense<0.000000e+00> : vector<2x8xf32>
    %133 = tpu.matmul %119, %132, %cst_48 {dimension_numbers = #tpu.dot_dimension_numbers<[1], [0], [0], [1], [0, 0, 1, 1], [], []>} : vector<2x8xf32>, vector<8x8xf32>, vector<2x8xf32> -> vector<2x8xf32>
    %134 = vector.extract_strided_slice %1 {offsets = [2, 0, 0], sizes = [1, 8, 8], strides = [1, 1, 1]} : vector<3x8x8xf32> to vector<1x8x8xf32>
    %135 = vector.shape_cast %134 : vector<1x8x8xf32> to vector<8x8xf32>
    %cst_49 = arith.constant dense<0.000000e+00> : vector<2x8xf32>
    %136 = tpu.matmul %119, %135, %cst_49 {dimension_numbers = #tpu.dot_dimension_numbers<[1], [0], [0], [1], [0, 0, 1, 1], [], []>} : vector<2x8xf32>, vector<8x8xf32>, vector<2x8xf32> -> vector<2x8xf32>
    %137 = vector.broadcast %127 : vector<1x8xf32> to vector<2x8xf32>
    %138 = arith.addf %136, %137 : vector<2x8xf32>
    %139 = arith.addf %121, %130 : vector<2x8xf32>
    %140 = arith.negf %139 : vector<2x8xf32>
    %141 = math.exp %140 : vector<2x8xf32>
    %cst_50 = arith.constant 1.000000e+00 : f32
    %142 = vector.broadcast %cst_50 : f32 to vector<2x8xf32>
    %143 = arith.addf %142, %141 : vector<2x8xf32>
    %144 = arith.divf %142, %143 : vector<2x8xf32>
    %145 = arith.addf %123, %133 : vector<2x8xf32>
    %146 = arith.negf %145 : vector<2x8xf32>
    %147 = math.exp %146 : vector<2x8xf32>
    %cst_51 = arith.constant 1.000000e+00 : f32
    %148 = vector.broadcast %cst_51 : f32 to vector<2x8xf32>
    %149 = arith.addf %148, %147 : vector<2x8xf32>
    %150 = arith.divf %148, %149 : vector<2x8xf32>
    %151 = arith.mulf %144, %138 : vector<2x8xf32>
    %152 = arith.addf %125, %151 : vector<2x8xf32>
    %153 = math.tanh %152 : vector<2x8xf32>
    %cst_52 = arith.constant 1.000000e+00 : f32
    %154 = vector.broadcast %cst_52 : f32 to vector<2x8xf32>
    %155 = arith.subf %154, %150 : vector<2x8xf32>
    %156 = arith.mulf %155, %153 : vector<2x8xf32>
    %157 = arith.mulf %150, %119 : vector<2x8xf32>
    %158 = arith.addf %156, %157 : vector<2x8xf32>
    %159 = vector.extract_strided_slice %26 {offsets = [0, 2, 0], sizes = [2, 1, 8], strides = [1, 1, 1]} : vector<2x8x8xf32> to vector<2x1x8xf32>
    %160 = vector.shape_cast %159 : vector<2x1x8xf32> to vector<2x8xf32>
    %161 = vector.extract_strided_slice %38 {offsets = [0, 2, 0], sizes = [2, 1, 8], strides = [1, 1, 1]} : vector<2x8x8xf32> to vector<2x1x8xf32>
    %162 = vector.shape_cast %161 : vector<2x1x8xf32> to vector<2x8xf32>
    %163 = vector.extract_strided_slice %46 {offsets = [0, 2, 0], sizes = [2, 1, 8], strides = [1, 1, 1]} : vector<2x8x8xf32> to vector<2x1x8xf32>
    %164 = vector.shape_cast %163 : vector<2x1x8xf32> to vector<2x8xf32>
    %165 = vector.extract_strided_slice %3 {offsets = [2, 0, 0], sizes = [1, 1, 8], strides = [1, 1, 1]} : vector<3x1x8xf32> to vector<1x1x8xf32>
    %166 = vector.shape_cast %165 : vector<1x1x8xf32> to vector<1x8xf32>
    %167 = vector.extract_strided_slice %1 {offsets = [0, 0, 0], sizes = [1, 8, 8], strides = [1, 1, 1]} : vector<3x8x8xf32> to vector<1x8x8xf32>
    %168 = vector.shape_cast %167 : vector<1x8x8xf32> to vector<8x8xf32>
    %cst_53 = arith.constant dense<0.000000e+00> : vector<2x8xf32>
    %169 = tpu.matmul %158, %168, %cst_53 {dimension_numbers = #tpu.dot_dimension_numbers<[1], [0], [0], [1], [0, 0, 1, 1], [], []>} : vector<2x8xf32>, vector<8x8xf32>, vector<2x8xf32> -> vector<2x8xf32>
    %170 = vector.extract_strided_slice %1 {offsets = [1, 0, 0], sizes = [1, 8, 8], strides = [1, 1, 1]} : vector<3x8x8xf32> to vector<1x8x8xf32>
    %171 = vector.shape_cast %170 : vector<1x8x8xf32> to vector<8x8xf32>
    %cst_54 = arith.constant dense<0.000000e+00> : vector<2x8xf32>
    %172 = tpu.matmul %158, %171, %cst_54 {dimension_numbers = #tpu.dot_dimension_numbers<[1], [0], [0], [1], [0, 0, 1, 1], [], []>} : vector<2x8xf32>, vector<8x8xf32>, vector<2x8xf32> -> vector<2x8xf32>
    %173 = vector.extract_strided_slice %1 {offsets = [2, 0, 0], sizes = [1, 8, 8], strides = [1, 1, 1]} : vector<3x8x8xf32> to vector<1x8x8xf32>
    %174 = vector.shape_cast %173 : vector<1x8x8xf32> to vector<8x8xf32>
    %cst_55 = arith.constant dense<0.000000e+00> : vector<2x8xf32>
    %175 = tpu.matmul %158, %174, %cst_55 {dimension_numbers = #tpu.dot_dimension_numbers<[1], [0], [0], [1], [0, 0, 1, 1], [], []>} : vector<2x8xf32>, vector<8x8xf32>, vector<2x8xf32> -> vector<2x8xf32>
    %176 = vector.broadcast %166 : vector<1x8xf32> to vector<2x8xf32>
    %177 = arith.addf %175, %176 : vector<2x8xf32>
    %178 = arith.addf %160, %169 : vector<2x8xf32>
    %179 = arith.negf %178 : vector<2x8xf32>
    %180 = math.exp %179 : vector<2x8xf32>
    %cst_56 = arith.constant 1.000000e+00 : f32
    %181 = vector.broadcast %cst_56 : f32 to vector<2x8xf32>
    %182 = arith.addf %181, %180 : vector<2x8xf32>
    %183 = arith.divf %181, %182 : vector<2x8xf32>
    %184 = arith.addf %162, %172 : vector<2x8xf32>
    %185 = arith.negf %184 : vector<2x8xf32>
    %186 = math.exp %185 : vector<2x8xf32>
    %cst_57 = arith.constant 1.000000e+00 : f32
    %187 = vector.broadcast %cst_57 : f32 to vector<2x8xf32>
    %188 = arith.addf %187, %186 : vector<2x8xf32>
    %189 = arith.divf %187, %188 : vector<2x8xf32>
    %190 = arith.mulf %183, %177 : vector<2x8xf32>
    %191 = arith.addf %164, %190 : vector<2x8xf32>
    %192 = math.tanh %191 : vector<2x8xf32>
    %cst_58 = arith.constant 1.000000e+00 : f32
    %193 = vector.broadcast %cst_58 : f32 to vector<2x8xf32>
    %194 = arith.subf %193, %189 : vector<2x8xf32>
    %195 = arith.mulf %194, %192 : vector<2x8xf32>
    %196 = arith.mulf %189, %158 : vector<2x8xf32>
    %197 = arith.addf %195, %196 : vector<2x8xf32>
    %198 = vector.extract_strided_slice %26 {offsets = [0, 3, 0], sizes = [2, 1, 8], strides = [1, 1, 1]} : vector<2x8x8xf32> to vector<2x1x8xf32>
    %199 = vector.shape_cast %198 : vector<2x1x8xf32> to vector<2x8xf32>
    %200 = vector.extract_strided_slice %38 {offsets = [0, 3, 0], sizes = [2, 1, 8], strides = [1, 1, 1]} : vector<2x8x8xf32> to vector<2x1x8xf32>
    %201 = vector.shape_cast %200 : vector<2x1x8xf32> to vector<2x8xf32>
    %202 = vector.extract_strided_slice %46 {offsets = [0, 3, 0], sizes = [2, 1, 8], strides = [1, 1, 1]} : vector<2x8x8xf32> to vector<2x1x8xf32>
    %203 = vector.shape_cast %202 : vector<2x1x8xf32> to vector<2x8xf32>
    %204 = vector.extract_strided_slice %3 {offsets = [2, 0, 0], sizes = [1, 1, 8], strides = [1, 1, 1]} : vector<3x1x8xf32> to vector<1x1x8xf32>
    %205 = vector.shape_cast %204 : vector<1x1x8xf32> to vector<1x8xf32>
    %206 = vector.extract_strided_slice %1 {offsets = [0, 0, 0], sizes = [1, 8, 8], strides = [1, 1, 1]} : vector<3x8x8xf32> to vector<1x8x8xf32>
    %207 = vector.shape_cast %206 : vector<1x8x8xf32> to vector<8x8xf32>
    %cst_59 = arith.constant dense<0.000000e+00> : vector<2x8xf32>
    %208 = tpu.matmul %197, %207, %cst_59 {dimension_numbers = #tpu.dot_dimension_numbers<[1], [0], [0], [1], [0, 0, 1, 1], [], []>} : vector<2x8xf32>, vector<8x8xf32>, vector<2x8xf32> -> vector<2x8xf32>
    %209 = vector.extract_strided_slice %1 {offsets = [1, 0, 0], sizes = [1, 8, 8], strides = [1, 1, 1]} : vector<3x8x8xf32> to vector<1x8x8xf32>
    %210 = vector.shape_cast %209 : vector<1x8x8xf32> to vector<8x8xf32>
    %cst_60 = arith.constant dense<0.000000e+00> : vector<2x8xf32>
    %211 = tpu.matmul %197, %210, %cst_60 {dimension_numbers = #tpu.dot_dimension_numbers<[1], [0], [0], [1], [0, 0, 1, 1], [], []>} : vector<2x8xf32>, vector<8x8xf32>, vector<2x8xf32> -> vector<2x8xf32>
    %212 = vector.extract_strided_slice %1 {offsets = [2, 0, 0], sizes = [1, 8, 8], strides = [1, 1, 1]} : vector<3x8x8xf32> to vector<1x8x8xf32>
    %213 = vector.shape_cast %212 : vector<1x8x8xf32> to vector<8x8xf32>
    %cst_61 = arith.constant dense<0.000000e+00> : vector<2x8xf32>
    %214 = tpu.matmul %197, %213, %cst_61 {dimension_numbers = #tpu.dot_dimension_numbers<[1], [0], [0], [1], [0, 0, 1, 1], [], []>} : vector<2x8xf32>, vector<8x8xf32>, vector<2x8xf32> -> vector<2x8xf32>
    %215 = vector.broadcast %205 : vector<1x8xf32> to vector<2x8xf32>
    %216 = arith.addf %214, %215 : vector<2x8xf32>
    %217 = arith.addf %199, %208 : vector<2x8xf32>
    %218 = arith.negf %217 : vector<2x8xf32>
    %219 = math.exp %218 : vector<2x8xf32>
    %cst_62 = arith.constant 1.000000e+00 : f32
    %220 = vector.broadcast %cst_62 : f32 to vector<2x8xf32>
    %221 = arith.addf %220, %219 : vector<2x8xf32>
    %222 = arith.divf %220, %221 : vector<2x8xf32>
    %223 = arith.addf %201, %211 : vector<2x8xf32>
    %224 = arith.negf %223 : vector<2x8xf32>
    %225 = math.exp %224 : vector<2x8xf32>
    %cst_63 = arith.constant 1.000000e+00 : f32
    %226 = vector.broadcast %cst_63 : f32 to vector<2x8xf32>
    %227 = arith.addf %226, %225 : vector<2x8xf32>
    %228 = arith.divf %226, %227 : vector<2x8xf32>
    %229 = arith.mulf %222, %216 : vector<2x8xf32>
    %230 = arith.addf %203, %229 : vector<2x8xf32>
    %231 = math.tanh %230 : vector<2x8xf32>
    %cst_64 = arith.constant 1.000000e+00 : f32
    %232 = vector.broadcast %cst_64 : f32 to vector<2x8xf32>
    %233 = arith.subf %232, %228 : vector<2x8xf32>
    %234 = arith.mulf %233, %231 : vector<2x8xf32>
    %235 = arith.mulf %228, %197 : vector<2x8xf32>
    %236 = arith.addf %234, %235 : vector<2x8xf32>
    %237 = vector.extract_strided_slice %26 {offsets = [0, 4, 0], sizes = [2, 1, 8], strides = [1, 1, 1]} : vector<2x8x8xf32> to vector<2x1x8xf32>
    %238 = vector.shape_cast %237 : vector<2x1x8xf32> to vector<2x8xf32>
    %239 = vector.extract_strided_slice %38 {offsets = [0, 4, 0], sizes = [2, 1, 8], strides = [1, 1, 1]} : vector<2x8x8xf32> to vector<2x1x8xf32>
    %240 = vector.shape_cast %239 : vector<2x1x8xf32> to vector<2x8xf32>
    %241 = vector.extract_strided_slice %46 {offsets = [0, 4, 0], sizes = [2, 1, 8], strides = [1, 1, 1]} : vector<2x8x8xf32> to vector<2x1x8xf32>
    %242 = vector.shape_cast %241 : vector<2x1x8xf32> to vector<2x8xf32>
    %243 = vector.extract_strided_slice %3 {offsets = [2, 0, 0], sizes = [1, 1, 8], strides = [1, 1, 1]} : vector<3x1x8xf32> to vector<1x1x8xf32>
    %244 = vector.shape_cast %243 : vector<1x1x8xf32> to vector<1x8xf32>
    %245 = vector.extract_strided_slice %1 {offsets = [0, 0, 0], sizes = [1, 8, 8], strides = [1, 1, 1]} : vector<3x8x8xf32> to vector<1x8x8xf32>
    %246 = vector.shape_cast %245 : vector<1x8x8xf32> to vector<8x8xf32>
    %cst_65 = arith.constant dense<0.000000e+00> : vector<2x8xf32>
    %247 = tpu.matmul %236, %246, %cst_65 {dimension_numbers = #tpu.dot_dimension_numbers<[1], [0], [0], [1], [0, 0, 1, 1], [], []>} : vector<2x8xf32>, vector<8x8xf32>, vector<2x8xf32> -> vector<2x8xf32>
    %248 = vector.extract_strided_slice %1 {offsets = [1, 0, 0], sizes = [1, 8, 8], strides = [1, 1, 1]} : vector<3x8x8xf32> to vector<1x8x8xf32>
    %249 = vector.shape_cast %248 : vector<1x8x8xf32> to vector<8x8xf32>
    %cst_66 = arith.constant dense<0.000000e+00> : vector<2x8xf32>
    %250 = tpu.matmul %236, %249, %cst_66 {dimension_numbers = #tpu.dot_dimension_numbers<[1], [0], [0], [1], [0, 0, 1, 1], [], []>} : vector<2x8xf32>, vector<8x8xf32>, vector<2x8xf32> -> vector<2x8xf32>
    %251 = vector.extract_strided_slice %1 {offsets = [2, 0, 0], sizes = [1, 8, 8], strides = [1, 1, 1]} : vector<3x8x8xf32> to vector<1x8x8xf32>
    %252 = vector.shape_cast %251 : vector<1x8x8xf32> to vector<8x8xf32>
    %cst_67 = arith.constant dense<0.000000e+00> : vector<2x8xf32>
    %253 = tpu.matmul %236, %252, %cst_67 {dimension_numbers = #tpu.dot_dimension_numbers<[1], [0], [0], [1], [0, 0, 1, 1], [], []>} : vector<2x8xf32>, vector<8x8xf32>, vector<2x8xf32> -> vector<2x8xf32>
    %254 = vector.broadcast %244 : vector<1x8xf32> to vector<2x8xf32>
    %255 = arith.addf %253, %254 : vector<2x8xf32>
    %256 = arith.addf %238, %247 : vector<2x8xf32>
    %257 = arith.negf %256 : vector<2x8xf32>
    %258 = math.exp %257 : vector<2x8xf32>
    %cst_68 = arith.constant 1.000000e+00 : f32
    %259 = vector.broadcast %cst_68 : f32 to vector<2x8xf32>
    %260 = arith.addf %259, %258 : vector<2x8xf32>
    %261 = arith.divf %259, %260 : vector<2x8xf32>
    %262 = arith.addf %240, %250 : vector<2x8xf32>
    %263 = arith.negf %262 : vector<2x8xf32>
    %264 = math.exp %263 : vector<2x8xf32>
    %cst_69 = arith.constant 1.000000e+00 : f32
    %265 = vector.broadcast %cst_69 : f32 to vector<2x8xf32>
    %266 = arith.addf %265, %264 : vector<2x8xf32>
    %267 = arith.divf %265, %266 : vector<2x8xf32>
    %268 = arith.mulf %261, %255 : vector<2x8xf32>
    %269 = arith.addf %242, %268 : vector<2x8xf32>
    %270 = math.tanh %269 : vector<2x8xf32>
    %cst_70 = arith.constant 1.000000e+00 : f32
    %271 = vector.broadcast %cst_70 : f32 to vector<2x8xf32>
    %272 = arith.subf %271, %267 : vector<2x8xf32>
    %273 = arith.mulf %272, %270 : vector<2x8xf32>
    %274 = arith.mulf %267, %236 : vector<2x8xf32>
    %275 = arith.addf %273, %274 : vector<2x8xf32>
    %276 = vector.extract_strided_slice %26 {offsets = [0, 5, 0], sizes = [2, 1, 8], strides = [1, 1, 1]} : vector<2x8x8xf32> to vector<2x1x8xf32>
    %277 = vector.shape_cast %276 : vector<2x1x8xf32> to vector<2x8xf32>
    %278 = vector.extract_strided_slice %38 {offsets = [0, 5, 0], sizes = [2, 1, 8], strides = [1, 1, 1]} : vector<2x8x8xf32> to vector<2x1x8xf32>
    %279 = vector.shape_cast %278 : vector<2x1x8xf32> to vector<2x8xf32>
    %280 = vector.extract_strided_slice %46 {offsets = [0, 5, 0], sizes = [2, 1, 8], strides = [1, 1, 1]} : vector<2x8x8xf32> to vector<2x1x8xf32>
    %281 = vector.shape_cast %280 : vector<2x1x8xf32> to vector<2x8xf32>
    %282 = vector.extract_strided_slice %3 {offsets = [2, 0, 0], sizes = [1, 1, 8], strides = [1, 1, 1]} : vector<3x1x8xf32> to vector<1x1x8xf32>
    %283 = vector.shape_cast %282 : vector<1x1x8xf32> to vector<1x8xf32>
    %284 = vector.extract_strided_slice %1 {offsets = [0, 0, 0], sizes = [1, 8, 8], strides = [1, 1, 1]} : vector<3x8x8xf32> to vector<1x8x8xf32>
    %285 = vector.shape_cast %284 : vector<1x8x8xf32> to vector<8x8xf32>
    %cst_71 = arith.constant dense<0.000000e+00> : vector<2x8xf32>
    %286 = tpu.matmul %275, %285, %cst_71 {dimension_numbers = #tpu.dot_dimension_numbers<[1], [0], [0], [1], [0, 0, 1, 1], [], []>} : vector<2x8xf32>, vector<8x8xf32>, vector<2x8xf32> -> vector<2x8xf32>
    %287 = vector.extract_strided_slice %1 {offsets = [1, 0, 0], sizes = [1, 8, 8], strides = [1, 1, 1]} : vector<3x8x8xf32> to vector<1x8x8xf32>
    %288 = vector.shape_cast %287 : vector<1x8x8xf32> to vector<8x8xf32>
    %cst_72 = arith.constant dense<0.000000e+00> : vector<2x8xf32>
    %289 = tpu.matmul %275, %288, %cst_72 {dimension_numbers = #tpu.dot_dimension_numbers<[1], [0], [0], [1], [0, 0, 1, 1], [], []>} : vector<2x8xf32>, vector<8x8xf32>, vector<2x8xf32> -> vector<2x8xf32>
    %290 = vector.extract_strided_slice %1 {offsets = [2, 0, 0], sizes = [1, 8, 8], strides = [1, 1, 1]} : vector<3x8x8xf32> to vector<1x8x8xf32>
    %291 = vector.shape_cast %290 : vector<1x8x8xf32> to vector<8x8xf32>
    %cst_73 = arith.constant dense<0.000000e+00> : vector<2x8xf32>
    %292 = tpu.matmul %275, %291, %cst_73 {dimension_numbers = #tpu.dot_dimension_numbers<[1], [0], [0], [1], [0, 0, 1, 1], [], []>} : vector<2x8xf32>, vector<8x8xf32>, vector<2x8xf32> -> vector<2x8xf32>
    %293 = vector.broadcast %283 : vector<1x8xf32> to vector<2x8xf32>
    %294 = arith.addf %292, %293 : vector<2x8xf32>
    %295 = arith.addf %277, %286 : vector<2x8xf32>
    %296 = arith.negf %295 : vector<2x8xf32>
    %297 = math.exp %296 : vector<2x8xf32>
    %cst_74 = arith.constant 1.000000e+00 : f32
    %298 = vector.broadcast %cst_74 : f32 to vector<2x8xf32>
    %299 = arith.addf %298, %297 : vector<2x8xf32>
    %300 = arith.divf %298, %299 : vector<2x8xf32>
    %301 = arith.addf %279, %289 : vector<2x8xf32>
    %302 = arith.negf %301 : vector<2x8xf32>
    %303 = math.exp %302 : vector<2x8xf32>
    %cst_75 = arith.constant 1.000000e+00 : f32
    %304 = vector.broadcast %cst_75 : f32 to vector<2x8xf32>
    %305 = arith.addf %304, %303 : vector<2x8xf32>
    %306 = arith.divf %304, %305 : vector<2x8xf32>
    %307 = arith.mulf %300, %294 : vector<2x8xf32>
    %308 = arith.addf %281, %307 : vector<2x8xf32>
    %309 = math.tanh %308 : vector<2x8xf32>
    %cst_76 = arith.constant 1.000000e+00 : f32
    %310 = vector.broadcast %cst_76 : f32 to vector<2x8xf32>
    %311 = arith.subf %310, %306 : vector<2x8xf32>
    %312 = arith.mulf %311, %309 : vector<2x8xf32>
    %313 = arith.mulf %306, %275 : vector<2x8xf32>
    %314 = arith.addf %312, %313 : vector<2x8xf32>
    %315 = vector.extract_strided_slice %26 {offsets = [0, 6, 0], sizes = [2, 1, 8], strides = [1, 1, 1]} : vector<2x8x8xf32> to vector<2x1x8xf32>
    %316 = vector.shape_cast %315 : vector<2x1x8xf32> to vector<2x8xf32>
    %317 = vector.extract_strided_slice %38 {offsets = [0, 6, 0], sizes = [2, 1, 8], strides = [1, 1, 1]} : vector<2x8x8xf32> to vector<2x1x8xf32>
    %318 = vector.shape_cast %317 : vector<2x1x8xf32> to vector<2x8xf32>
    %319 = vector.extract_strided_slice %46 {offsets = [0, 6, 0], sizes = [2, 1, 8], strides = [1, 1, 1]} : vector<2x8x8xf32> to vector<2x1x8xf32>
    %320 = vector.shape_cast %319 : vector<2x1x8xf32> to vector<2x8xf32>
    %321 = vector.extract_strided_slice %3 {offsets = [2, 0, 0], sizes = [1, 1, 8], strides = [1, 1, 1]} : vector<3x1x8xf32> to vector<1x1x8xf32>
    %322 = vector.shape_cast %321 : vector<1x1x8xf32> to vector<1x8xf32>
    %323 = vector.extract_strided_slice %1 {offsets = [0, 0, 0], sizes = [1, 8, 8], strides = [1, 1, 1]} : vector<3x8x8xf32> to vector<1x8x8xf32>
    %324 = vector.shape_cast %323 : vector<1x8x8xf32> to vector<8x8xf32>
    %cst_77 = arith.constant dense<0.000000e+00> : vector<2x8xf32>
    %325 = tpu.matmul %314, %324, %cst_77 {dimension_numbers = #tpu.dot_dimension_numbers<[1], [0], [0], [1], [0, 0, 1, 1], [], []>} : vector<2x8xf32>, vector<8x8xf32>, vector<2x8xf32> -> vector<2x8xf32>
    %326 = vector.extract_strided_slice %1 {offsets = [1, 0, 0], sizes = [1, 8, 8], strides = [1, 1, 1]} : vector<3x8x8xf32> to vector<1x8x8xf32>
    %327 = vector.shape_cast %326 : vector<1x8x8xf32> to vector<8x8xf32>
    %cst_78 = arith.constant dense<0.000000e+00> : vector<2x8xf32>
    %328 = tpu.matmul %314, %327, %cst_78 {dimension_numbers = #tpu.dot_dimension_numbers<[1], [0], [0], [1], [0, 0, 1, 1], [], []>} : vector<2x8xf32>, vector<8x8xf32>, vector<2x8xf32> -> vector<2x8xf32>
    %329 = vector.extract_strided_slice %1 {offsets = [2, 0, 0], sizes = [1, 8, 8], strides = [1, 1, 1]} : vector<3x8x8xf32> to vector<1x8x8xf32>
    %330 = vector.shape_cast %329 : vector<1x8x8xf32> to vector<8x8xf32>
    %cst_79 = arith.constant dense<0.000000e+00> : vector<2x8xf32>
    %331 = tpu.matmul %314, %330, %cst_79 {dimension_numbers = #tpu.dot_dimension_numbers<[1], [0], [0], [1], [0, 0, 1, 1], [], []>} : vector<2x8xf32>, vector<8x8xf32>, vector<2x8xf32> -> vector<2x8xf32>
    %332 = vector.broadcast %322 : vector<1x8xf32> to vector<2x8xf32>
    %333 = arith.addf %331, %332 : vector<2x8xf32>
    %334 = arith.addf %316, %325 : vector<2x8xf32>
    %335 = arith.negf %334 : vector<2x8xf32>
    %336 = math.exp %335 : vector<2x8xf32>
    %cst_80 = arith.constant 1.000000e+00 : f32
    %337 = vector.broadcast %cst_80 : f32 to vector<2x8xf32>
    %338 = arith.addf %337, %336 : vector<2x8xf32>
    %339 = arith.divf %337, %338 : vector<2x8xf32>
    %340 = arith.addf %318, %328 : vector<2x8xf32>
    %341 = arith.negf %340 : vector<2x8xf32>
    %342 = math.exp %341 : vector<2x8xf32>
    %cst_81 = arith.constant 1.000000e+00 : f32
    %343 = vector.broadcast %cst_81 : f32 to vector<2x8xf32>
    %344 = arith.addf %343, %342 : vector<2x8xf32>
    %345 = arith.divf %343, %344 : vector<2x8xf32>
    %346 = arith.mulf %339, %333 : vector<2x8xf32>
    %347 = arith.addf %320, %346 : vector<2x8xf32>
    %348 = math.tanh %347 : vector<2x8xf32>
    %cst_82 = arith.constant 1.000000e+00 : f32
    %349 = vector.broadcast %cst_82 : f32 to vector<2x8xf32>
    %350 = arith.subf %349, %345 : vector<2x8xf32>
    %351 = arith.mulf %350, %348 : vector<2x8xf32>
    %352 = arith.mulf %345, %314 : vector<2x8xf32>
    %353 = arith.addf %351, %352 : vector<2x8xf32>
    %354 = vector.extract_strided_slice %26 {offsets = [0, 7, 0], sizes = [2, 1, 8], strides = [1, 1, 1]} : vector<2x8x8xf32> to vector<2x1x8xf32>
    %355 = vector.shape_cast %354 : vector<2x1x8xf32> to vector<2x8xf32>
    %356 = vector.extract_strided_slice %38 {offsets = [0, 7, 0], sizes = [2, 1, 8], strides = [1, 1, 1]} : vector<2x8x8xf32> to vector<2x1x8xf32>
    %357 = vector.shape_cast %356 : vector<2x1x8xf32> to vector<2x8xf32>
    %358 = vector.extract_strided_slice %46 {offsets = [0, 7, 0], sizes = [2, 1, 8], strides = [1, 1, 1]} : vector<2x8x8xf32> to vector<2x1x8xf32>
    %359 = vector.shape_cast %358 : vector<2x1x8xf32> to vector<2x8xf32>
    %360 = vector.extract_strided_slice %3 {offsets = [2, 0, 0], sizes = [1, 1, 8], strides = [1, 1, 1]} : vector<3x1x8xf32> to vector<1x1x8xf32>
    %361 = vector.shape_cast %360 : vector<1x1x8xf32> to vector<1x8xf32>
    %362 = vector.extract_strided_slice %1 {offsets = [0, 0, 0], sizes = [1, 8, 8], strides = [1, 1, 1]} : vector<3x8x8xf32> to vector<1x8x8xf32>
    %363 = vector.shape_cast %362 : vector<1x8x8xf32> to vector<8x8xf32>
    %cst_83 = arith.constant dense<0.000000e+00> : vector<2x8xf32>
    %364 = tpu.matmul %353, %363, %cst_83 {dimension_numbers = #tpu.dot_dimension_numbers<[1], [0], [0], [1], [0, 0, 1, 1], [], []>} : vector<2x8xf32>, vector<8x8xf32>, vector<2x8xf32> -> vector<2x8xf32>
    %365 = vector.extract_strided_slice %1 {offsets = [1, 0, 0], sizes = [1, 8, 8], strides = [1, 1, 1]} : vector<3x8x8xf32> to vector<1x8x8xf32>
    %366 = vector.shape_cast %365 : vector<1x8x8xf32> to vector<8x8xf32>
    %cst_84 = arith.constant dense<0.000000e+00> : vector<2x8xf32>
    %367 = tpu.matmul %353, %366, %cst_84 {dimension_numbers = #tpu.dot_dimension_numbers<[1], [0], [0], [1], [0, 0, 1, 1], [], []>} : vector<2x8xf32>, vector<8x8xf32>, vector<2x8xf32> -> vector<2x8xf32>
    %368 = vector.extract_strided_slice %1 {offsets = [2, 0, 0], sizes = [1, 8, 8], strides = [1, 1, 1]} : vector<3x8x8xf32> to vector<1x8x8xf32>
    %369 = vector.shape_cast %368 : vector<1x8x8xf32> to vector<8x8xf32>
    %cst_85 = arith.constant dense<0.000000e+00> : vector<2x8xf32>
    %370 = tpu.matmul %353, %369, %cst_85 {dimension_numbers = #tpu.dot_dimension_numbers<[1], [0], [0], [1], [0, 0, 1, 1], [], []>} : vector<2x8xf32>, vector<8x8xf32>, vector<2x8xf32> -> vector<2x8xf32>
    %371 = vector.broadcast %361 : vector<1x8xf32> to vector<2x8xf32>
    %372 = arith.addf %370, %371 : vector<2x8xf32>
    %373 = arith.addf %355, %364 : vector<2x8xf32>
    %374 = arith.negf %373 : vector<2x8xf32>
    %375 = math.exp %374 : vector<2x8xf32>
    %cst_86 = arith.constant 1.000000e+00 : f32
    %376 = vector.broadcast %cst_86 : f32 to vector<2x8xf32>
    %377 = arith.addf %376, %375 : vector<2x8xf32>
    %378 = arith.divf %376, %377 : vector<2x8xf32>
    %379 = arith.addf %357, %367 : vector<2x8xf32>
    %380 = arith.negf %379 : vector<2x8xf32>
    %381 = math.exp %380 : vector<2x8xf32>
    %cst_87 = arith.constant 1.000000e+00 : f32
    %382 = vector.broadcast %cst_87 : f32 to vector<2x8xf32>
    %383 = arith.addf %382, %381 : vector<2x8xf32>
    %384 = arith.divf %382, %383 : vector<2x8xf32>
    %385 = arith.mulf %378, %372 : vector<2x8xf32>
    %386 = arith.addf %359, %385 : vector<2x8xf32>
    %387 = math.tanh %386 : vector<2x8xf32>
    %cst_88 = arith.constant 1.000000e+00 : f32
    %388 = vector.broadcast %cst_88 : f32 to vector<2x8xf32>
    %389 = arith.subf %388, %384 : vector<2x8xf32>
    %390 = arith.mulf %389, %387 : vector<2x8xf32>
    %391 = arith.mulf %384, %353 : vector<2x8xf32>
    %392 = arith.addf %390, %391 : vector<2x8xf32>
    %393 = vector.extract_strided_slice %59 {offsets = [0, 0, 0], sizes = [2, 1, 8], strides = [1, 1, 1]} : vector<2x6x8xf32> to vector<2x1x8xf32>
    %394 = vector.shape_cast %393 : vector<2x1x8xf32> to vector<2x8xf32>
    %395 = vector.extract_strided_slice %71 {offsets = [0, 0, 0], sizes = [2, 1, 8], strides = [1, 1, 1]} : vector<2x6x8xf32> to vector<2x1x8xf32>
    %396 = vector.shape_cast %395 : vector<2x1x8xf32> to vector<2x8xf32>
    %397 = vector.extract_strided_slice %79 {offsets = [0, 0, 0], sizes = [2, 1, 8], strides = [1, 1, 1]} : vector<2x6x8xf32> to vector<2x1x8xf32>
    %398 = vector.shape_cast %397 : vector<2x1x8xf32> to vector<2x8xf32>
    %399 = vector.extract_strided_slice %7 {offsets = [2, 0, 0], sizes = [1, 1, 8], strides = [1, 1, 1]} : vector<3x1x8xf32> to vector<1x1x8xf32>
    %400 = vector.shape_cast %399 : vector<1x1x8xf32> to vector<1x8xf32>
    %401 = vector.extract_strided_slice %5 {offsets = [0, 0, 0], sizes = [1, 8, 8], strides = [1, 1, 1]} : vector<3x8x8xf32> to vector<1x8x8xf32>
    %402 = vector.shape_cast %401 : vector<1x8x8xf32> to vector<8x8xf32>
    %cst_89 = arith.constant dense<0.000000e+00> : vector<2x8xf32>
    %403 = tpu.matmul %392, %402, %cst_89 {dimension_numbers = #tpu.dot_dimension_numbers<[1], [0], [0], [1], [0, 0, 1, 1], [], []>} : vector<2x8xf32>, vector<8x8xf32>, vector<2x8xf32> -> vector<2x8xf32>
    %404 = vector.extract_strided_slice %5 {offsets = [1, 0, 0], sizes = [1, 8, 8], strides = [1, 1, 1]} : vector<3x8x8xf32> to vector<1x8x8xf32>
    %405 = vector.shape_cast %404 : vector<1x8x8xf32> to vector<8x8xf32>
    %cst_90 = arith.constant dense<0.000000e+00> : vector<2x8xf32>
    %406 = tpu.matmul %392, %405, %cst_90 {dimension_numbers = #tpu.dot_dimension_numbers<[1], [0], [0], [1], [0, 0, 1, 1], [], []>} : vector<2x8xf32>, vector<8x8xf32>, vector<2x8xf32> -> vector<2x8xf32>
    %407 = vector.extract_strided_slice %5 {offsets = [2, 0, 0], sizes = [1, 8, 8], strides = [1, 1, 1]} : vector<3x8x8xf32> to vector<1x8x8xf32>
    %408 = vector.shape_cast %407 : vector<1x8x8xf32> to vector<8x8xf32>
    %cst_91 = arith.constant dense<0.000000e+00> : vector<2x8xf32>
    %409 = tpu.matmul %392, %408, %cst_91 {dimension_numbers = #tpu.dot_dimension_numbers<[1], [0], [0], [1], [0, 0, 1, 1], [], []>} : vector<2x8xf32>, vector<8x8xf32>, vector<2x8xf32> -> vector<2x8xf32>
    %410 = vector.broadcast %400 : vector<1x8xf32> to vector<2x8xf32>
    %411 = arith.addf %409, %410 : vector<2x8xf32>
    %412 = arith.addf %394, %403 : vector<2x8xf32>
    %413 = arith.negf %412 : vector<2x8xf32>
    %414 = math.exp %413 : vector<2x8xf32>
    %cst_92 = arith.constant 1.000000e+00 : f32
    %415 = vector.broadcast %cst_92 : f32 to vector<2x8xf32>
    %416 = arith.addf %415, %414 : vector<2x8xf32>
    %417 = arith.divf %415, %416 : vector<2x8xf32>
    %418 = arith.addf %396, %406 : vector<2x8xf32>
    %419 = arith.negf %418 : vector<2x8xf32>
    %420 = math.exp %419 : vector<2x8xf32>
    %cst_93 = arith.constant 1.000000e+00 : f32
    %421 = vector.broadcast %cst_93 : f32 to vector<2x8xf32>
    %422 = arith.addf %421, %420 : vector<2x8xf32>
    %423 = arith.divf %421, %422 : vector<2x8xf32>
    %424 = arith.mulf %417, %411 : vector<2x8xf32>
    %425 = arith.addf %398, %424 : vector<2x8xf32>
    %426 = math.tanh %425 : vector<2x8xf32>
    %cst_94 = arith.constant 1.000000e+00 : f32
    %427 = vector.broadcast %cst_94 : f32 to vector<2x8xf32>
    %428 = arith.subf %427, %423 : vector<2x8xf32>
    %429 = arith.mulf %428, %426 : vector<2x8xf32>
    %430 = arith.mulf %423, %392 : vector<2x8xf32>
    %431 = arith.addf %429, %430 : vector<2x8xf32>
    %432 = vector.extract_strided_slice %59 {offsets = [0, 1, 0], sizes = [2, 1, 8], strides = [1, 1, 1]} : vector<2x6x8xf32> to vector<2x1x8xf32>
    %433 = vector.shape_cast %432 : vector<2x1x8xf32> to vector<2x8xf32>
    %434 = vector.extract_strided_slice %71 {offsets = [0, 1, 0], sizes = [2, 1, 8], strides = [1, 1, 1]} : vector<2x6x8xf32> to vector<2x1x8xf32>
    %435 = vector.shape_cast %434 : vector<2x1x8xf32> to vector<2x8xf32>
    %436 = vector.extract_strided_slice %79 {offsets = [0, 1, 0], sizes = [2, 1, 8], strides = [1, 1, 1]} : vector<2x6x8xf32> to vector<2x1x8xf32>
    %437 = vector.shape_cast %436 : vector<2x1x8xf32> to vector<2x8xf32>
    %438 = vector.extract_strided_slice %7 {offsets = [2, 0, 0], sizes = [1, 1, 8], strides = [1, 1, 1]} : vector<3x1x8xf32> to vector<1x1x8xf32>
    %439 = vector.shape_cast %438 : vector<1x1x8xf32> to vector<1x8xf32>
    %440 = vector.extract_strided_slice %5 {offsets = [0, 0, 0], sizes = [1, 8, 8], strides = [1, 1, 1]} : vector<3x8x8xf32> to vector<1x8x8xf32>
    %441 = vector.shape_cast %440 : vector<1x8x8xf32> to vector<8x8xf32>
    %cst_95 = arith.constant dense<0.000000e+00> : vector<2x8xf32>
    %442 = tpu.matmul %431, %441, %cst_95 {dimension_numbers = #tpu.dot_dimension_numbers<[1], [0], [0], [1], [0, 0, 1, 1], [], []>} : vector<2x8xf32>, vector<8x8xf32>, vector<2x8xf32> -> vector<2x8xf32>
    %443 = vector.extract_strided_slice %5 {offsets = [1, 0, 0], sizes = [1, 8, 8], strides = [1, 1, 1]} : vector<3x8x8xf32> to vector<1x8x8xf32>
    %444 = vector.shape_cast %443 : vector<1x8x8xf32> to vector<8x8xf32>
    %cst_96 = arith.constant dense<0.000000e+00> : vector<2x8xf32>
    %445 = tpu.matmul %431, %444, %cst_96 {dimension_numbers = #tpu.dot_dimension_numbers<[1], [0], [0], [1], [0, 0, 1, 1], [], []>} : vector<2x8xf32>, vector<8x8xf32>, vector<2x8xf32> -> vector<2x8xf32>
    %446 = vector.extract_strided_slice %5 {offsets = [2, 0, 0], sizes = [1, 8, 8], strides = [1, 1, 1]} : vector<3x8x8xf32> to vector<1x8x8xf32>
    %447 = vector.shape_cast %446 : vector<1x8x8xf32> to vector<8x8xf32>
    %cst_97 = arith.constant dense<0.000000e+00> : vector<2x8xf32>
    %448 = tpu.matmul %431, %447, %cst_97 {dimension_numbers = #tpu.dot_dimension_numbers<[1], [0], [0], [1], [0, 0, 1, 1], [], []>} : vector<2x8xf32>, vector<8x8xf32>, vector<2x8xf32> -> vector<2x8xf32>
    %449 = vector.broadcast %439 : vector<1x8xf32> to vector<2x8xf32>
    %450 = arith.addf %448, %449 : vector<2x8xf32>
    %451 = arith.addf %433, %442 : vector<2x8xf32>
    %452 = arith.negf %451 : vector<2x8xf32>
    %453 = math.exp %452 : vector<2x8xf32>
    %cst_98 = arith.constant 1.000000e+00 : f32
    %454 = vector.broadcast %cst_98 : f32 to vector<2x8xf32>
    %455 = arith.addf %454, %453 : vector<2x8xf32>
    %456 = arith.divf %454, %455 : vector<2x8xf32>
    %457 = arith.addf %435, %445 : vector<2x8xf32>
    %458 = arith.negf %457 : vector<2x8xf32>
    %459 = math.exp %458 : vector<2x8xf32>
    %cst_99 = arith.constant 1.000000e+00 : f32
    %460 = vector.broadcast %cst_99 : f32 to vector<2x8xf32>
    %461 = arith.addf %460, %459 : vector<2x8xf32>
    %462 = arith.divf %460, %461 : vector<2x8xf32>
    %463 = arith.mulf %456, %450 : vector<2x8xf32>
    %464 = arith.addf %437, %463 : vector<2x8xf32>
    %465 = math.tanh %464 : vector<2x8xf32>
    %cst_100 = arith.constant 1.000000e+00 : f32
    %466 = vector.broadcast %cst_100 : f32 to vector<2x8xf32>
    %467 = arith.subf %466, %462 : vector<2x8xf32>
    %468 = arith.mulf %467, %465 : vector<2x8xf32>
    %469 = arith.mulf %462, %431 : vector<2x8xf32>
    %470 = arith.addf %468, %469 : vector<2x8xf32>
    %471 = vector.extract_strided_slice %59 {offsets = [0, 2, 0], sizes = [2, 1, 8], strides = [1, 1, 1]} : vector<2x6x8xf32> to vector<2x1x8xf32>
    %472 = vector.shape_cast %471 : vector<2x1x8xf32> to vector<2x8xf32>
    %473 = vector.extract_strided_slice %71 {offsets = [0, 2, 0], sizes = [2, 1, 8], strides = [1, 1, 1]} : vector<2x6x8xf32> to vector<2x1x8xf32>
    %474 = vector.shape_cast %473 : vector<2x1x8xf32> to vector<2x8xf32>
    %475 = vector.extract_strided_slice %79 {offsets = [0, 2, 0], sizes = [2, 1, 8], strides = [1, 1, 1]} : vector<2x6x8xf32> to vector<2x1x8xf32>
    %476 = vector.shape_cast %475 : vector<2x1x8xf32> to vector<2x8xf32>
    %477 = vector.extract_strided_slice %7 {offsets = [2, 0, 0], sizes = [1, 1, 8], strides = [1, 1, 1]} : vector<3x1x8xf32> to vector<1x1x8xf32>
    %478 = vector.shape_cast %477 : vector<1x1x8xf32> to vector<1x8xf32>
    %479 = vector.extract_strided_slice %5 {offsets = [0, 0, 0], sizes = [1, 8, 8], strides = [1, 1, 1]} : vector<3x8x8xf32> to vector<1x8x8xf32>
    %480 = vector.shape_cast %479 : vector<1x8x8xf32> to vector<8x8xf32>
    %cst_101 = arith.constant dense<0.000000e+00> : vector<2x8xf32>
    %481 = tpu.matmul %470, %480, %cst_101 {dimension_numbers = #tpu.dot_dimension_numbers<[1], [0], [0], [1], [0, 0, 1, 1], [], []>} : vector<2x8xf32>, vector<8x8xf32>, vector<2x8xf32> -> vector<2x8xf32>
    %482 = vector.extract_strided_slice %5 {offsets = [1, 0, 0], sizes = [1, 8, 8], strides = [1, 1, 1]} : vector<3x8x8xf32> to vector<1x8x8xf32>
    %483 = vector.shape_cast %482 : vector<1x8x8xf32> to vector<8x8xf32>
    %cst_102 = arith.constant dense<0.000000e+00> : vector<2x8xf32>
    %484 = tpu.matmul %470, %483, %cst_102 {dimension_numbers = #tpu.dot_dimension_numbers<[1], [0], [0], [1], [0, 0, 1, 1], [], []>} : vector<2x8xf32>, vector<8x8xf32>, vector<2x8xf32> -> vector<2x8xf32>
    %485 = vector.extract_strided_slice %5 {offsets = [2, 0, 0], sizes = [1, 8, 8], strides = [1, 1, 1]} : vector<3x8x8xf32> to vector<1x8x8xf32>
    %486 = vector.shape_cast %485 : vector<1x8x8xf32> to vector<8x8xf32>
    %cst_103 = arith.constant dense<0.000000e+00> : vector<2x8xf32>
    %487 = tpu.matmul %470, %486, %cst_103 {dimension_numbers = #tpu.dot_dimension_numbers<[1], [0], [0], [1], [0, 0, 1, 1], [], []>} : vector<2x8xf32>, vector<8x8xf32>, vector<2x8xf32> -> vector<2x8xf32>
    %488 = vector.broadcast %478 : vector<1x8xf32> to vector<2x8xf32>
    %489 = arith.addf %487, %488 : vector<2x8xf32>
    %490 = arith.addf %472, %481 : vector<2x8xf32>
    %491 = arith.negf %490 : vector<2x8xf32>
    %492 = math.exp %491 : vector<2x8xf32>
    %cst_104 = arith.constant 1.000000e+00 : f32
    %493 = vector.broadcast %cst_104 : f32 to vector<2x8xf32>
    %494 = arith.addf %493, %492 : vector<2x8xf32>
    %495 = arith.divf %493, %494 : vector<2x8xf32>
    %496 = arith.addf %474, %484 : vector<2x8xf32>
    %497 = arith.negf %496 : vector<2x8xf32>
    %498 = math.exp %497 : vector<2x8xf32>
    %cst_105 = arith.constant 1.000000e+00 : f32
    %499 = vector.broadcast %cst_105 : f32 to vector<2x8xf32>
    %500 = arith.addf %499, %498 : vector<2x8xf32>
    %501 = arith.divf %499, %500 : vector<2x8xf32>
    %502 = arith.mulf %495, %489 : vector<2x8xf32>
    %503 = arith.addf %476, %502 : vector<2x8xf32>
    %504 = math.tanh %503 : vector<2x8xf32>
    %cst_106 = arith.constant 1.000000e+00 : f32
    %505 = vector.broadcast %cst_106 : f32 to vector<2x8xf32>
    %506 = arith.subf %505, %501 : vector<2x8xf32>
    %507 = arith.mulf %506, %504 : vector<2x8xf32>
    %508 = arith.mulf %501, %470 : vector<2x8xf32>
    %509 = arith.addf %507, %508 : vector<2x8xf32>
    %510 = vector.extract_strided_slice %59 {offsets = [0, 3, 0], sizes = [2, 1, 8], strides = [1, 1, 1]} : vector<2x6x8xf32> to vector<2x1x8xf32>
    %511 = vector.shape_cast %510 : vector<2x1x8xf32> to vector<2x8xf32>
    %512 = vector.extract_strided_slice %71 {offsets = [0, 3, 0], sizes = [2, 1, 8], strides = [1, 1, 1]} : vector<2x6x8xf32> to vector<2x1x8xf32>
    %513 = vector.shape_cast %512 : vector<2x1x8xf32> to vector<2x8xf32>
    %514 = vector.extract_strided_slice %79 {offsets = [0, 3, 0], sizes = [2, 1, 8], strides = [1, 1, 1]} : vector<2x6x8xf32> to vector<2x1x8xf32>
    %515 = vector.shape_cast %514 : vector<2x1x8xf32> to vector<2x8xf32>
    %516 = vector.extract_strided_slice %7 {offsets = [2, 0, 0], sizes = [1, 1, 8], strides = [1, 1, 1]} : vector<3x1x8xf32> to vector<1x1x8xf32>
    %517 = vector.shape_cast %516 : vector<1x1x8xf32> to vector<1x8xf32>
    %518 = vector.extract_strided_slice %5 {offsets = [0, 0, 0], sizes = [1, 8, 8], strides = [1, 1, 1]} : vector<3x8x8xf32> to vector<1x8x8xf32>
    %519 = vector.shape_cast %518 : vector<1x8x8xf32> to vector<8x8xf32>
    %cst_107 = arith.constant dense<0.000000e+00> : vector<2x8xf32>
    %520 = tpu.matmul %509, %519, %cst_107 {dimension_numbers = #tpu.dot_dimension_numbers<[1], [0], [0], [1], [0, 0, 1, 1], [], []>} : vector<2x8xf32>, vector<8x8xf32>, vector<2x8xf32> -> vector<2x8xf32>
    %521 = vector.extract_strided_slice %5 {offsets = [1, 0, 0], sizes = [1, 8, 8], strides = [1, 1, 1]} : vector<3x8x8xf32> to vector<1x8x8xf32>
    %522 = vector.shape_cast %521 : vector<1x8x8xf32> to vector<8x8xf32>
    %cst_108 = arith.constant dense<0.000000e+00> : vector<2x8xf32>
    %523 = tpu.matmul %509, %522, %cst_108 {dimension_numbers = #tpu.dot_dimension_numbers<[1], [0], [0], [1], [0, 0, 1, 1], [], []>} : vector<2x8xf32>, vector<8x8xf32>, vector<2x8xf32> -> vector<2x8xf32>
    %524 = vector.extract_strided_slice %5 {offsets = [2, 0, 0], sizes = [1, 8, 8], strides = [1, 1, 1]} : vector<3x8x8xf32> to vector<1x8x8xf32>
    %525 = vector.shape_cast %524 : vector<1x8x8xf32> to vector<8x8xf32>
    %cst_109 = arith.constant dense<0.000000e+00> : vector<2x8xf32>
    %526 = tpu.matmul %509, %525, %cst_109 {dimension_numbers = #tpu.dot_dimension_numbers<[1], [0], [0], [1], [0, 0, 1, 1], [], []>} : vector<2x8xf32>, vector<8x8xf32>, vector<2x8xf32> -> vector<2x8xf32>
    %527 = vector.broadcast %517 : vector<1x8xf32> to vector<2x8xf32>
    %528 = arith.addf %526, %527 : vector<2x8xf32>
    %529 = arith.addf %511, %520 : vector<2x8xf32>
    %530 = arith.negf %529 : vector<2x8xf32>
    %531 = math.exp %530 : vector<2x8xf32>
    %cst_110 = arith.constant 1.000000e+00 : f32
    %532 = vector.broadcast %cst_110 : f32 to vector<2x8xf32>
    %533 = arith.addf %532, %531 : vector<2x8xf32>
    %534 = arith.divf %532, %533 : vector<2x8xf32>
    %535 = arith.addf %513, %523 : vector<2x8xf32>
    %536 = arith.negf %535 : vector<2x8xf32>
    %537 = math.exp %536 : vector<2x8xf32>
    %cst_111 = arith.constant 1.000000e+00 : f32
    %538 = vector.broadcast %cst_111 : f32 to vector<2x8xf32>
    %539 = arith.addf %538, %537 : vector<2x8xf32>
    %540 = arith.divf %538, %539 : vector<2x8xf32>
    %541 = arith.mulf %534, %528 : vector<2x8xf32>
    %542 = arith.addf %515, %541 : vector<2x8xf32>
    %543 = math.tanh %542 : vector<2x8xf32>
    %cst_112 = arith.constant 1.000000e+00 : f32
    %544 = vector.broadcast %cst_112 : f32 to vector<2x8xf32>
    %545 = arith.subf %544, %540 : vector<2x8xf32>
    %546 = arith.mulf %545, %543 : vector<2x8xf32>
    %547 = arith.mulf %540, %509 : vector<2x8xf32>
    %548 = arith.addf %546, %547 : vector<2x8xf32>
    %549 = vector.extract_strided_slice %59 {offsets = [0, 4, 0], sizes = [2, 1, 8], strides = [1, 1, 1]} : vector<2x6x8xf32> to vector<2x1x8xf32>
    %550 = vector.shape_cast %549 : vector<2x1x8xf32> to vector<2x8xf32>
    %551 = vector.extract_strided_slice %71 {offsets = [0, 4, 0], sizes = [2, 1, 8], strides = [1, 1, 1]} : vector<2x6x8xf32> to vector<2x1x8xf32>
    %552 = vector.shape_cast %551 : vector<2x1x8xf32> to vector<2x8xf32>
    %553 = vector.extract_strided_slice %79 {offsets = [0, 4, 0], sizes = [2, 1, 8], strides = [1, 1, 1]} : vector<2x6x8xf32> to vector<2x1x8xf32>
    %554 = vector.shape_cast %553 : vector<2x1x8xf32> to vector<2x8xf32>
    %555 = vector.extract_strided_slice %7 {offsets = [2, 0, 0], sizes = [1, 1, 8], strides = [1, 1, 1]} : vector<3x1x8xf32> to vector<1x1x8xf32>
    %556 = vector.shape_cast %555 : vector<1x1x8xf32> to vector<1x8xf32>
    %557 = vector.extract_strided_slice %5 {offsets = [0, 0, 0], sizes = [1, 8, 8], strides = [1, 1, 1]} : vector<3x8x8xf32> to vector<1x8x8xf32>
    %558 = vector.shape_cast %557 : vector<1x8x8xf32> to vector<8x8xf32>
    %cst_113 = arith.constant dense<0.000000e+00> : vector<2x8xf32>
    %559 = tpu.matmul %548, %558, %cst_113 {dimension_numbers = #tpu.dot_dimension_numbers<[1], [0], [0], [1], [0, 0, 1, 1], [], []>} : vector<2x8xf32>, vector<8x8xf32>, vector<2x8xf32> -> vector<2x8xf32>
    %560 = vector.extract_strided_slice %5 {offsets = [1, 0, 0], sizes = [1, 8, 8], strides = [1, 1, 1]} : vector<3x8x8xf32> to vector<1x8x8xf32>
    %561 = vector.shape_cast %560 : vector<1x8x8xf32> to vector<8x8xf32>
    %cst_114 = arith.constant dense<0.000000e+00> : vector<2x8xf32>
    %562 = tpu.matmul %548, %561, %cst_114 {dimension_numbers = #tpu.dot_dimension_numbers<[1], [0], [0], [1], [0, 0, 1, 1], [], []>} : vector<2x8xf32>, vector<8x8xf32>, vector<2x8xf32> -> vector<2x8xf32>
    %563 = vector.extract_strided_slice %5 {offsets = [2, 0, 0], sizes = [1, 8, 8], strides = [1, 1, 1]} : vector<3x8x8xf32> to vector<1x8x8xf32>
    %564 = vector.shape_cast %563 : vector<1x8x8xf32> to vector<8x8xf32>
    %cst_115 = arith.constant dense<0.000000e+00> : vector<2x8xf32>
    %565 = tpu.matmul %548, %564, %cst_115 {dimension_numbers = #tpu.dot_dimension_numbers<[1], [0], [0], [1], [0, 0, 1, 1], [], []>} : vector<2x8xf32>, vector<8x8xf32>, vector<2x8xf32> -> vector<2x8xf32>
    %566 = vector.broadcast %556 : vector<1x8xf32> to vector<2x8xf32>
    %567 = arith.addf %565, %566 : vector<2x8xf32>
    %568 = arith.addf %550, %559 : vector<2x8xf32>
    %569 = arith.negf %568 : vector<2x8xf32>
    %570 = math.exp %569 : vector<2x8xf32>
    %cst_116 = arith.constant 1.000000e+00 : f32
    %571 = vector.broadcast %cst_116 : f32 to vector<2x8xf32>
    %572 = arith.addf %571, %570 : vector<2x8xf32>
    %573 = arith.divf %571, %572 : vector<2x8xf32>
    %574 = arith.addf %552, %562 : vector<2x8xf32>
    %575 = arith.negf %574 : vector<2x8xf32>
    %576 = math.exp %575 : vector<2x8xf32>
    %cst_117 = arith.constant 1.000000e+00 : f32
    %577 = vector.broadcast %cst_117 : f32 to vector<2x8xf32>
    %578 = arith.addf %577, %576 : vector<2x8xf32>
    %579 = arith.divf %577, %578 : vector<2x8xf32>
    %580 = arith.mulf %573, %567 : vector<2x8xf32>
    %581 = arith.addf %554, %580 : vector<2x8xf32>
    %582 = math.tanh %581 : vector<2x8xf32>
    %cst_118 = arith.constant 1.000000e+00 : f32
    %583 = vector.broadcast %cst_118 : f32 to vector<2x8xf32>
    %584 = arith.subf %583, %579 : vector<2x8xf32>
    %585 = arith.mulf %584, %582 : vector<2x8xf32>
    %586 = arith.mulf %579, %548 : vector<2x8xf32>
    %587 = arith.addf %585, %586 : vector<2x8xf32>
    %588 = vector.extract_strided_slice %59 {offsets = [0, 5, 0], sizes = [2, 1, 8], strides = [1, 1, 1]} : vector<2x6x8xf32> to vector<2x1x8xf32>
    %589 = vector.shape_cast %588 : vector<2x1x8xf32> to vector<2x8xf32>
    %590 = vector.extract_strided_slice %71 {offsets = [0, 5, 0], sizes = [2, 1, 8], strides = [1, 1, 1]} : vector<2x6x8xf32> to vector<2x1x8xf32>
    %591 = vector.shape_cast %590 : vector<2x1x8xf32> to vector<2x8xf32>
    %592 = vector.extract_strided_slice %79 {offsets = [0, 5, 0], sizes = [2, 1, 8], strides = [1, 1, 1]} : vector<2x6x8xf32> to vector<2x1x8xf32>
    %593 = vector.shape_cast %592 : vector<2x1x8xf32> to vector<2x8xf32>
    %594 = vector.extract_strided_slice %7 {offsets = [2, 0, 0], sizes = [1, 1, 8], strides = [1, 1, 1]} : vector<3x1x8xf32> to vector<1x1x8xf32>
    %595 = vector.shape_cast %594 : vector<1x1x8xf32> to vector<1x8xf32>
    %596 = vector.extract_strided_slice %5 {offsets = [0, 0, 0], sizes = [1, 8, 8], strides = [1, 1, 1]} : vector<3x8x8xf32> to vector<1x8x8xf32>
    %597 = vector.shape_cast %596 : vector<1x8x8xf32> to vector<8x8xf32>
    %cst_119 = arith.constant dense<0.000000e+00> : vector<2x8xf32>
    %598 = tpu.matmul %587, %597, %cst_119 {dimension_numbers = #tpu.dot_dimension_numbers<[1], [0], [0], [1], [0, 0, 1, 1], [], []>} : vector<2x8xf32>, vector<8x8xf32>, vector<2x8xf32> -> vector<2x8xf32>
    %599 = vector.extract_strided_slice %5 {offsets = [1, 0, 0], sizes = [1, 8, 8], strides = [1, 1, 1]} : vector<3x8x8xf32> to vector<1x8x8xf32>
    %600 = vector.shape_cast %599 : vector<1x8x8xf32> to vector<8x8xf32>
    %cst_120 = arith.constant dense<0.000000e+00> : vector<2x8xf32>
    %601 = tpu.matmul %587, %600, %cst_120 {dimension_numbers = #tpu.dot_dimension_numbers<[1], [0], [0], [1], [0, 0, 1, 1], [], []>} : vector<2x8xf32>, vector<8x8xf32>, vector<2x8xf32> -> vector<2x8xf32>
    %602 = vector.extract_strided_slice %5 {offsets = [2, 0, 0], sizes = [1, 8, 8], strides = [1, 1, 1]} : vector<3x8x8xf32> to vector<1x8x8xf32>
    %603 = vector.shape_cast %602 : vector<1x8x8xf32> to vector<8x8xf32>
    %cst_121 = arith.constant dense<0.000000e+00> : vector<2x8xf32>
    %604 = tpu.matmul %587, %603, %cst_121 {dimension_numbers = #tpu.dot_dimension_numbers<[1], [0], [0], [1], [0, 0, 1, 1], [], []>} : vector<2x8xf32>, vector<8x8xf32>, vector<2x8xf32> -> vector<2x8xf32>
    %605 = vector.broadcast %595 : vector<1x8xf32> to vector<2x8xf32>
    %606 = arith.addf %604, %605 : vector<2x8xf32>
    %607 = arith.addf %589, %598 : vector<2x8xf32>
    %608 = arith.negf %607 : vector<2x8xf32>
    %609 = math.exp %608 : vector<2x8xf32>
    %cst_122 = arith.constant 1.000000e+00 : f32
    %610 = vector.broadcast %cst_122 : f32 to vector<2x8xf32>
    %611 = arith.addf %610, %609 : vector<2x8xf32>
    %612 = arith.divf %610, %611 : vector<2x8xf32>
    %613 = arith.addf %591, %601 : vector<2x8xf32>
    %614 = arith.negf %613 : vector<2x8xf32>
    %615 = math.exp %614 : vector<2x8xf32>
    %cst_123 = arith.constant 1.000000e+00 : f32
    %616 = vector.broadcast %cst_123 : f32 to vector<2x8xf32>
    %617 = arith.addf %616, %615 : vector<2x8xf32>
    %618 = arith.divf %616, %617 : vector<2x8xf32>
    %619 = arith.mulf %612, %606 : vector<2x8xf32>
    %620 = arith.addf %593, %619 : vector<2x8xf32>
    %621 = math.tanh %620 : vector<2x8xf32>
    %cst_124 = arith.constant 1.000000e+00 : f32
    %622 = vector.broadcast %cst_124 : f32 to vector<2x8xf32>
    %623 = arith.subf %622, %618 : vector<2x8xf32>
    %624 = arith.mulf %623, %621 : vector<2x8xf32>
    %625 = arith.mulf %618, %587 : vector<2x8xf32>
    %626 = arith.addf %624, %625 : vector<2x8xf32>
    %c0_125 = arith.constant 0 : index
    %c0_126 = arith.constant 0 : index
    %627 = vector.load %arg17[%c0_125, %c0_126] : memref<2x8xf32, #tpu.memory_space<vmem>>, vector<2x8xf32>
    tpu.vector_store %arg17[%c0_125, %c0_126], %626 {strides = array<i32>} : memref<2x8xf32, #tpu.memory_space<vmem>>, vector<2x8xf32>,
    %628 = vector.shape_cast %431 : vector<2x8xf32> to vector<2x1x8xf32>
    %629 = vector.shape_cast %470 : vector<2x8xf32> to vector<2x1x8xf32>
    %630 = vector.shape_cast %509 : vector<2x8xf32> to vector<2x1x8xf32>
    %631 = vector.shape_cast %548 : vector<2x8xf32> to vector<2x1x8xf32>
    %632 = vector.shape_cast %587 : vector<2x8xf32> to vector<2x1x8xf32>
    %633 = vector.shape_cast %626 : vector<2x8xf32> to vector<2x1x8xf32>
    %634 = tpu.concatenate %628, %629, %630, %631, %632, %633 in 1 : vector<2x1x8xf32>, vector<2x1x8xf32>, vector<2x1x8xf32>, vector<2x1x8xf32>, vector<2x1x8xf32>, vector<2x1x8xf32> -> vector<2x6x8xf32>
    %635 = vector.shape_cast %634 : vector<2x6x8xf32> to vector<12x8xf32>
    %c0_127 = arith.constant 0 : index
    %c0_128 = arith.constant 0 : index
    %636 = vector.load %arg12[%c0_127, %c0_128] : memref<8x8xf32, #tpu.memory_space<vmem>>, vector<8x8xf32>
    %cst_129 = arith.constant dense<0.000000e+00> : vector<12x8xf32>
    %637 = tpu.matmul %635, %636, %cst_129 {dimension_numbers = #tpu.dot_dimension_numbers<[1], [0], [0], [1], [0, 0, 1, 1], [], []>} : vector<12x8xf32>, vector<8x8xf32>, vector<12x8xf32> -> vector<12x8xf32>
    %c0_130 = arith.constant 0 : index
    %c0_131 = arith.constant 0 : index
    %638 = vector.load %arg13[%c0_130, %c0_131] : memref<1x8xf32, #tpu.memory_space<vmem>>, vector<1x8xf32>
    %639 = vector.broadcast %638 : vector<1x8xf32> to vector<12x8xf32>
    %640 = arith.addf %637, %639 : vector<12x8xf32>
    %cst_132 = arith.constant 0.000000e+00 : f32
    %641 = vector.broadcast %cst_132 : f32 to vector<12x8xf32>
    %642 = arith.cmpf oge, %640, %641 : vector<12x8xf32>
    %cst_133 = arith.constant 0.00999999977 : f32
    %643 = vector.broadcast %cst_133 : f32 to vector<12x8xf32>
    %644 = arith.mulf %643, %640 : vector<12x8xf32>
    %645 = arith.select %642, %640, %644 : vector<12x8xi1>, vector<12x8xf32>
    %c0_134 = arith.constant 0 : index
    %c0_135 = arith.constant 0 : index
    %646 = vector.load %arg14[%c0_134, %c0_135] : memref<8x2xf32, #tpu.memory_space<vmem>>, vector<8x2xf32>
    %cst_136 = arith.constant dense<0.000000e+00> : vector<12x2xf32>
    %647 = tpu.matmul %645, %646, %cst_136 {dimension_numbers = #tpu.dot_dimension_numbers<[1], [0], [0], [1], [0, 0, 1, 1], [], []>} : vector<12x8xf32>, vector<8x2xf32>, vector<12x2xf32> -> vector<12x2xf32>
    %c0_137 = arith.constant 0 : index
    %c0_138 = arith.constant 0 : index
    %648 = vector.load %arg15[%c0_137, %c0_138] : memref<1x2xf32, #tpu.memory_space<vmem>>, vector<1x2xf32>
    %649 = vector.broadcast %648 : vector<1x2xf32> to vector<12x2xf32>
    %650 = arith.addf %647, %649 : vector<12x2xf32>
    %651 = vector.shape_cast %650 : vector<12x2xf32> to vector<2x6x2xf32>
    %c0_139 = arith.constant 0 : index
    %c0_140 = arith.constant 0 : index
    %c0_141 = arith.constant 0 : index
    %652 = vector.load %arg16[%c0_139, %c0_140, %c0_141] : memref<2x6x2xf32, #tpu.memory_space<vmem>>, vector<2x6x2xf32>
    tpu.vector_store %arg16[%c0_139, %c0_140, %c0_141], %651 {strides = array<i32>} : memref<2x6x2xf32, #tpu.memory_space<vmem>>, vector<2x6x2xf32>,
    return
  }
}

</mosaic_0001>

<llo_original>
// kernel: encoder_decoder_forward.1
$region0: #{encoder_decoder_forward.1}
  #allocation0 [shape = 'u32[]', space=smem, size = 0x4, offset = 0x4, fixed_abs, tag = 'smem constant byte address 0x4 - core index']
  #allocation1 [shape = 'u32[144,128]{1,0:T(1,128)}', space=vmem, size = 0x12000, scoped, tag = 'internal scratch']
  %s0 = inlined_call_operand.vmem [shape: f32[2,8,3], index: 0, kind: input, shape index: {}]
  %s1 = inlined_call_operand.vmem [shape: f32[2,8,1], index: 1, kind: input, shape index: {}]
  %s2 = inlined_call_operand.vmem [shape: f32[2,6,3], index: 2, kind: input, shape index: {}]
  %s3 = inlined_call_operand.vmem [shape: f32[2,6,1], index: 3, kind: input, shape index: {}]
  %s4 = inlined_call_operand.vmem [shape: f32[3,4,8], index: 4, kind: input, shape index: {}]
  %s5 = inlined_call_operand.vmem [shape: f32[3,8,8], index: 5, kind: input, shape index: {}]
  %s6 = inlined_call_operand.vmem [shape: f32[3,1,8], index: 6, kind: input, shape index: {}]
  %s7 = inlined_call_operand.vmem [shape: f32[3,1,8], index: 7, kind: input, shape index: {}]
  %s8 = inlined_call_operand.vmem [shape: f32[3,4,8], index: 8, kind: input, shape index: {}]
  %s9 = inlined_call_operand.vmem [shape: f32[3,8,8], index: 9, kind: input, shape index: {}]
  %s10 = inlined_call_operand.hbm [shape: f32[3,1,8], index: 10, kind: input, shape index: {}]
  %s11 = inlined_call_operand.hbm [shape: f32[3,1,8], index: 11, kind: input, shape index: {}]
  %s12 = inlined_call_operand.vmem [shape: f32[8,8], index: 12, kind: input, shape index: {}]
  %s13 = inlined_call_operand.vmem [shape: f32[1,8], index: 13, kind: input, shape index: {}]
  %s14 = inlined_call_operand.vmem [shape: f32[8,2], index: 14, kind: input, shape index: {}]
  %s15 = inlined_call_operand.vmem [shape: f32[1,2], index: 15, kind: input, shape index: {}]
  %s16 = inlined_call_operand.vmem [shape: f32[2,6,2], index: 16, kind: output, shape index: {0}]
  %s17 = inlined_call_operand.hbm [shape: f32[2,8], index: 17, kind: output, shape index: {1}]
  %18 = xla_tuple %s16, %s17
  %s19 = sld [smem:[#allocation0]]
  $region90: #{encoder_decoder_forward.1} parent=0
    _
  %s21 = ssub.s32 1, %s19
  %s22 = scalar_select 0, %s21, %s19
  $region1: #{encoder_decoder_forward.1} parent=0
    #allocation2 [shape = 'u8[1536]{0}', space=vmem, size = 0x800, scoped, tag = 'input window, operand 10, single buffered']
    #allocation3 [shape = 's32[1]{0}', space=sflag, size = 0x4, scoped, tag = 'scoped memory for encoder_decoder_forward.1']
    #allocation4 [shape = 's32[1]{0}', space=sflag, size = 0x4, scoped, tag = 'scoped memory for encoder_decoder_forward.1']
    #allocation5 [shape = 'u8[1536]{0}', space=vmem, size = 0x800, scoped, tag = 'input window, operand 11, single buffered']
    #allocation6 [shape = 's32[1]{0}', space=sflag, size = 0x4, scoped, tag = 'scoped memory for encoder_decoder_forward.1']
    #allocation7 [shape = 'u8[1024]{0}', space=vmem, size = 0x400, scoped, tag = 'output window, operand 1, single buffered']
    %23 = vsyncpa [#allocation3], 0
    %24 = vsyncpa [#allocation6], 0
    %25 = vsyncpa [#allocation4], 0
    // Predicated region
    $region2: #{encoder_decoder_forward.1} parent=1 // pred_check
      _
    $region3: #{encoder_decoder_forward.1} parent=1 // pred_check_branch
      %27 = sbr.rel (0) target = $region5
    $region4: #{encoder_decoder_forward.1} parent=1 // pred_region
      _
    $region5: #{encoder_decoder_forward.1} parent=1 // pred_fallthru
      _
    // Predicated region
    $region6: #{encoder_decoder_forward.1} parent=1 // pred_check
      _
    $region7: #{encoder_decoder_forward.1} parent=1 // pred_check_branch
      %29 = sbr.rel (0) target = $region9
    $region8: #{encoder_decoder_forward.1} parent=1 // pred_region
      _
    $region9: #{encoder_decoder_forward.1} parent=1 // pred_fallthru
      _
    // Predicated region
    $region10: #{encoder_decoder_forward.1} parent=1 // pred_check
      _
    $region11: #{encoder_decoder_forward.1} parent=1 // pred_check_branch
      %31 = sbr.rel (0) target = $region13
    $region12: #{encoder_decoder_forward.1} parent=1 // pred_region
      _
    $region13: #{encoder_decoder_forward.1} parent=1 // pred_fallthru
      _
    // Predicated region
    $region14: #{encoder_decoder_forward.1} parent=1 // pred_check
      _
    $region15: #{encoder_decoder_forward.1} parent=1 // pred_check_branch
      %33 = sbr.rel (0) target = $region17
    $region16: #{encoder_decoder_forward.1} parent=1 // pred_region
      _
    $region17: #{encoder_decoder_forward.1} parent=1 // pred_fallthru
      _
    // Predicated region
    $region18: #{encoder_decoder_forward.1} parent=1 // pred_check
      _
    $region19: #{encoder_decoder_forward.1} parent=1 // pred_check_branch
      %35 = sbr.rel (0) target = $region21
    $region20: #{encoder_decoder_forward.1} parent=1 // pred_region
      _
    $region21: #{encoder_decoder_forward.1} parent=1 // pred_fallthru
      _
    // Predicated region
    $region22: #{encoder_decoder_forward.1} parent=1 // pred_check
      _
    $region23: #{encoder_decoder_forward.1} parent=1 // pred_check_branch
      %37 = sbr.rel (0) target = $region25
    $region24: #{encoder_decoder_forward.1} parent=1 // pred_region
      _
    $region25: #{encoder_decoder_forward.1} parent=1 // pred_fallthru
      _
    // Predicated region
    $region26: #{encoder_decoder_forward.1} parent=1 // pred_check
      _
    $region27: #{encoder_decoder_forward.1} parent=1 // pred_check_branch
      %39 = sbr.rel (0) target = $region29
    $region28: #{encoder_decoder_forward.1} parent=1 // pred_region
      _
    $region29: #{encoder_decoder_forward.1} parent=1 // pred_fallthru
      _
    // Predicated region
    $region30: #{encoder_decoder_forward.1} parent=1 // pred_check
      _
    $region31: #{encoder_decoder_forward.1} parent=1 // pred_check_branch
      %41 = sbr.rel (0) target = $region33
    $region32: #{encoder_decoder_forward.1} parent=1 // pred_region
      _
    $region33: #{encoder_decoder_forward.1} parent=1 // pred_fallthru
      _
    // Predicated region
    $region34: #{encoder_decoder_forward.1} parent=1 // pred_check
      _
    $region35: #{encoder_decoder_forward.1} parent=1 // pred_check_branch
      %43 = sbr.rel (0) target = $region37
    $region36: #{encoder_decoder_forward.1} parent=1 // pred_region
      _
    $region37: #{encoder_decoder_forward.1} parent=1 // pred_fallthru
      _
    // Predicated region
    $region38: #{encoder_decoder_forward.1} parent=1 // pred_check
      _
    $region39: #{encoder_decoder_forward.1} parent=1 // pred_check_branch
      %45 = sbr.rel (0) target = $region41
    $region40: #{encoder_decoder_forward.1} parent=1 // pred_region
      _
    $region41: #{encoder_decoder_forward.1} parent=1 // pred_fallthru
      _
    // Predicated region
    $region42: #{encoder_decoder_forward.1} parent=1 // pred_check
      _
    $region43: #{encoder_decoder_forward.1} parent=1 // pred_check_branch
      %47 = sbr.rel (0) target = $region45
    $region44: #{encoder_decoder_forward.1} parent=1 // pred_region
      %s49 = ssub.s32 48, 48
      %50 = vsyncadd [#allocation3], %s49
      %s51 = sshll.u32 [#allocation2], 4
      %s52 = int_to_ptr.vmem [resolvable:$true] %s51
      %57 = dma.hbm_to_vmem [thread:$0]  %s10, 48, %s52, [#allocation3], 16, 16, 1
    $region45: #{encoder_decoder_forward.1} parent=1 // pred_fallthru
      _
    // Predicated region
    $region46: #{encoder_decoder_forward.1} parent=1 // pred_check
      _
    $region47: #{encoder_decoder_forward.1} parent=1 // pred_check_branch
      %59 = sbr.rel (0) target = $region49
    $region48: #{encoder_decoder_forward.1} parent=1 // pred_region
      %s61 = ssub.s32 48, 48
      %62 = vsyncadd [#allocation6], %s61
      %s63 = sshll.u32 [#allocation5], 4
      %s64 = int_to_ptr.vmem [resolvable:$true] %s63
      %69 = dma.hbm_to_vmem [thread:$0]  %s11, 48, %s64, [#allocation6], 16, 16, 1
    $region49: #{encoder_decoder_forward.1} parent=1 // pred_fallthru
      _
    // Predicated region
    $region50: #{encoder_decoder_forward.1} parent=1 // pred_check
      _
    $region51: #{encoder_decoder_forward.1} parent=1 // pred_check_branch
      %71 = sbr.rel (0) target = $region53
    $region52: #{encoder_decoder_forward.1} parent=1 // pred_region
      _
    $region53: #{encoder_decoder_forward.1} parent=1 // pred_fallthru
      _
    // Predicated region
    $region54: #{encoder_decoder_forward.1} parent=1 // pred_check
      _
    $region55: #{encoder_decoder_forward.1} parent=1 // pred_check_branch
      %73 = sbr.rel (0) target = $region57
    $region56: #{encoder_decoder_forward.1} parent=1 // pred_region
      _
    $region57: #{encoder_decoder_forward.1} parent=1 // pred_fallthru
      _
    // Predicated region
    $region58: #{encoder_decoder_forward.1} parent=1 // pred_check
      _
    $region59: #{encoder_decoder_forward.1} parent=1 // pred_check_branch
      %75 = sbr.rel (0) target = $region61
    $region60: #{encoder_decoder_forward.1} parent=1 // pred_region
      _
    $region61: #{encoder_decoder_forward.1} parent=1 // pred_fallthru
      _
    // Predicated region
    $region62: #{encoder_decoder_forward.1} parent=1 // pred_check
      _
    $region63: #{encoder_decoder_forward.1} parent=1 // pred_check_branch
      %77 = sbr.rel (0) target = $region65
    $region64: #{encoder_decoder_forward.1} parent=1 // pred_region
      _
    $region65: #{encoder_decoder_forward.1} parent=1 // pred_fallthru
      _
    // Predicated region
    $region66: #{encoder_decoder_forward.1} parent=1 // pred_check
      _
    $region67: #{encoder_decoder_forward.1} parent=1 // pred_check_branch
      %79 = sbr.rel (0) target = $region69
    $region68: #{encoder_decoder_forward.1} parent=1 // pred_region
      %80 = dma.done [#allocation3], 48
    $region69: #{encoder_decoder_forward.1} parent=1 // pred_fallthru
      _
    // Predicated region
    $region70: #{encoder_decoder_forward.1} parent=1 // pred_check
      _
    $region71: #{encoder_decoder_forward.1} parent=1 // pred_check_branch
      %82 = sbr.rel (0) target = $region73
    $region72: #{encoder_decoder_forward.1} parent=1 // pred_region
      %83 = dma.done [#allocation6], 48
    $region73: #{encoder_decoder_forward.1} parent=1 // pred_fallthru
      _
    %v84 = vld [vmem:[%s4] sm:$0xf]
    %v85 = vld [vmem:[%s4 + $0x4] sm:$0xf]
    %v86 = vld [vmem:[%s4 + $0x8] sm:$0xf]
    %v87 = vld [vmem:[%s5] sm:$0xff]
    %v88 = vld [vmem:[%s5 + $0x8] sm:$0xff]
    %v89 = vld [vmem:[%s5 + $0x10] sm:$0xff]
    %v90 = vld [vmem:[%s6] sm:$0x1]
    %v91 = vld [vmem:[%s6 + $0x1] sm:$0x1]
    %v92 = vld [vmem:[%s6 + $0x2] sm:$0x1]
    %v93 = vld [vmem:[%s7] sm:$0x1]
    %v94 = vld [vmem:[%s7 + $0x1] sm:$0x1]
    %v95 = vld [vmem:[%s7 + $0x2] sm:$0x1]
    %v96 = vld [vmem:[%s8] sm:$0xf]
    %v97 = vld [vmem:[%s8 + $0x4] sm:$0xf]
    %v98 = vld [vmem:[%s8 + $0x8] sm:$0xf]
    %v99 = vld [vmem:[%s9] sm:$0xff]
    %v100 = vld [vmem:[%s9 + $0x8] sm:$0xff]
    %v101 = vld [vmem:[%s9 + $0x10] sm:$0xff]
    %v102 = vld [vmem:[#allocation2] sm:$0x1]
    %v103 = vld [vmem:[#allocation2 + $0x1] sm:$0x1]
    %v104 = vld [vmem:[#allocation2 + $0x2] sm:$0x1]
    %v105 = vld [vmem:[#allocation5] sm:$0x1]
    %v106 = vld [vmem:[#allocation5 + $0x1] sm:$0x1]
    %v107 = vld [vmem:[#allocation5 + $0x2] sm:$0x1]
    %v108 = vld [vmem:[%s0] sm:$0xff]
    %v109 = vld [vmem:[%s0 + $0x8] sm:$0xff]
    %v110 = vld [vmem:[%s1] sm:$0xff]
    %v111 = vld [vmem:[%s1 + $0x8] sm:$0xff]
    %114 = vrot.lane.b32.xlu0 %v110, 3
    %v115 = vpop.permute.xlu0 %114
    %116 = vrot.lane.b32.xlu0 %v111, 3
    %v117 = vpop.permute.xlu0 %116
    %vm120 = vcmask 23552
    %v121 = vsel %vm120, %v108, %v115
    %v122 = vsel %vm120, %v109, %v117
    %v123 = vld [vmem:[%s2] sm:$0x3f]
    %v124 = vld [vmem:[%s2 + $0x8] sm:$0x3f]
    %v125 = vld [vmem:[%s3] sm:$0x3f]
    %v126 = vld [vmem:[%s3 + $0x8] sm:$0x3f]
    %129 = vrot.lane.b32.xlu0 %v125, 3
    %v130 = vpop.permute.xlu0 %129
    %131 = vrot.lane.b32.xlu0 %v126, 3
    %v132 = vpop.permute.xlu0 %131
    %v135 = vsel %vm120, %v123, %v130
    %v136 = vsel %vm120, %v124, %v132
    %v138 = vlaneseq
    %v139 = vshrl.u32 %v138, 7
    %v140 = vsub.s32 0, %v139
    %v141 = vrot.slane %v90, %v140
    %vm143 = vcmask 31744
    %v145 = vsel %vm143, %v121, 0
    %v148 = vsel %vm143, %v122, 0
    %vm150 = vcmask 1043456
    %v152 = vsel %vm150, %v84, 0
    %154 = vmatprep.subr.mxu0 0.0
    %155 = vmatpush1.msra.mxu0 %v152
    %156 = vmatprep.subr.mxu0 0.0
    %157 = vmatpush1.msra.mxu0 0.0
    %158 = vmatprep.subr.mxu0 0.0
    %159 = vmatpush1.msra.mxu0 0.0
    %160 = vmatprep.subr.mxu0 0.0
    %161 = vmatpush1.msra.mxu0 0.0
    %162 = vmatprep.subr.mxu0 0.0
    %163 = vmatpush1.msra.mxu0 0.0
    %164 = vmatprep.subr.mxu0 0.0
    %165 = vmatpush1.msra.mxu0 0.0
    %166 = vmatprep.subr.mxu0 0.0
    %167 = vmatpush1.msra.mxu0 0.0
    %168 = vmatprep.subr.mxu0 0.0
    %169 = vmatpush1.msra.mxu0 0.0
    %170 = vmatprep.subr.mxu0 0.0
    %171 = vmatpush1.msra.mxu0 0.0
    %172 = vmatprep.subr.mxu0 0.0
    %173 = vmatpush1.msra.mxu0 0.0
    %174 = vmatprep.subr.mxu0 0.0
    %175 = vmatpush1.msra.mxu0 0.0
    %176 = vmatprep.subr.mxu0 0.0
    %177 = vmatpush1.msra.mxu0 0.0
    %178 = vmatprep.subr.mxu0 0.0
    %179 = vmatpush1.msra.mxu0 0.0
    %180 = vmatprep.subr.mxu0 0.0
    %181 = vmatpush1.msra.mxu0 0.0
    %182 = vmatprep.subr.mxu0 0.0
    %183 = vmatpush1.msra.mxu0 0.0
    %184 = vmatprep.subr.mxu0 0.0
    %185 = vmatpush1.msra.mxu0 0.0
    %186 = vmatprep.subr.mxu0 0.0
    %187 = vmatpush1.msra.mxu0 0.0
    %188 = vmatprep.subr.mxu0 0.0
    %189 = vmatpush1.msra.mxu0 0.0
    %190 = vmatprep.subr.mxu0 0.0
    %191 = vmatpush1.msra.mxu0 0.0
    %192 = vmatprep.subr.mxu0 0.0
    %193 = vmatpush1.msra.mxu0 0.0
    %194 = vmatprep.subr.mxu0 0.0
    %195 = vmatpush1.msra.mxu0 0.0
    %196 = vmatprep.subr.mxu0 0.0
    %197 = vmatpush1.msra.mxu0 0.0
    %198 = vmatprep.subr.mxu0 0.0
    %199 = vmatpush1.msra.mxu0 0.0
    %200 = vmatprep.subr.mxu0 0.0
    %201 = vmatpush1.msra.mxu0 0.0
    %202 = vmatprep.subr.mxu0 0.0
    %203 = vmatpush1.msra.mxu0 0.0
    %204 = vmatprep.subr.mxu0 0.0
    %205 = vmatpush1.msra.mxu0 0.0
    %206 = vmatprep.subr.mxu0 0.0
    %207 = vmatpush1.msra.mxu0 0.0
    %208 = vmatprep.subr.mxu0 0.0
    %209 = vmatpush1.msra.mxu0 0.0
    %210 = vmatprep.subr.mxu0 0.0
    %211 = vmatpush1.msra.mxu0 0.0
    %212 = vmatprep.subr.mxu0 0.0
    %213 = vmatpush1.msra.mxu0 0.0
    %214 = vmatprep.subr.mxu0 0.0
    %215 = vmatpush1.msra.mxu0 0.0
    %216 = vmatprep.subr.mxu0 0.0
    %217 = vmatpush1.msra.mxu0 0.0
    %218 = vmatprep.mubr.f32.mxu0 0.0
    %219 = vmatmul.mubr.f32.gmra.mrb[0].mxu0 %v145
    %v220 = vpop.f32.mrb[0].mxu0
    %v221 = vadd.f32 %v141, %v220
    %v222 = vpop.f32.mrb[0].mxu0
    %223 = vmatprep.mubr.f32.mxu0 0.0
    %224 = vmatmul.mubr.f32.gmra.mrb[0].mxu0 %v148
    %v225 = vpop.f32.mrb[0].mxu0
    %v226 = vadd.f32 %v141, %v225
    %v227 = vpop.f32.mrb[0].mxu0
    %228 = vdwg.mxu0
    %v230 = vlaneseq
    %v231 = vshrl.u32 %v230, 7
    %v232 = vsub.s32 0, %v231
    %v233 = vrot.slane %v93, %v232
    %v235 = vadd.f32 %v221, %v233
    %v236 = vadd.f32 %v226, %v233
    %v238 = vlaneseq
    %v239 = vshrl.u32 %v238, 7
    %v240 = vsub.s32 0, %v239
    %v241 = vrot.slane %v91, %v240
    %v244 = vsel %vm150, %v85, 0
    %246 = vmatprep.subr.mxu0 0.0
    %247 = vmatpush1.msra.mxu0 %v244
    %248 = vmatprep.subr.mxu0 0.0
    %249 = vmatpush1.msra.mxu0 0.0
    %250 = vmatprep.subr.mxu0 0.0
    %251 = vmatpush1.msra.mxu0 0.0
    %252 = vmatprep.subr.mxu0 0.0
    %253 = vmatpush1.msra.mxu0 0.0
    %254 = vmatprep.subr.mxu0 0.0
    %255 = vmatpush1.msra.mxu0 0.0
    %256 = vmatprep.subr.mxu0 0.0
    %257 = vmatpush1.msra.mxu0 0.0
    %258 = vmatprep.subr.mxu0 0.0
    %259 = vmatpush1.msra.mxu0 0.0
    %260 = vmatprep.subr.mxu0 0.0
    %261 = vmatpush1.msra.mxu0 0.0
    %262 = vmatprep.subr.mxu0 0.0
    %263 = vmatpush1.msra.mxu0 0.0
    %264 = vmatprep.subr.mxu0 0.0
    %265 = vmatpush1.msra.mxu0 0.0
    %266 = vmatprep.subr.mxu0 0.0
    %267 = vmatpush1.msra.mxu0 0.0
    %268 = vmatprep.subr.mxu0 0.0
    %269 = vmatpush1.msra.mxu0 0.0
    %270 = vmatprep.subr.mxu0 0.0
    %271 = vmatpush1.msra.mxu0 0.0
    %272 = vmatprep.subr.mxu0 0.0
    %273 = vmatpush1.msra.mxu0 0.0
    %274 = vmatprep.subr.mxu0 0.0
    %275 = vmatpush1.msra.mxu0 0.0
    %276 = vmatprep.subr.mxu0 0.0
    %277 = vmatpush1.msra.mxu0 0.0
    %278 = vmatprep.subr.mxu0 0.0
    %279 = vmatpush1.msra.mxu0 0.0
    %280 = vmatprep.subr.mxu0 0.0
    %281 = vmatpush1.msra.mxu0 0.0
    %282 = vmatprep.subr.mxu0 0.0
    %283 = vmatpush1.msra.mxu0 0.0
    %284 = vmatprep.subr.mxu0 0.0
    %285 = vmatpush1.msra.mxu0 0.0
    %286 = vmatprep.subr.mxu0 0.0
    %287 = vmatpush1.msra.mxu0 0.0
    %288 = vmatprep.subr.mxu0 0.0
    %289 = vmatpush1.msra.mxu0 0.0
    %290 = vmatprep.subr.mxu0 0.0
    %291 = vmatpush1.msra.mxu0 0.0
    %292 = vmatprep.subr.mxu0 0.0
    %293 = vmatpush1.msra.mxu0 0.0
    %294 = vmatprep.subr.mxu0 0.0
    %295 = vmatpush1.msra.mxu0 0.0
    %296 = vmatprep.subr.mxu0 0.0
    %297 = vmatpush1.msra.mxu0 0.0
    %298 = vmatprep.subr.mxu0 0.0
    %299 = vmatpush1.msra.mxu0 0.0
    %300 = vmatprep.subr.mxu0 0.0
    %301 = vmatpush1.msra.mxu0 0.0
    %302 = vmatprep.subr.mxu0 0.0
    %303 = vmatpush1.msra.mxu0 0.0
    %304 = vmatprep.subr.mxu0 0.0
    %305 = vmatpush1.msra.mxu0 0.0
    %306 = vmatprep.subr.mxu0 0.0
    %307 = vmatpush1.msra.mxu0 0.0
    %308 = vmatprep.subr.mxu0 0.0
    %309 = vmatpush1.msra.mxu0 0.0
    %310 = vmatprep.mubr.f32.mxu0 0.0
    %311 = vmatmul.mubr.f32.gmra.mrb[0].mxu0 %v145
    %v312 = vpop.f32.mrb[0].mxu0
    %v313 = vadd.f32 %v241, %v312
    %v314 = vpop.f32.mrb[0].mxu0
    %315 = vmatprep.mubr.f32.mxu0 0.0
    %316 = vmatmul.mubr.f32.gmra.mrb[0].mxu0 %v148
    %v317 = vpop.f32.mrb[0].mxu0
    %v318 = vadd.f32 %v241, %v317
    %v319 = vpop.f32.mrb[0].mxu0
    %320 = vdwg.mxu0
    %v322 = vlaneseq
    %v323 = vshrl.u32 %v322, 7
    %v324 = vsub.s32 0, %v323
    %v325 = vrot.slane %v94, %v324
    %v327 = vadd.f32 %v313, %v325
    %v328 = vadd.f32 %v318, %v325
    %v330 = vlaneseq
    %v331 = vshrl.u32 %v330, 7
    %v332 = vsub.s32 0, %v331
    %v333 = vrot.slane %v92, %v332
    %v336 = vsel %vm150, %v86, 0
    %338 = vmatprep.subr.mxu0 0.0
    %339 = vmatpush1.msra.mxu0 %v336
    %340 = vmatprep.subr.mxu0 0.0
    %341 = vmatpush1.msra.mxu0 0.0
    %342 = vmatprep.subr.mxu0 0.0
    %343 = vmatpush1.msra.mxu0 0.0
    %344 = vmatprep.subr.mxu0 0.0
    %345 = vmatpush1.msra.mxu0 0.0
    %346 = vmatprep.subr.mxu0 0.0
    %347 = vmatpush1.msra.mxu0 0.0
    %348 = vmatprep.subr.mxu0 0.0
    %349 = vmatpush1.msra.mxu0 0.0
    %350 = vmatprep.subr.mxu0 0.0
    %351 = vmatpush1.msra.mxu0 0.0
    %352 = vmatprep.subr.mxu0 0.0
    %353 = vmatpush1.msra.mxu0 0.0
    %354 = vmatprep.subr.mxu0 0.0
    %355 = vmatpush1.msra.mxu0 0.0
    %356 = vmatprep.subr.mxu0 0.0
    %357 = vmatpush1.msra.mxu0 0.0
    %358 = vmatprep.subr.mxu0 0.0
    %359 = vmatpush1.msra.mxu0 0.0
    %360 = vmatprep.subr.mxu0 0.0
    %361 = vmatpush1.msra.mxu0 0.0
    %362 = vmatprep.subr.mxu0 0.0
    %363 = vmatpush1.msra.mxu0 0.0
    %364 = vmatprep.subr.mxu0 0.0
    %365 = vmatpush1.msra.mxu0 0.0
    %366 = vmatprep.subr.mxu0 0.0
    %367 = vmatpush1.msra.mxu0 0.0
    %368 = vmatprep.subr.mxu0 0.0
    %369 = vmatpush1.msra.mxu0 0.0
    %370 = vmatprep.subr.mxu0 0.0
    %371 = vmatpush1.msra.mxu0 0.0
    %372 = vmatprep.subr.mxu0 0.0
    %373 = vmatpush1.msra.mxu0 0.0
    %374 = vmatprep.subr.mxu0 0.0
    %375 = vmatpush1.msra.mxu0 0.0
    %376 = vmatprep.subr.mxu0 0.0
    %377 = vmatpush1.msra.mxu0 0.0
    %378 = vmatprep.subr.mxu0 0.0
    %379 = vmatpush1.msra.mxu0 0.0
    %380 = vmatprep.subr.mxu0 0.0
    %381 = vmatpush1.msra.mxu0 0.0
    %382 = vmatprep.subr.mxu0 0.0
    %383 = vmatpush1.msra.mxu0 0.0
    %384 = vmatprep.subr.mxu0 0.0
    %385 = vmatpush1.msra.mxu0 0.0
    %386 = vmatprep.subr.mxu0 0.0
    %387 = vmatpush1.msra.mxu0 0.0
    %388 = vmatprep.subr.mxu0 0.0
    %389 = vmatpush1.msra.mxu0 0.0
    %390 = vmatprep.subr.mxu0 0.0
    %391 = vmatpush1.msra.mxu0 0.0
    %392 = vmatprep.subr.mxu0 0.0
    %393 = vmatpush1.msra.mxu0 0.0
    %394 = vmatprep.subr.mxu0 0.0
    %395 = vmatpush1.msra.mxu0 0.0
    %396 = vmatprep.subr.mxu0 0.0
    %397 = vmatpush1.msra.mxu0 0.0
    %398 = vmatprep.subr.mxu0 0.0
    %399 = vmatpush1.msra.mxu0 0.0
    %400 = vmatprep.subr.mxu0 0.0
    %401 = vmatpush1.msra.mxu0 0.0
    %402 = vmatprep.mubr.f32.mxu0 0.0
    %403 = vmatmul.mubr.f32.gmra.mrb[0].mxu0 %v145
    %v404 = vpop.f32.mrb[0].mxu0
    %v405 = vadd.f32 %v333, %v404
    %v406 = vpop.f32.mrb[0].mxu0
    %407 = vmatprep.mubr.f32.mxu0 0.0
    %408 = vmatmul.mubr.f32.gmra.mrb[0].mxu0 %v148
    %v409 = vpop.f32.mrb[0].mxu0
    %v410 = vadd.f32 %v333, %v409
    %v411 = vpop.f32.mrb[0].mxu0
    %412 = vdwg.mxu0
    %v415 = vcombine.high %v135, %v135
    %v417 = vunpack.c.l.s4 1983009808
    %v418 = vunpack.c.0.s8 %v417
    %v419 = vlaneseq
    %v420 = vshrl.u32 %v419, 7
    %v421 = vsub.s32 %v418, %v420
    %v422 = vrot.slane %v135, %v421
    %v424 = vunpack.c.l.s4 1983009808
    %v425 = vunpack.c.0.s8 %v424
    %v426 = vlaneseq
    %v427 = vshrl.u32 %v426, 7
    %v428 = vsub.s32 %v425, %v427
    %v429 = vrot.slane %v415, %v428
    %v430 = vcombine.high %v422, %v422
    %v431 = vcombine.high %v136, %v136
    %v433 = vunpack.c.l.s4 1983009808
    %v434 = vunpack.c.0.s8 %v433
    %v435 = vlaneseq
    %v436 = vshrl.u32 %v435, 7
    %v437 = vsub.s32 %v434, %v436
    %v438 = vrot.slane %v136, %v437
    %v440 = vunpack.c.l.s4 1983009808
    %v441 = vunpack.c.0.s8 %v440
    %v442 = vlaneseq
    %v443 = vshrl.u32 %v442, 7
    %v444 = vsub.s32 %v441, %v443
    %v445 = vrot.slane %v431, %v444
    %v446 = vcombine.high %v438, %v438
    %v448 = vlaneseq
    %v449 = vshrl.u32 %v448, 7
    %v450 = vsub.s32 0, %v449
    %v451 = vrot.slane %v102, %v450
    %v453 = vcombine.low %v422, %v430
    %v454 = vcombine.low %v429, %v438
    %v456 = vunpack.c.l.s4 1983009808
    %v457 = vunpack.c.0.s8 %v456
    %v458 = vlaneseq
    %v459 = vshrl.u32 %v458, 7
    %v460 = vsub.s32 %v457, %v459
    %v461 = vrot.slane %v453, %v460
    %v463 = vunpack.c.l.s4 1983009808
    %v464 = vunpack.c.0.s8 %v463
    %v465 = vlaneseq
    %v466 = vshrl.u32 %v465, 7
    %v467 = vsub.s32 %v464, %v466
    %v468 = vrot.slane %v454, %v467
    %v469 = vcombine.low %v461, %v468
    %v470 = vcombine.low %v446, %v445
    %v472 = vunpack.c.l.s4 1983009808
    %v473 = vunpack.c.0.s8 %v472
    %v474 = vlaneseq
    %v475 = vshrl.u32 %v474, 7
    %v476 = vsub.s32 %v473, %v475
    %v477 = vrot.slane %v470, %v476
    %v478 = vsel %vm143, %v469, 0
    %v480 = vsel %vm143, %v477, 0
    %v483 = vsel %vm150, %v96, 0
    %485 = vmatprep.subr.mxu0 0.0
    %486 = vmatpush1.msra.mxu0 %v483
    %487 = vmatprep.subr.mxu0 0.0
    %488 = vmatpush1.msra.mxu0 0.0
    %489 = vmatprep.subr.mxu0 0.0
    %490 = vmatpush1.msra.mxu0 0.0
    %491 = vmatprep.subr.mxu0 0.0
    %492 = vmatpush1.msra.mxu0 0.0
    %493 = vmatprep.subr.mxu0 0.0
    %494 = vmatpush1.msra.mxu0 0.0
    %495 = vmatprep.subr.mxu0 0.0
    %496 = vmatpush1.msra.mxu0 0.0
    %497 = vmatprep.subr.mxu0 0.0
    %498 = vmatpush1.msra.mxu0 0.0
    %499 = vmatprep.subr.mxu0 0.0
    %500 = vmatpush1.msra.mxu0 0.0
    %501 = vmatprep.subr.mxu0 0.0
    %502 = vmatpush1.msra.mxu0 0.0
    %503 = vmatprep.subr.mxu0 0.0
    %504 = vmatpush1.msra.mxu0 0.0
    %505 = vmatprep.subr.mxu0 0.0
    %506 = vmatpush1.msra.mxu0 0.0
    %507 = vmatprep.subr.mxu0 0.0
    %508 = vmatpush1.msra.mxu0 0.0
    %509 = vmatprep.subr.mxu0 0.0
    %510 = vmatpush1.msra.mxu0 0.0
    %511 = vmatprep.subr.mxu0 0.0
    %512 = vmatpush1.msra.mxu0 0.0
    %513 = vmatprep.subr.mxu0 0.0
    %514 = vmatpush1.msra.mxu0 0.0
    %515 = vmatprep.subr.mxu0 0.0
    %516 = vmatpush1.msra.mxu0 0.0
    %517 = vmatprep.subr.mxu0 0.0
    %518 = vmatpush1.msra.mxu0 0.0
    %519 = vmatprep.subr.mxu0 0.0
    %520 = vmatpush1.msra.mxu0 0.0
    %521 = vmatprep.subr.mxu0 0.0
    %522 = vmatpush1.msra.mxu0 0.0
    %523 = vmatprep.subr.mxu0 0.0
    %524 = vmatpush1.msra.mxu0 0.0
    %525 = vmatprep.subr.mxu0 0.0
    %526 = vmatpush1.msra.mxu0 0.0
    %527 = vmatprep.subr.mxu0 0.0
    %528 = vmatpush1.msra.mxu0 0.0
    %529 = vmatprep.subr.mxu0 0.0
    %530 = vmatpush1.msra.mxu0 0.0
    %531 = vmatprep.subr.mxu0 0.0
    %532 = vmatpush1.msra.mxu0 0.0
    %533 = vmatprep.subr.mxu0 0.0
    %534 = vmatpush1.msra.mxu0 0.0
    %535 = vmatprep.subr.mxu0 0.0
    %536 = vmatpush1.msra.mxu0 0.0
    %537 = vmatprep.subr.mxu0 0.0
    %538 = vmatpush1.msra.mxu0 0.0
    %539 = vmatprep.subr.mxu0 0.0
    %540 = vmatpush1.msra.mxu0 0.0
    %541 = vmatprep.subr.mxu0 0.0
    %542 = vmatpush1.msra.mxu0 0.0
    %543 = vmatprep.subr.mxu0 0.0
    %544 = vmatpush1.msra.mxu0 0.0
    %545 = vmatprep.subr.mxu0 0.0
    %546 = vmatpush1.msra.mxu0 0.0
    %547 = vmatprep.subr.mxu0 0.0
    %548 = vmatpush1.msra.mxu0 0.0
    %549 = vmatprep.mubr.f32.mxu0 0.0
    %550 = vmatmul.mubr.f32.gmra.mrb[0].mxu0 %v478
    %v551 = vpop.f32.mrb[0].mxu0
    %v552 = vadd.f32 %v451, %v551
    %v553 = vpop.f32.mrb[0].mxu0
    %554 = vmatprep.mubr.f32.mxu0 0.0
    %555 = vmatmul.mubr.f32.gmra.mrb[0].mxu0 %v480
    %v556 = vpop.f32.mrb[0].mxu0
    %v557 = vadd.f32 %v451, %v556
    %v558 = vpop.f32.mrb[0].mxu0
    %559 = vdwg.mxu0
    %v561 = vlaneseq
    %v562 = vshrl.u32 %v561, 7
    %v563 = vsub.s32 0, %v562
    %v564 = vrot.slane %v105, %v563
    %v566 = vadd.f32 %v552, %v564
    %v567 = vadd.f32 %v557, %v564
    %v570 = vcombine.high %v566, %v566
    %v572 = vunpack.c.l.s4 1983009808
    %v573 = vunpack.c.0.s8 %v572
    %v574 = vlaneseq
    %v575 = vshrl.u32 %v574, 7
    %v576 = vsub.s32 %v573, %v575
    %v577 = vrot.slane %v566, %v576
    %v579 = vunpack.c.l.s4 1983009808
    %v580 = vunpack.c.0.s8 %v579
    %v581 = vlaneseq
    %v582 = vshrl.u32 %v581, 7
    %v583 = vsub.s32 %v580, %v582
    %v584 = vrot.slane %v570, %v583
    %v585 = vcombine.high %v577, %v577
    %v586 = vcombine.high %v584, %v584
    %v588 = vunpack.c.l.s4 1983009808
    %v589 = vunpack.c.0.s8 %v588
    %v590 = vlaneseq
    %v591 = vshrl.u32 %v590, 7
    %v592 = vsub.s32 %v589, %v591
    %v593 = vrot.slane %v567, %v592
    %v594 = vcombine.high %v593, %v593
    %v602 = vlaneseq
    %v603 = vshrl.u32 %v602, 7
    %v604 = vsub.s32 0, %v603
    %v605 = vrot.slane %v103, %v604
    %v608 = vsel %vm150, %v97, 0
    %610 = vmatprep.subr.mxu0 0.0
    %611 = vmatpush1.msra.mxu0 %v608
    %612 = vmatprep.subr.mxu0 0.0
    %613 = vmatpush1.msra.mxu0 0.0
    %614 = vmatprep.subr.mxu0 0.0
    %615 = vmatpush1.msra.mxu0 0.0
    %616 = vmatprep.subr.mxu0 0.0
    %617 = vmatpush1.msra.mxu0 0.0
    %618 = vmatprep.subr.mxu0 0.0
    %619 = vmatpush1.msra.mxu0 0.0
    %620 = vmatprep.subr.mxu0 0.0
    %621 = vmatpush1.msra.mxu0 0.0
    %622 = vmatprep.subr.mxu0 0.0
    %623 = vmatpush1.msra.mxu0 0.0
    %624 = vmatprep.subr.mxu0 0.0
    %625 = vmatpush1.msra.mxu0 0.0
    %626 = vmatprep.subr.mxu0 0.0
    %627 = vmatpush1.msra.mxu0 0.0
    %628 = vmatprep.subr.mxu0 0.0
    %629 = vmatpush1.msra.mxu0 0.0
    %630 = vmatprep.subr.mxu0 0.0
    %631 = vmatpush1.msra.mxu0 0.0
    %632 = vmatprep.subr.mxu0 0.0
    %633 = vmatpush1.msra.mxu0 0.0
    %634 = vmatprep.subr.mxu0 0.0
    %635 = vmatpush1.msra.mxu0 0.0
    %636 = vmatprep.subr.mxu0 0.0
    %637 = vmatpush1.msra.mxu0 0.0
    %638 = vmatprep.subr.mxu0 0.0
    %639 = vmatpush1.msra.mxu0 0.0
    %640 = vmatprep.subr.mxu0 0.0
    %641 = vmatpush1.msra.mxu0 0.0
    %642 = vmatprep.subr.mxu0 0.0
    %643 = vmatpush1.msra.mxu0 0.0
    %644 = vmatprep.subr.mxu0 0.0
    %645 = vmatpush1.msra.mxu0 0.0
    %646 = vmatprep.subr.mxu0 0.0
    %647 = vmatpush1.msra.mxu0 0.0
    %648 = vmatprep.subr.mxu0 0.0
    %649 = vmatpush1.msra.mxu0 0.0
    %650 = vmatprep.subr.mxu0 0.0
    %651 = vmatpush1.msra.mxu0 0.0
    %652 = vmatprep.subr.mxu0 0.0
    %653 = vmatpush1.msra.mxu0 0.0
    %654 = vmatprep.subr.mxu0 0.0
    %655 = vmatpush1.msra.mxu0 0.0
    %656 = vmatprep.subr.mxu0 0.0
    %657 = vmatpush1.msra.mxu0 0.0
    %658 = vmatprep.subr.mxu0 0.0
    %659 = vmatpush1.msra.mxu0 0.0
    %660 = vmatprep.subr.mxu0 0.0
    %661 = vmatpush1.msra.mxu0 0.0
    %662 = vmatprep.subr.mxu0 0.0
    %663 = vmatpush1.msra.mxu0 0.0
    %664 = vmatprep.subr.mxu0 0.0
    %665 = vmatpush1.msra.mxu0 0.0
    %666 = vmatprep.subr.mxu0 0.0
    %667 = vmatpush1.msra.mxu0 0.0
    %668 = vmatprep.subr.mxu0 0.0
    %669 = vmatpush1.msra.mxu0 0.0
    %670 = vmatprep.subr.mxu0 0.0
    %671 = vmatpush1.msra.mxu0 0.0
    %672 = vmatprep.subr.mxu0 0.0
    %673 = vmatpush1.msra.mxu0 0.0
    %674 = vmatprep.mubr.f32.mxu0 0.0
    %675 = vmatmul.mubr.f32.gmra.mrb[0].mxu0 %v478
    %v676 = vpop.f32.mrb[0].mxu0
    %v677 = vadd.f32 %v605, %v676
    %v678 = vpop.f32.mrb[0].mxu0
    %679 = vmatprep.mubr.f32.mxu0 0.0
    %680 = vmatmul.mubr.f32.gmra.mrb[0].mxu0 %v480
    %v681 = vpop.f32.mrb[0].mxu0
    %v682 = vadd.f32 %v605, %v681
    %v683 = vpop.f32.mrb[0].mxu0
    %684 = vdwg.mxu0
    %v686 = vlaneseq
    %v687 = vshrl.u32 %v686, 7
    %v688 = vsub.s32 0, %v687
    %v689 = vrot.slane %v106, %v688
    %v691 = vadd.f32 %v677, %v689
    %v692 = vadd.f32 %v682, %v689
    %v695 = vcombine.high %v691, %v691
    %v697 = vunpack.c.l.s4 1983009808
    %v698 = vunpack.c.0.s8 %v697
    %v699 = vlaneseq
    %v700 = vshrl.u32 %v699, 7
    %v701 = vsub.s32 %v698, %v700
    %v702 = vrot.slane %v691, %v701
    %v704 = vunpack.c.l.s4 1983009808
    %v705 = vunpack.c.0.s8 %v704
    %v706 = vlaneseq
    %v707 = vshrl.u32 %v706, 7
    %v708 = vsub.s32 %v705, %v707
    %v709 = vrot.slane %v695, %v708
    %v710 = vcombine.high %v702, %v702
    %v711 = vcombine.high %v709, %v709
    %v713 = vunpack.c.l.s4 1983009808
    %v714 = vunpack.c.0.s8 %v713
    %v715 = vlaneseq
    %v716 = vshrl.u32 %v715, 7
    %v717 = vsub.s32 %v714, %v716
    %v718 = vrot.slane %v692, %v717
    %v719 = vcombine.high %v718, %v718
    %v727 = vlaneseq
    %v728 = vshrl.u32 %v727, 7
    %v729 = vsub.s32 0, %v728
    %v730 = vrot.slane %v104, %v729
    %v733 = vsel %vm150, %v98, 0
    %735 = vmatprep.subr.mxu0 0.0
    %736 = vmatpush1.msra.mxu0 %v733
    %737 = vmatprep.subr.mxu0 0.0
    %738 = vmatpush1.msra.mxu0 0.0
    %739 = vmatprep.subr.mxu0 0.0
    %740 = vmatpush1.msra.mxu0 0.0
    %741 = vmatprep.subr.mxu0 0.0
    %742 = vmatpush1.msra.mxu0 0.0
    %743 = vmatprep.subr.mxu0 0.0
    %744 = vmatpush1.msra.mxu0 0.0
    %745 = vmatprep.subr.mxu0 0.0
    %746 = vmatpush1.msra.mxu0 0.0
    %747 = vmatprep.subr.mxu0 0.0
    %748 = vmatpush1.msra.mxu0 0.0
    %749 = vmatprep.subr.mxu0 0.0
    %750 = vmatpush1.msra.mxu0 0.0
    %751 = vmatprep.subr.mxu0 0.0
    %752 = vmatpush1.msra.mxu0 0.0
    %753 = vmatprep.subr.mxu0 0.0
    %754 = vmatpush1.msra.mxu0 0.0
    %755 = vmatprep.subr.mxu0 0.0
    %756 = vmatpush1.msra.mxu0 0.0
    %757 = vmatprep.subr.mxu0 0.0
    %758 = vmatpush1.msra.mxu0 0.0
    %759 = vmatprep.subr.mxu0 0.0
    %760 = vmatpush1.msra.mxu0 0.0
    %761 = vmatprep.subr.mxu0 0.0
    %762 = vmatpush1.msra.mxu0 0.0
    %763 = vmatprep.subr.mxu0 0.0
    %764 = vmatpush1.msra.mxu0 0.0
    %765 = vmatprep.subr.mxu0 0.0
    %766 = vmatpush1.msra.mxu0 0.0
    %767 = vmatprep.subr.mxu0 0.0
    %768 = vmatpush1.msra.mxu0 0.0
    %769 = vmatprep.subr.mxu0 0.0
    %770 = vmatpush1.msra.mxu0 0.0
    %771 = vmatprep.subr.mxu0 0.0
    %772 = vmatpush1.msra.mxu0 0.0
    %773 = vmatprep.subr.mxu0 0.0
    %774 = vmatpush1.msra.mxu0 0.0
    %775 = vmatprep.subr.mxu0 0.0
    %776 = vmatpush1.msra.mxu0 0.0
    %777 = vmatprep.subr.mxu0 0.0
    %778 = vmatpush1.msra.mxu0 0.0
    %779 = vmatprep.subr.mxu0 0.0
    %780 = vmatpush1.msra.mxu0 0.0
    %781 = vmatprep.subr.mxu0 0.0
    %782 = vmatpush1.msra.mxu0 0.0
    %783 = vmatprep.subr.mxu0 0.0
    %784 = vmatpush1.msra.mxu0 0.0
    %785 = vmatprep.subr.mxu0 0.0
    %786 = vmatpush1.msra.mxu0 0.0
    %787 = vmatprep.subr.mxu0 0.0
    %788 = vmatpush1.msra.mxu0 0.0
    %789 = vmatprep.subr.mxu0 0.0
    %790 = vmatpush1.msra.mxu0 0.0
    %791 = vmatprep.subr.mxu0 0.0
    %792 = vmatpush1.msra.mxu0 0.0
    %793 = vmatprep.subr.mxu0 0.0
    %794 = vmatpush1.msra.mxu0 0.0
    %795 = vmatprep.subr.mxu0 0.0
    %796 = vmatpush1.msra.mxu0 0.0
    %797 = vmatprep.subr.mxu0 0.0
    %798 = vmatpush1.msra.mxu0 0.0
    %799 = vmatprep.mubr.f32.mxu0 0.0
    %800 = vmatmul.mubr.f32.gmra.mrb[0].mxu0 %v478
    %v801 = vpop.f32.mrb[0].mxu0
    %v802 = vadd.f32 %v730, %v801
    %v803 = vpop.f32.mrb[0].mxu0
    %804 = vmatprep.mubr.f32.mxu0 0.0
    %805 = vmatmul.mubr.f32.gmra.mrb[0].mxu0 %v480
    %v806 = vpop.f32.mrb[0].mxu0
    %v807 = vadd.f32 %v730, %v806
    %v808 = vpop.f32.mrb[0].mxu0
    %809 = vdwg.mxu0
    %v812 = vcombine.high %v802, %v802
    %v814 = vunpack.c.l.s4 1983009808
    %v815 = vunpack.c.0.s8 %v814
    %v816 = vlaneseq
    %v817 = vshrl.u32 %v816, 7
    %v818 = vsub.s32 %v815, %v817
    %v819 = vrot.slane %v802, %v818
    %v821 = vunpack.c.l.s4 1983009808
    %v822 = vunpack.c.0.s8 %v821
    %v823 = vlaneseq
    %v824 = vshrl.u32 %v823, 7
    %v825 = vsub.s32 %v822, %v824
    %v826 = vrot.slane %v812, %v825
    %v827 = vcombine.high %v819, %v819
    %v828 = vcombine.high %v826, %v826
    %v830 = vunpack.c.l.s4 1983009808
    %v831 = vunpack.c.0.s8 %v830
    %v832 = vlaneseq
    %v833 = vshrl.u32 %v832, 7
    %v834 = vsub.s32 %v831, %v833
    %v835 = vrot.slane %v807, %v834
    %v836 = vcombine.high %v835, %v835
    %vm843 = vcmask 64512
    %v845 = vsel %vm843, 0.0, 0
    %847 = vmatprep.subr.mxu0 0.0
    %848 = vmatpush1.msra.mxu0 %v87
    %849 = vmatprep.subr.mxu0 0.0
    %850 = vmatpush1.msra.mxu0 0.0
    %851 = vmatprep.subr.mxu0 0.0
    %852 = vmatpush1.msra.mxu0 0.0
    %853 = vmatprep.subr.mxu0 0.0
    %854 = vmatpush1.msra.mxu0 0.0
    %855 = vmatprep.subr.mxu0 0.0
    %856 = vmatpush1.msra.mxu0 0.0
    %857 = vmatprep.subr.mxu0 0.0
    %858 = vmatpush1.msra.mxu0 0.0
    %859 = vmatprep.subr.mxu0 0.0
    %860 = vmatpush1.msra.mxu0 0.0
    %861 = vmatprep.subr.mxu0 0.0
    %862 = vmatpush1.msra.mxu0 0.0
    %863 = vmatprep.subr.mxu0 0.0
    %864 = vmatpush1.msra.mxu0 0.0
    %865 = vmatprep.subr.mxu0 0.0
    %866 = vmatpush1.msra.mxu0 0.0
    %867 = vmatprep.subr.mxu0 0.0
    %868 = vmatpush1.msra.mxu0 0.0
    %869 = vmatprep.subr.mxu0 0.0
    %870 = vmatpush1.msra.mxu0 0.0
    %871 = vmatprep.subr.mxu0 0.0
    %872 = vmatpush1.msra.mxu0 0.0
    %873 = vmatprep.subr.mxu0 0.0
    %874 = vmatpush1.msra.mxu0 0.0
    %875 = vmatprep.subr.mxu0 0.0
    %876 = vmatpush1.msra.mxu0 0.0
    %877 = vmatprep.subr.mxu0 0.0
    %878 = vmatpush1.msra.mxu0 0.0
    %879 = vmatprep.subr.mxu0 0.0
    %880 = vmatpush1.msra.mxu0 0.0
    %881 = vmatprep.subr.mxu0 0.0
    %882 = vmatpush1.msra.mxu0 0.0
    %883 = vmatprep.subr.mxu0 0.0
    %884 = vmatpush1.msra.mxu0 0.0
    %885 = vmatprep.subr.mxu0 0.0
    %886 = vmatpush1.msra.mxu0 0.0
    %887 = vmatprep.subr.mxu0 0.0
    %888 = vmatpush1.msra.mxu0 0.0
    %889 = vmatprep.subr.mxu0 0.0
    %890 = vmatpush1.msra.mxu0 0.0
    %891 = vmatprep.subr.mxu0 0.0
    %892 = vmatpush1.msra.mxu0 0.0
    %893 = vmatprep.subr.mxu0 0.0
    %894 = vmatpush1.msra.mxu0 0.0
    %895 = vmatprep.subr.mxu0 0.0
    %896 = vmatpush1.msra.mxu0 0.0
    %897 = vmatprep.subr.mxu0 0.0
    %898 = vmatpush1.msra.mxu0 0.0
    %899 = vmatprep.subr.mxu0 0.0
    %900 = vmatpush1.msra.mxu0 0.0
    %901 = vmatprep.subr.mxu0 0.0
    %902 = vmatpush1.msra.mxu0 0.0
    %903 = vmatprep.subr.mxu0 0.0
    %904 = vmatpush1.msra.mxu0 0.0
    %905 = vmatprep.subr.mxu0 0.0
    %906 = vmatpush1.msra.mxu0 0.0
    %907 = vmatprep.subr.mxu0 0.0
    %908 = vmatpush1.msra.mxu0 0.0
    %909 = vmatprep.subr.mxu0 0.0
    %910 = vmatpush1.msra.mxu0 0.0
    %911 = vmatprep.mubr.f32.mxu0 0.0
    %912 = vmatmul.mubr.f32.gmra.mrb[0].mxu0 %v845
    %v913 = vpop.f32.mrb[0].mxu0
    %v914 = vadd.f32 0.0, %v913
    %v915 = vpop.f32.mrb[0].mxu0
    %916 = vdwg.mxu0
    %917 = vmatprep.subr.mxu0 0.0
    %918 = vmatpush1.msra.mxu0 %v88
    %919 = vmatprep.subr.mxu0 0.0
    %920 = vmatpush1.msra.mxu0 0.0
    %921 = vmatprep.subr.mxu0 0.0
    %922 = vmatpush1.msra.mxu0 0.0
    %923 = vmatprep.subr.mxu0 0.0
    %924 = vmatpush1.msra.mxu0 0.0
    %925 = vmatprep.subr.mxu0 0.0
    %926 = vmatpush1.msra.mxu0 0.0
    %927 = vmatprep.subr.mxu0 0.0
    %928 = vmatpush1.msra.mxu0 0.0
    %929 = vmatprep.subr.mxu0 0.0
    %930 = vmatpush1.msra.mxu0 0.0
    %931 = vmatprep.subr.mxu0 0.0
    %932 = vmatpush1.msra.mxu0 0.0
    %933 = vmatprep.subr.mxu0 0.0
    %934 = vmatpush1.msra.mxu0 0.0
    %935 = vmatprep.subr.mxu0 0.0
    %936 = vmatpush1.msra.mxu0 0.0
    %937 = vmatprep.subr.mxu0 0.0
    %938 = vmatpush1.msra.mxu0 0.0
    %939 = vmatprep.subr.mxu0 0.0
    %940 = vmatpush1.msra.mxu0 0.0
    %941 = vmatprep.subr.mxu0 0.0
    %942 = vmatpush1.msra.mxu0 0.0
    %943 = vmatprep.subr.mxu0 0.0
    %944 = vmatpush1.msra.mxu0 0.0
    %945 = vmatprep.subr.mxu0 0.0
    %946 = vmatpush1.msra.mxu0 0.0
    %947 = vmatprep.subr.mxu0 0.0
    %948 = vmatpush1.msra.mxu0 0.0
    %949 = vmatprep.subr.mxu0 0.0
    %950 = vmatpush1.msra.mxu0 0.0
    %951 = vmatprep.subr.mxu0 0.0
    %952 = vmatpush1.msra.mxu0 0.0
    %953 = vmatprep.subr.mxu0 0.0
    %954 = vmatpush1.msra.mxu0 0.0
    %955 = vmatprep.subr.mxu0 0.0
    %956 = vmatpush1.msra.mxu0 0.0
    %957 = vmatprep.subr.mxu0 0.0
    %958 = vmatpush1.msra.mxu0 0.0
    %959 = vmatprep.subr.mxu0 0.0
    %960 = vmatpush1.msra.mxu0 0.0
    %961 = vmatprep.subr.mxu0 0.0
    %962 = vmatpush1.msra.mxu0 0.0
    %963 = vmatprep.subr.mxu0 0.0
    %964 = vmatpush1.msra.mxu0 0.0
    %965 = vmatprep.subr.mxu0 0.0
    %966 = vmatpush1.msra.mxu0 0.0
    %967 = vmatprep.subr.mxu0 0.0
    %968 = vmatpush1.msra.mxu0 0.0
    %969 = vmatprep.subr.mxu0 0.0
    %970 = vmatpush1.msra.mxu0 0.0
    %971 = vmatprep.subr.mxu0 0.0
    %972 = vmatpush1.msra.mxu0 0.0
    %973 = vmatprep.subr.mxu0 0.0
    %974 = vmatpush1.msra.mxu0 0.0
    %975 = vmatprep.subr.mxu0 0.0
    %976 = vmatpush1.msra.mxu0 0.0
    %977 = vmatprep.subr.mxu0 0.0
    %978 = vmatpush1.msra.mxu0 0.0
    %979 = vmatprep.subr.mxu0 0.0
    %980 = vmatpush1.msra.mxu0 0.0
    %981 = vmatprep.mubr.f32.mxu0 0.0
    %982 = vmatmul.mubr.f32.gmra.mrb[0].mxu0 %v845
    %v983 = vpop.f32.mrb[0].mxu0
    %v984 = vadd.f32 0.0, %v983
    %v985 = vpop.f32.mrb[0].mxu0
    %986 = vdwg.mxu0
    %v988 = vlaneseq
    %v989 = vshrl.u32 %v988, 7
    %v990 = vsub.s32 0, %v989
    %v991 = vrot.slane %v95, %v990
    %993 = vmatprep.subr.mxu0 0.0
    %994 = vmatpush1.msra.mxu0 %v89
    %995 = vmatprep.subr.mxu0 0.0
    %996 = vmatpush1.msra.mxu0 0.0
    %997 = vmatprep.subr.mxu0 0.0
    %998 = vmatpush1.msra.mxu0 0.0
    %999 = vmatprep.subr.mxu0 0.0
    %1000 = vmatpush1.msra.mxu0 0.0
    %1001 = vmatprep.subr.mxu0 0.0
    %1002 = vmatpush1.msra.mxu0 0.0
    %1003 = vmatprep.subr.mxu0 0.0
    %1004 = vmatpush1.msra.mxu0 0.0
    %1005 = vmatprep.subr.mxu0 0.0
    %1006 = vmatpush1.msra.mxu0 0.0
    %1007 = vmatprep.subr.mxu0 0.0
    %1008 = vmatpush1.msra.mxu0 0.0
    %1009 = vmatprep.subr.mxu0 0.0
    %1010 = vmatpush1.msra.mxu0 0.0
    %1011 = vmatprep.subr.mxu0 0.0
    %1012 = vmatpush1.msra.mxu0 0.0
    %1013 = vmatprep.subr.mxu0 0.0
    %1014 = vmatpush1.msra.mxu0 0.0
    %1015 = vmatprep.subr.mxu0 0.0
    %1016 = vmatpush1.msra.mxu0 0.0
    %1017 = vmatprep.subr.mxu0 0.0
    %1018 = vmatpush1.msra.mxu0 0.0
    %1019 = vmatprep.subr.mxu0 0.0
    %1020 = vmatpush1.msra.mxu0 0.0
    %1021 = vmatprep.subr.mxu0 0.0
    %1022 = vmatpush1.msra.mxu0 0.0
    %1023 = vmatprep.subr.mxu0 0.0
    %1024 = vmatpush1.msra.mxu0 0.0
    %1025 = vmatprep.subr.mxu0 0.0
    %1026 = vmatpush1.msra.mxu0 0.0
    %1027 = vmatprep.subr.mxu0 0.0
    %1028 = vmatpush1.msra.mxu0 0.0
    %1029 = vmatprep.subr.mxu0 0.0
    %1030 = vmatpush1.msra.mxu0 0.0
    %1031 = vmatprep.subr.mxu0 0.0
    %1032 = vmatpush1.msra.mxu0 0.0
    %1033 = vmatprep.subr.mxu0 0.0
    %1034 = vmatpush1.msra.mxu0 0.0
    %1035 = vmatprep.subr.mxu0 0.0
    %1036 = vmatpush1.msra.mxu0 0.0
    %1037 = vmatprep.subr.mxu0 0.0
    %1038 = vmatpush1.msra.mxu0 0.0
    %1039 = vmatprep.subr.mxu0 0.0
    %1040 = vmatpush1.msra.mxu0 0.0
    %1041 = vmatprep.subr.mxu0 0.0
    %1042 = vmatpush1.msra.mxu0 0.0
    %1043 = vmatprep.subr.mxu0 0.0
    %1044 = vmatpush1.msra.mxu0 0.0
    %1045 = vmatprep.subr.mxu0 0.0
    %1046 = vmatpush1.msra.mxu0 0.0
    %1047 = vmatprep.subr.mxu0 0.0
    %1048 = vmatpush1.msra.mxu0 0.0
    %1049 = vmatprep.subr.mxu0 0.0
    %1050 = vmatpush1.msra.mxu0 0.0
    %1051 = vmatprep.subr.mxu0 0.0
    %1052 = vmatpush1.msra.mxu0 0.0
    %1053 = vmatprep.subr.mxu0 0.0
    %1054 = vmatpush1.msra.mxu0 0.0
    %1055 = vmatprep.subr.mxu0 0.0
    %1056 = vmatpush1.msra.mxu0 0.0
    %1057 = vmatprep.mubr.f32.mxu0 0.0
    %1058 = vmatmul.mubr.f32.gmra.mrb[0].mxu0 %v845
    %v1059 = vpop.f32.mrb[0].mxu0
    %v1060 = vadd.f32 %v991, %v1059
    %v1061 = vpop.f32.mrb[0].mxu0
    %1062 = vdwg.mxu0
    %v1064 = vrot.slane %v914, 1
    %v1067 = vadd.f32 %v235, %v914
    %v1068 = vadd.f32 %v236, %v1064
    %v1069 = vxor.u32 %v1067, 2147483648
    %v1070 = vxor.u32 %v1068, 2147483648
    %v1071 = vmul.f32 %v1069, 1.442695
    %v1072 = vpow.pop %v1071
    %v1073 = vmul.f32 %v1070, 1.442695
    %v1074 = vpow.pop %v1073
    %v1075 = vadd.f32 %v1072, 1.0
    %v1076 = vadd.f32 %v1074, 1.0
    %v1077 = vrcp.pop %v1075
    %v1078 = vmul.f32 1.0, %v1077
    %v1079 = vrcp.pop %v1076
    %v1080 = vmul.f32 1.0, %v1079
    %v1082 = vrot.slane %v984, 1
    %v1085 = vadd.f32 %v327, %v984
    %v1086 = vadd.f32 %v328, %v1082
    %v1087 = vxor.u32 %v1085, 2147483648
    %v1088 = vxor.u32 %v1086, 2147483648
    %v1089 = vmul.f32 %v1087, 1.442695
    %v1090 = vpow.pop %v1089
    %v1091 = vmul.f32 %v1088, 1.442695
    %v1092 = vpow.pop %v1091
    %v1093 = vadd.f32 %v1090, 1.0
    %v1094 = vadd.f32 %v1092, 1.0
    %v1095 = vrcp.pop %v1093
    %v1096 = vmul.f32 1.0, %v1095
    %v1097 = vrcp.pop %v1094
    %v1098 = vmul.f32 1.0, %v1097
    %v1100 = vrot.slane %v1060, 1
    %v1103 = vmul.f32 %v1078, %v1060
    %v1104 = vmul.f32 %v1080, %v1100
    %v1105 = vadd.f32 %v405, %v1103
    %v1106 = vadd.f32 %v410, %v1104
    %v1107 = vtanh.pop %v1105
    %v1108 = vtanh.pop %v1106
    %v1109 = vsub.f32 1.0, %v1096
    %v1110 = vsub.f32 1.0, %v1098
    %v1111 = vmul.f32 %v1109, %v1107
    %v1112 = vmul.f32 %v1110, %v1108
    %v1113 = vmul.f32 %v1096, 0.0
    %v1114 = vmul.f32 %v1098, 0.0
    %v1115 = vadd.f32 %v1111, %v1113
    %v1116 = vadd.f32 %v1112, %v1114
    %v1119 = vrot.slane %v1116, 7
    %vm1120 = vcmask 1041409
    %v1121 = vsel %vm1120, %v1119, %v1115
    %v1122 = vsel %vm843, %v1121, 0
    %1124 = vmatprep.subr.mxu0 0.0
    %1125 = vmatpush1.msra.mxu0 %v87
    %1126 = vmatprep.subr.mxu0 0.0
    %1127 = vmatpush1.msra.mxu0 0.0
    %1128 = vmatprep.subr.mxu0 0.0
    %1129 = vmatpush1.msra.mxu0 0.0
    %1130 = vmatprep.subr.mxu0 0.0
    %1131 = vmatpush1.msra.mxu0 0.0
    %1132 = vmatprep.subr.mxu0 0.0
    %1133 = vmatpush1.msra.mxu0 0.0
    %1134 = vmatprep.subr.mxu0 0.0
    %1135 = vmatpush1.msra.mxu0 0.0
    %1136 = vmatprep.subr.mxu0 0.0
    %1137 = vmatpush1.msra.mxu0 0.0
    %1138 = vmatprep.subr.mxu0 0.0
    %1139 = vmatpush1.msra.mxu0 0.0
    %1140 = vmatprep.subr.mxu0 0.0
    %1141 = vmatpush1.msra.mxu0 0.0
    %1142 = vmatprep.subr.mxu0 0.0
    %1143 = vmatpush1.msra.mxu0 0.0
    %1144 = vmatprep.subr.mxu0 0.0
    %1145 = vmatpush1.msra.mxu0 0.0
    %1146 = vmatprep.subr.mxu0 0.0
    %1147 = vmatpush1.msra.mxu0 0.0
    %1148 = vmatprep.subr.mxu0 0.0
    %1149 = vmatpush1.msra.mxu0 0.0
    %1150 = vmatprep.subr.mxu0 0.0
    %1151 = vmatpush1.msra.mxu0 0.0
    %1152 = vmatprep.subr.mxu0 0.0
    %1153 = vmatpush1.msra.mxu0 0.0
    %1154 = vmatprep.subr.mxu0 0.0
    %1155 = vmatpush1.msra.mxu0 0.0
    %1156 = vmatprep.subr.mxu0 0.0
    %1157 = vmatpush1.msra.mxu0 0.0
    %1158 = vmatprep.subr.mxu0 0.0
    %1159 = vmatpush1.msra.mxu0 0.0
    %1160 = vmatprep.subr.mxu0 0.0
    %1161 = vmatpush1.msra.mxu0 0.0
    %1162 = vmatprep.subr.mxu0 0.0
    %1163 = vmatpush1.msra.mxu0 0.0
    %1164 = vmatprep.subr.mxu0 0.0
    %1165 = vmatpush1.msra.mxu0 0.0
    %1166 = vmatprep.subr.mxu0 0.0
    %1167 = vmatpush1.msra.mxu0 0.0
    %1168 = vmatprep.subr.mxu0 0.0
    %1169 = vmatpush1.msra.mxu0 0.0
    %1170 = vmatprep.subr.mxu0 0.0
    %1171 = vmatpush1.msra.mxu0 0.0
    %1172 = vmatprep.subr.mxu0 0.0
    %1173 = vmatpush1.msra.mxu0 0.0
    %1174 = vmatprep.subr.mxu0 0.0
    %1175 = vmatpush1.msra.mxu0 0.0
    %1176 = vmatprep.subr.mxu0 0.0
    %1177 = vmatpush1.msra.mxu0 0.0
    %1178 = vmatprep.subr.mxu0 0.0
    %1179 = vmatpush1.msra.mxu0 0.0
    %1180 = vmatprep.subr.mxu0 0.0
    %1181 = vmatpush1.msra.mxu0 0.0
    %1182 = vmatprep.subr.mxu0 0.0
    %1183 = vmatpush1.msra.mxu0 0.0
    %1184 = vmatprep.subr.mxu0 0.0
    %1185 = vmatpush1.msra.mxu0 0.0
    %1186 = vmatprep.subr.mxu0 0.0
    %1187 = vmatpush1.msra.mxu0 0.0
    %1188 = vmatprep.mubr.f32.mxu0 0.0
    %1189 = vmatmul.mubr.f32.gmra.mrb[0].mxu0 %v1122
    %v1190 = vpop.f32.mrb[0].mxu0
    %v1191 = vadd.f32 0.0, %v1190
    %v1192 = vpop.f32.mrb[0].mxu0
    %1193 = vdwg.mxu0
    %1194 = vmatprep.subr.mxu0 0.0
    %1195 = vmatpush1.msra.mxu0 %v88
    %1196 = vmatprep.subr.mxu0 0.0
    %1197 = vmatpush1.msra.mxu0 0.0
    %1198 = vmatprep.subr.mxu0 0.0
    %1199 = vmatpush1.msra.mxu0 0.0
    %1200 = vmatprep.subr.mxu0 0.0
    %1201 = vmatpush1.msra.mxu0 0.0
    %1202 = vmatprep.subr.mxu0 0.0
    %1203 = vmatpush1.msra.mxu0 0.0
    %1204 = vmatprep.subr.mxu0 0.0
    %1205 = vmatpush1.msra.mxu0 0.0
    %1206 = vmatprep.subr.mxu0 0.0
    %1207 = vmatpush1.msra.mxu0 0.0
    %1208 = vmatprep.subr.mxu0 0.0
    %1209 = vmatpush1.msra.mxu0 0.0
    %1210 = vmatprep.subr.mxu0 0.0
    %1211 = vmatpush1.msra.mxu0 0.0
    %1212 = vmatprep.subr.mxu0 0.0
    %1213 = vmatpush1.msra.mxu0 0.0
    %1214 = vmatprep.subr.mxu0 0.0
    %1215 = vmatpush1.msra.mxu0 0.0
    %1216 = vmatprep.subr.mxu0 0.0
    %1217 = vmatpush1.msra.mxu0 0.0
    %1218 = vmatprep.subr.mxu0 0.0
    %1219 = vmatpush1.msra.mxu0 0.0
    %1220 = vmatprep.subr.mxu0 0.0
    %1221 = vmatpush1.msra.mxu0 0.0
    %1222 = vmatprep.subr.mxu0 0.0
    %1223 = vmatpush1.msra.mxu0 0.0
    %1224 = vmatprep.subr.mxu0 0.0
    %1225 = vmatpush1.msra.mxu0 0.0
    %1226 = vmatprep.subr.mxu0 0.0
    %1227 = vmatpush1.msra.mxu0 0.0
    %1228 = vmatprep.subr.mxu0 0.0
    %1229 = vmatpush1.msra.mxu0 0.0
    %1230 = vmatprep.subr.mxu0 0.0
    %1231 = vmatpush1.msra.mxu0 0.0
    %1232 = vmatprep.subr.mxu0 0.0
    %1233 = vmatpush1.msra.mxu0 0.0
    %1234 = vmatprep.subr.mxu0 0.0
    %1235 = vmatpush1.msra.mxu0 0.0
    %1236 = vmatprep.subr.mxu0 0.0
    %1237 = vmatpush1.msra.mxu0 0.0
    %1238 = vmatprep.subr.mxu0 0.0
    %1239 = vmatpush1.msra.mxu0 0.0
    %1240 = vmatprep.subr.mxu0 0.0
    %1241 = vmatpush1.msra.mxu0 0.0
    %1242 = vmatprep.subr.mxu0 0.0
    %1243 = vmatpush1.msra.mxu0 0.0
    %1244 = vmatprep.subr.mxu0 0.0
    %1245 = vmatpush1.msra.mxu0 0.0
    %1246 = vmatprep.subr.mxu0 0.0
    %1247 = vmatpush1.msra.mxu0 0.0
    %1248 = vmatprep.subr.mxu0 0.0
    %1249 = vmatpush1.msra.mxu0 0.0
    %1250 = vmatprep.subr.mxu0 0.0
    %1251 = vmatpush1.msra.mxu0 0.0
    %1252 = vmatprep.subr.mxu0 0.0
    %1253 = vmatpush1.msra.mxu0 0.0
    %1254 = vmatprep.subr.mxu0 0.0
    %1255 = vmatpush1.msra.mxu0 0.0
    %1256 = vmatprep.subr.mxu0 0.0
    %1257 = vmatpush1.msra.mxu0 0.0
    %1258 = vmatprep.mubr.f32.mxu0 0.0
    %1259 = vmatmul.mubr.f32.gmra.mrb[0].mxu0 %v1122
    %v1260 = vpop.f32.mrb[0].mxu0
    %v1261 = vadd.f32 0.0, %v1260
    %v1262 = vpop.f32.mrb[0].mxu0
    %1263 = vdwg.mxu0
    %1264 = vmatprep.subr.mxu0 0.0
    %1265 = vmatpush1.msra.mxu0 %v89
    %1266 = vmatprep.subr.mxu0 0.0
    %1267 = vmatpush1.msra.mxu0 0.0
    %1268 = vmatprep.subr.mxu0 0.0
    %1269 = vmatpush1.msra.mxu0 0.0
    %1270 = vmatprep.subr.mxu0 0.0
    %1271 = vmatpush1.msra.mxu0 0.0
    %1272 = vmatprep.subr.mxu0 0.0
    %1273 = vmatpush1.msra.mxu0 0.0
    %1274 = vmatprep.subr.mxu0 0.0
    %1275 = vmatpush1.msra.mxu0 0.0
    %1276 = vmatprep.subr.mxu0 0.0
    %1277 = vmatpush1.msra.mxu0 0.0
    %1278 = vmatprep.subr.mxu0 0.0
    %1279 = vmatpush1.msra.mxu0 0.0
    %1280 = vmatprep.subr.mxu0 0.0
    %1281 = vmatpush1.msra.mxu0 0.0
    %1282 = vmatprep.subr.mxu0 0.0
    %1283 = vmatpush1.msra.mxu0 0.0
    %1284 = vmatprep.subr.mxu0 0.0
    %1285 = vmatpush1.msra.mxu0 0.0
    %1286 = vmatprep.subr.mxu0 0.0
    %1287 = vmatpush1.msra.mxu0 0.0
    %1288 = vmatprep.subr.mxu0 0.0
    %1289 = vmatpush1.msra.mxu0 0.0
    %1290 = vmatprep.subr.mxu0 0.0
    %1291 = vmatpush1.msra.mxu0 0.0
    %1292 = vmatprep.subr.mxu0 0.0
    %1293 = vmatpush1.msra.mxu0 0.0
    %1294 = vmatprep.subr.mxu0 0.0
    %1295 = vmatpush1.msra.mxu0 0.0
    %1296 = vmatprep.subr.mxu0 0.0
    %1297 = vmatpush1.msra.mxu0 0.0
    %1298 = vmatprep.subr.mxu0 0.0
    %1299 = vmatpush1.msra.mxu0 0.0
    %1300 = vmatprep.subr.mxu0 0.0
    %1301 = vmatpush1.msra.mxu0 0.0
    %1302 = vmatprep.subr.mxu0 0.0
    %1303 = vmatpush1.msra.mxu0 0.0
    %1304 = vmatprep.subr.mxu0 0.0
    %1305 = vmatpush1.msra.mxu0 0.0
    %1306 = vmatprep.subr.mxu0 0.0
    %1307 = vmatpush1.msra.mxu0 0.0
    %1308 = vmatprep.subr.mxu0 0.0
    %1309 = vmatpush1.msra.mxu0 0.0
    %1310 = vmatprep.subr.mxu0 0.0
    %1311 = vmatpush1.msra.mxu0 0.0
    %1312 = vmatprep.subr.mxu0 0.0
    %1313 = vmatpush1.msra.mxu0 0.0
    %1314 = vmatprep.subr.mxu0 0.0
    %1315 = vmatpush1.msra.mxu0 0.0
    %1316 = vmatprep.subr.mxu0 0.0
    %1317 = vmatpush1.msra.mxu0 0.0
    %1318 = vmatprep.subr.mxu0 0.0
    %1319 = vmatpush1.msra.mxu0 0.0
    %1320 = vmatprep.subr.mxu0 0.0
    %1321 = vmatpush1.msra.mxu0 0.0
    %1322 = vmatprep.subr.mxu0 0.0
    %1323 = vmatpush1.msra.mxu0 0.0
    %1324 = vmatprep.subr.mxu0 0.0
    %1325 = vmatpush1.msra.mxu0 0.0
    %1326 = vmatprep.subr.mxu0 0.0
    %1327 = vmatpush1.msra.mxu0 0.0
    %1328 = vmatprep.mubr.f32.mxu0 0.0
    %1329 = vmatmul.mubr.f32.gmra.mrb[0].mxu0 %v1122
    %v1330 = vpop.f32.mrb[0].mxu0
    %v1331 = vadd.f32 %v991, %v1330
    %v1332 = vpop.f32.mrb[0].mxu0
    %1333 = vdwg.mxu0
    %v1335 = vrot.slane %v1191, 7
    %v1338 = vadd.f32 %v235, %v1335
    %v1339 = vadd.f32 %v236, %v1191
    %v1340 = vxor.u32 %v1338, 2147483648
    %v1341 = vxor.u32 %v1339, 2147483648
    %v1342 = vmul.f32 %v1340, 1.442695
    %v1343 = vpow.pop %v1342
    %v1344 = vmul.f32 %v1341, 1.442695
    %v1345 = vpow.pop %v1344
    %v1346 = vadd.f32 %v1343, 1.0
    %v1347 = vadd.f32 %v1345, 1.0
    %v1348 = vrcp.pop %v1346
    %v1349 = vmul.f32 1.0, %v1348
    %v1350 = vrcp.pop %v1347
    %v1351 = vmul.f32 1.0, %v1350
    %v1353 = vrot.slane %v1261, 7
    %v1356 = vadd.f32 %v327, %v1353
    %v1357 = vadd.f32 %v328, %v1261
    %v1358 = vxor.u32 %v1356, 2147483648
    %v1359 = vxor.u32 %v1357, 2147483648
    %v1360 = vmul.f32 %v1358, 1.442695
    %v1361 = vpow.pop %v1360
    %v1362 = vmul.f32 %v1359, 1.442695
    %v1363 = vpow.pop %v1362
    %v1364 = vadd.f32 %v1361, 1.0
    %v1365 = vadd.f32 %v1363, 1.0
    %v1366 = vrcp.pop %v1364
    %v1367 = vmul.f32 1.0, %v1366
    %v1368 = vrcp.pop %v1365
    %v1369 = vmul.f32 1.0, %v1368
    %v1371 = vrot.slane %v1331, 7
    %v1374 = vmul.f32 %v1349, %v1371
    %v1375 = vmul.f32 %v1351, %v1331
    %v1376 = vadd.f32 %v405, %v1374
    %v1377 = vadd.f32 %v410, %v1375
    %v1378 = vtanh.pop %v1376
    %v1379 = vtanh.pop %v1377
    %v1380 = vsub.f32 1.0, %v1367
    %v1381 = vsub.f32 1.0, %v1369
    %v1382 = vmul.f32 %v1380, %v1378
    %v1383 = vmul.f32 %v1381, %v1379
    %v1384 = vrot.slane %v1115, 7
    %v1387 = vmul.f32 %v1367, %v1384
    %v1388 = vmul.f32 %v1369, %v1119
    %v1389 = vadd.f32 %v1382, %v1387
    %v1390 = vadd.f32 %v1383, %v1388
    %v1393 = vrot.slane %v1389, 1
    %v1394 = vsel %vm1120, %v1390, %v1393
    %v1395 = vsel %vm843, %v1394, 0
    %1397 = vmatprep.subr.mxu0 0.0
    %1398 = vmatpush1.msra.mxu0 %v87
    %1399 = vmatprep.subr.mxu0 0.0
    %1400 = vmatpush1.msra.mxu0 0.0
    %1401 = vmatprep.subr.mxu0 0.0
    %1402 = vmatpush1.msra.mxu0 0.0
    %1403 = vmatprep.subr.mxu0 0.0
    %1404 = vmatpush1.msra.mxu0 0.0
    %1405 = vmatprep.subr.mxu0 0.0
    %1406 = vmatpush1.msra.mxu0 0.0
    %1407 = vmatprep.subr.mxu0 0.0
    %1408 = vmatpush1.msra.mxu0 0.0
    %1409 = vmatprep.subr.mxu0 0.0
    %1410 = vmatpush1.msra.mxu0 0.0
    %1411 = vmatprep.subr.mxu0 0.0
    %1412 = vmatpush1.msra.mxu0 0.0
    %1413 = vmatprep.subr.mxu0 0.0
    %1414 = vmatpush1.msra.mxu0 0.0
    %1415 = vmatprep.subr.mxu0 0.0
    %1416 = vmatpush1.msra.mxu0 0.0
    %1417 = vmatprep.subr.mxu0 0.0
    %1418 = vmatpush1.msra.mxu0 0.0
    %1419 = vmatprep.subr.mxu0 0.0
    %1420 = vmatpush1.msra.mxu0 0.0
    %1421 = vmatprep.subr.mxu0 0.0
    %1422 = vmatpush1.msra.mxu0 0.0
    %1423 = vmatprep.subr.mxu0 0.0
    %1424 = vmatpush1.msra.mxu0 0.0
    %1425 = vmatprep.subr.mxu0 0.0
    %1426 = vmatpush1.msra.mxu0 0.0
    %1427 = vmatprep.subr.mxu0 0.0
    %1428 = vmatpush1.msra.mxu0 0.0
    %1429 = vmatprep.subr.mxu0 0.0
    %1430 = vmatpush1.msra.mxu0 0.0
    %1431 = vmatprep.subr.mxu0 0.0
    %1432 = vmatpush1.msra.mxu0 0.0
    %1433 = vmatprep.subr.mxu0 0.0
    %1434 = vmatpush1.msra.mxu0 0.0
    %1435 = vmatprep.subr.mxu0 0.0
    %1436 = vmatpush1.msra.mxu0 0.0
    %1437 = vmatprep.subr.mxu0 0.0
    %1438 = vmatpush1.msra.mxu0 0.0
    %1439 = vmatprep.subr.mxu0 0.0
    %1440 = vmatpush1.msra.mxu0 0.0
    %1441 = vmatprep.subr.mxu0 0.0
    %1442 = vmatpush1.msra.mxu0 0.0
    %1443 = vmatprep.subr.mxu0 0.0
    %1444 = vmatpush1.msra.mxu0 0.0
    %1445 = vmatprep.subr.mxu0 0.0
    %1446 = vmatpush1.msra.mxu0 0.0
    %1447 = vmatprep.subr.mxu0 0.0
    %1448 = vmatpush1.msra.mxu0 0.0
    %1449 = vmatprep.subr.mxu0 0.0
    %1450 = vmatpush1.msra.mxu0 0.0
    %1451 = vmatprep.subr.mxu0 0.0
    %1452 = vmatpush1.msra.mxu0 0.0
    %1453 = vmatprep.subr.mxu0 0.0
    %1454 = vmatpush1.msra.mxu0 0.0
    %1455 = vmatprep.subr.mxu0 0.0
    %1456 = vmatpush1.msra.mxu0 0.0
    %1457 = vmatprep.subr.mxu0 0.0
    %1458 = vmatpush1.msra.mxu0 0.0
    %1459 = vmatprep.subr.mxu0 0.0
    %1460 = vmatpush1.msra.mxu0 0.0
    %1461 = vmatprep.mubr.f32.mxu0 0.0
    %1462 = vmatmul.mubr.f32.gmra.mrb[0].mxu0 %v1395
    %v1463 = vpop.f32.mrb[0].mxu0
    %v1464 = vadd.f32 0.0, %v1463
    %v1465 = vpop.f32.mrb[0].mxu0
    %1466 = vdwg.mxu0
    %1467 = vmatprep.subr.mxu0 0.0
    %1468 = vmatpush1.msra.mxu0 %v88
    %1469 = vmatprep.subr.mxu0 0.0
    %1470 = vmatpush1.msra.mxu0 0.0
    %1471 = vmatprep.subr.mxu0 0.0
    %1472 = vmatpush1.msra.mxu0 0.0
    %1473 = vmatprep.subr.mxu0 0.0
    %1474 = vmatpush1.msra.mxu0 0.0
    %1475 = vmatprep.subr.mxu0 0.0
    %1476 = vmatpush1.msra.mxu0 0.0
    %1477 = vmatprep.subr.mxu0 0.0
    %1478 = vmatpush1.msra.mxu0 0.0
    %1479 = vmatprep.subr.mxu0 0.0
    %1480 = vmatpush1.msra.mxu0 0.0
    %1481 = vmatprep.subr.mxu0 0.0
    %1482 = vmatpush1.msra.mxu0 0.0
    %1483 = vmatprep.subr.mxu0 0.0
    %1484 = vmatpush1.msra.mxu0 0.0
    %1485 = vmatprep.subr.mxu0 0.0
    %1486 = vmatpush1.msra.mxu0 0.0
    %1487 = vmatprep.subr.mxu0 0.0
    %1488 = vmatpush1.msra.mxu0 0.0
    %1489 = vmatprep.subr.mxu0 0.0
    %1490 = vmatpush1.msra.mxu0 0.0
    %1491 = vmatprep.subr.mxu0 0.0
    %1492 = vmatpush1.msra.mxu0 0.0
    %1493 = vmatprep.subr.mxu0 0.0
    %1494 = vmatpush1.msra.mxu0 0.0
    %1495 = vmatprep.subr.mxu0 0.0
    %1496 = vmatpush1.msra.mxu0 0.0
    %1497 = vmatprep.subr.mxu0 0.0
    %1498 = vmatpush1.msra.mxu0 0.0
    %1499 = vmatprep.subr.mxu0 0.0
    %1500 = vmatpush1.msra.mxu0 0.0
    %1501 = vmatprep.subr.mxu0 0.0
    %1502 = vmatpush1.msra.mxu0 0.0
    %1503 = vmatprep.subr.mxu0 0.0
    %1504 = vmatpush1.msra.mxu0 0.0
    %1505 = vmatprep.subr.mxu0 0.0
    %1506 = vmatpush1.msra.mxu0 0.0
    %1507 = vmatprep.subr.mxu0 0.0
    %1508 = vmatpush1.msra.mxu0 0.0
    %1509 = vmatprep.subr.mxu0 0.0
    %1510 = vmatpush1.msra.mxu0 0.0
    %1511 = vmatprep.subr.mxu0 0.0
    %1512 = vmatpush1.msra.mxu0 0.0
    %1513 = vmatprep.subr.mxu0 0.0
    %1514 = vmatpush1.msra.mxu0 0.0
    %1515 = vmatprep.subr.mxu0 0.0
    %1516 = vmatpush1.msra.mxu0 0.0
    %1517 = vmatprep.subr.mxu0 0.0
    %1518 = vmatpush1.msra.mxu0 0.0
    %1519 = vmatprep.subr.mxu0 0.0
    %1520 = vmatpush1.msra.mxu0 0.0
    %1521 = vmatprep.subr.mxu0 0.0
    %1522 = vmatpush1.msra.mxu0 0.0
    %1523 = vmatprep.subr.mxu0 0.0
    %1524 = vmatpush1.msra.mxu0 0.0
    %1525 = vmatprep.subr.mxu0 0.0
    %1526 = vmatpush1.msra.mxu0 0.0
    %1527 = vmatprep.subr.mxu0 0.0
    %1528 = vmatpush1.msra.mxu0 0.0
    %1529 = vmatprep.subr.mxu0 0.0
    %1530 = vmatpush1.msra.mxu0 0.0
    %1531 = vmatprep.mubr.f32.mxu0 0.0
    %1532 = vmatmul.mubr.f32.gmra.mrb[0].mxu0 %v1395
    %v1533 = vpop.f32.mrb[0].mxu0
    %v1534 = vadd.f32 0.0, %v1533
    %v1535 = vpop.f32.mrb[0].mxu0
    %1536 = vdwg.mxu0
    %1537 = vmatprep.subr.mxu0 0.0
    %1538 = vmatpush1.msra.mxu0 %v89
    %1539 = vmatprep.subr.mxu0 0.0
    %1540 = vmatpush1.msra.mxu0 0.0
    %1541 = vmatprep.subr.mxu0 0.0
    %1542 = vmatpush1.msra.mxu0 0.0
    %1543 = vmatprep.subr.mxu0 0.0
    %1544 = vmatpush1.msra.mxu0 0.0
    %1545 = vmatprep.subr.mxu0 0.0
    %1546 = vmatpush1.msra.mxu0 0.0
    %1547 = vmatprep.subr.mxu0 0.0
    %1548 = vmatpush1.msra.mxu0 0.0
    %1549 = vmatprep.subr.mxu0 0.0
    %1550 = vmatpush1.msra.mxu0 0.0
    %1551 = vmatprep.subr.mxu0 0.0
    %1552 = vmatpush1.msra.mxu0 0.0
    %1553 = vmatprep.subr.mxu0 0.0
    %1554 = vmatpush1.msra.mxu0 0.0
    %1555 = vmatprep.subr.mxu0 0.0
    %1556 = vmatpush1.msra.mxu0 0.0
    %1557 = vmatprep.subr.mxu0 0.0
    %1558 = vmatpush1.msra.mxu0 0.0
    %1559 = vmatprep.subr.mxu0 0.0
    %1560 = vmatpush1.msra.mxu0 0.0
    %1561 = vmatprep.subr.mxu0 0.0
    %1562 = vmatpush1.msra.mxu0 0.0
    %1563 = vmatprep.subr.mxu0 0.0
    %1564 = vmatpush1.msra.mxu0 0.0
    %1565 = vmatprep.subr.mxu0 0.0
    %1566 = vmatpush1.msra.mxu0 0.0
    %1567 = vmatprep.subr.mxu0 0.0
    %1568 = vmatpush1.msra.mxu0 0.0
    %1569 = vmatprep.subr.mxu0 0.0
    %1570 = vmatpush1.msra.mxu0 0.0
    %1571 = vmatprep.subr.mxu0 0.0
    %1572 = vmatpush1.msra.mxu0 0.0
    %1573 = vmatprep.subr.mxu0 0.0
    %1574 = vmatpush1.msra.mxu0 0.0
    %1575 = vmatprep.subr.mxu0 0.0
    %1576 = vmatpush1.msra.mxu0 0.0
    %1577 = vmatprep.subr.mxu0 0.0
    %1578 = vmatpush1.msra.mxu0 0.0
    %1579 = vmatprep.subr.mxu0 0.0
    %1580 = vmatpush1.msra.mxu0 0.0
    %1581 = vmatprep.subr.mxu0 0.0
    %1582 = vmatpush1.msra.mxu0 0.0
    %1583 = vmatprep.subr.mxu0 0.0
    %1584 = vmatpush1.msra.mxu0 0.0
    %1585 = vmatprep.subr.mxu0 0.0
    %1586 = vmatpush1.msra.mxu0 0.0
    %1587 = vmatprep.subr.mxu0 0.0
    %1588 = vmatpush1.msra.mxu0 0.0
    %1589 = vmatprep.subr.mxu0 0.0
    %1590 = vmatpush1.msra.mxu0 0.0
    %1591 = vmatprep.subr.mxu0 0.0
    %1592 = vmatpush1.msra.mxu0 0.0
    %1593 = vmatprep.subr.mxu0 0.0
    %1594 = vmatpush1.msra.mxu0 0.0
    %1595 = vmatprep.subr.mxu0 0.0
    %1596 = vmatpush1.msra.mxu0 0.0
    %1597 = vmatprep.subr.mxu0 0.0
    %1598 = vmatpush1.msra.mxu0 0.0
    %1599 = vmatprep.subr.mxu0 0.0
    %1600 = vmatpush1.msra.mxu0 0.0
    %1601 = vmatprep.mubr.f32.mxu0 0.0
    %1602 = vmatmul.mubr.f32.gmra.mrb[0].mxu0 %v1395
    %v1603 = vpop.f32.mrb[0].mxu0
    %v1604 = vadd.f32 %v991, %v1603
    %v1605 = vpop.f32.mrb[0].mxu0
    %1606 = vdwg.mxu0
    %v1608 = vrot.slane %v1464, 6
    %v1609 = vrot.slane %v1464, 7
    %v1612 = vadd.f32 %v235, %v1608
    %v1613 = vadd.f32 %v236, %v1609
    %v1614 = vxor.u32 %v1612, 2147483648
    %v1615 = vxor.u32 %v1613, 2147483648
    %v1616 = vmul.f32 %v1614, 1.442695
    %v1617 = vpow.pop %v1616
    %v1618 = vmul.f32 %v1615, 1.442695
    %v1619 = vpow.pop %v1618
    %v1620 = vadd.f32 %v1617, 1.0
    %v1621 = vadd.f32 %v1619, 1.0
    %v1622 = vrcp.pop %v1620
    %v1623 = vmul.f32 1.0, %v1622
    %v1624 = vrcp.pop %v1621
    %v1625 = vmul.f32 1.0, %v1624
    %v1627 = vrot.slane %v1534, 6
    %v1628 = vrot.slane %v1534, 7
    %v1631 = vadd.f32 %v327, %v1627
    %v1632 = vadd.f32 %v328, %v1628
    %v1633 = vxor.u32 %v1631, 2147483648
    %v1634 = vxor.u32 %v1632, 2147483648
    %v1635 = vmul.f32 %v1633, 1.442695
    %v1636 = vpow.pop %v1635
    %v1637 = vmul.f32 %v1634, 1.442695
    %v1638 = vpow.pop %v1637
    %v1639 = vadd.f32 %v1636, 1.0
    %v1640 = vadd.f32 %v1638, 1.0
    %v1641 = vrcp.pop %v1639
    %v1642 = vmul.f32 1.0, %v1641
    %v1643 = vrcp.pop %v1640
    %v1644 = vmul.f32 1.0, %v1643
    %v1646 = vrot.slane %v1604, 6
    %v1647 = vrot.slane %v1604, 7
    %v1650 = vmul.f32 %v1623, %v1646
    %v1651 = vmul.f32 %v1625, %v1647
    %v1652 = vadd.f32 %v405, %v1650
    %v1653 = vadd.f32 %v410, %v1651
    %v1654 = vtanh.pop %v1652
    %v1655 = vtanh.pop %v1653
    %v1656 = vsub.f32 1.0, %v1642
    %v1657 = vsub.f32 1.0, %v1644
    %v1658 = vmul.f32 %v1656, %v1654
    %v1659 = vmul.f32 %v1657, %v1655
    %v1660 = vrot.slane %v1389, 7
    %v1661 = vrot.slane %v1390, 7
    %v1664 = vmul.f32 %v1642, %v1660
    %v1665 = vmul.f32 %v1644, %v1661
    %v1666 = vadd.f32 %v1658, %v1664
    %v1667 = vadd.f32 %v1659, %v1665
    %v1670 = vrot.slane %v1666, 2
    %v1671 = vrot.slane %v1667, 1
    %v1672 = vsel %vm1120, %v1671, %v1670
    %v1673 = vsel %vm843, %v1672, 0
    %1675 = vmatprep.subr.mxu0 0.0
    %1676 = vmatpush1.msra.mxu0 %v87
    %1677 = vmatprep.subr.mxu0 0.0
    %1678 = vmatpush1.msra.mxu0 0.0
    %1679 = vmatprep.subr.mxu0 0.0
    %1680 = vmatpush1.msra.mxu0 0.0
    %1681 = vmatprep.subr.mxu0 0.0
    %1682 = vmatpush1.msra.mxu0 0.0
    %1683 = vmatprep.subr.mxu0 0.0
    %1684 = vmatpush1.msra.mxu0 0.0
    %1685 = vmatprep.subr.mxu0 0.0
    %1686 = vmatpush1.msra.mxu0 0.0
    %1687 = vmatprep.subr.mxu0 0.0
    %1688 = vmatpush1.msra.mxu0 0.0
    %1689 = vmatprep.subr.mxu0 0.0
    %1690 = vmatpush1.msra.mxu0 0.0
    %1691 = vmatprep.subr.mxu0 0.0
    %1692 = vmatpush1.msra.mxu0 0.0
    %1693 = vmatprep.subr.mxu0 0.0
    %1694 = vmatpush1.msra.mxu0 0.0
    %1695 = vmatprep.subr.mxu0 0.0
    %1696 = vmatpush1.msra.mxu0 0.0
    %1697 = vmatprep.subr.mxu0 0.0
    %1698 = vmatpush1.msra.mxu0 0.0
    %1699 = vmatprep.subr.mxu0 0.0
    %1700 = vmatpush1.msra.mxu0 0.0
    %1701 = vmatprep.subr.mxu0 0.0
    %1702 = vmatpush1.msra.mxu0 0.0
    %1703 = vmatprep.subr.mxu0 0.0
    %1704 = vmatpush1.msra.mxu0 0.0
    %1705 = vmatprep.subr.mxu0 0.0
    %1706 = vmatpush1.msra.mxu0 0.0
    %1707 = vmatprep.subr.mxu0 0.0
    %1708 = vmatpush1.msra.mxu0 0.0
    %1709 = vmatprep.subr.mxu0 0.0
    %1710 = vmatpush1.msra.mxu0 0.0
    %1711 = vmatprep.subr.mxu0 0.0
    %1712 = vmatpush1.msra.mxu0 0.0
    %1713 = vmatprep.subr.mxu0 0.0
    %1714 = vmatpush1.msra.mxu0 0.0
    %1715 = vmatprep.subr.mxu0 0.0
    %1716 = vmatpush1.msra.mxu0 0.0
    %1717 = vmatprep.subr.mxu0 0.0
    %1718 = vmatpush1.msra.mxu0 0.0
    %1719 = vmatprep.subr.mxu0 0.0
    %1720 = vmatpush1.msra.mxu0 0.0
    %1721 = vmatprep.subr.mxu0 0.0
    %1722 = vmatpush1.msra.mxu0 0.0
    %1723 = vmatprep.subr.mxu0 0.0
    %1724 = vmatpush1.msra.mxu0 0.0
    %1725 = vmatprep.subr.mxu0 0.0
    %1726 = vmatpush1.msra.mxu0 0.0
    %1727 = vmatprep.subr.mxu0 0.0
    %1728 = vmatpush1.msra.mxu0 0.0
    %1729 = vmatprep.subr.mxu0 0.0
    %1730 = vmatpush1.msra.mxu0 0.0
    %1731 = vmatprep.subr.mxu0 0.0
    %1732 = vmatpush1.msra.mxu0 0.0
    %1733 = vmatprep.subr.mxu0 0.0
    %1734 = vmatpush1.msra.mxu0 0.0
    %1735 = vmatprep.subr.mxu0 0.0
    %1736 = vmatpush1.msra.mxu0 0.0
    %1737 = vmatprep.subr.mxu0 0.0
    %1738 = vmatpush1.msra.mxu0 0.0
    %1739 = vmatprep.mubr.f32.mxu0 0.0
    %1740 = vmatmul.mubr.f32.gmra.mrb[0].mxu0 %v1673
    %v1741 = vpop.f32.mrb[0].mxu0
    %v1742 = vadd.f32 0.0, %v1741
    %v1743 = vpop.f32.mrb[0].mxu0
    %1744 = vdwg.mxu0
    %1745 = vmatprep.subr.mxu0 0.0
    %1746 = vmatpush1.msra.mxu0 %v88
    %1747 = vmatprep.subr.mxu0 0.0
    %1748 = vmatpush1.msra.mxu0 0.0
    %1749 = vmatprep.subr.mxu0 0.0
    %1750 = vmatpush1.msra.mxu0 0.0
    %1751 = vmatprep.subr.mxu0 0.0
    %1752 = vmatpush1.msra.mxu0 0.0
    %1753 = vmatprep.subr.mxu0 0.0
    %1754 = vmatpush1.msra.mxu0 0.0
    %1755 = vmatprep.subr.mxu0 0.0
    %1756 = vmatpush1.msra.mxu0 0.0
    %1757 = vmatprep.subr.mxu0 0.0
    %1758 = vmatpush1.msra.mxu0 0.0
    %1759 = vmatprep.subr.mxu0 0.0
    %1760 = vmatpush1.msra.mxu0 0.0
    %1761 = vmatprep.subr.mxu0 0.0
    %1762 = vmatpush1.msra.mxu0 0.0
    %1763 = vmatprep.subr.mxu0 0.0
    %1764 = vmatpush1.msra.mxu0 0.0
    %1765 = vmatprep.subr.mxu0 0.0
    %1766 = vmatpush1.msra.mxu0 0.0
    %1767 = vmatprep.subr.mxu0 0.0
    %1768 = vmatpush1.msra.mxu0 0.0
    %1769 = vmatprep.subr.mxu0 0.0
    %1770 = vmatpush1.msra.mxu0 0.0
    %1771 = vmatprep.subr.mxu0 0.0
    %1772 = vmatpush1.msra.mxu0 0.0
    %1773 = vmatprep.subr.mxu0 0.0
    %1774 = vmatpush1.msra.mxu0 0.0
    %1775 = vmatprep.subr.mxu0 0.0
    %1776 = vmatpush1.msra.mxu0 0.0
    %1777 = vmatprep.subr.mxu0 0.0
    %1778 = vmatpush1.msra.mxu0 0.0
    %1779 = vmatprep.subr.mxu0 0.0
    %1780 = vmatpush1.msra.mxu0 0.0
    %1781 = vmatprep.subr.mxu0 0.0
    %1782 = vmatpush1.msra.mxu0 0.0
    %1783 = vmatprep.subr.mxu0 0.0
    %1784 = vmatpush1.msra.mxu0 0.0
    %1785 = vmatprep.subr.mxu0 0.0
    %1786 = vmatpush1.msra.mxu0 0.0
    %1787 = vmatprep.subr.mxu0 0.0
    %1788 = vmatpush1.msra.mxu0 0.0
    %1789 = vmatprep.subr.mxu0 0.0
    %1790 = vmatpush1.msra.mxu0 0.0
    %1791 = vmatprep.subr.mxu0 0.0
    %1792 = vmatpush1.msra.mxu0 0.0
    %1793 = vmatprep.subr.mxu0 0.0
    %1794 = vmatpush1.msra.mxu0 0.0
    %1795 = vmatprep.subr.mxu0 0.0
    %1796 = vmatpush1.msra.mxu0 0.0
    %1797 = vmatprep.subr.mxu0 0.0
    %1798 = vmatpush1.msra.mxu0 0.0
    %1799 = vmatprep.subr.mxu0 0.0
    %1800 = vmatpush1.msra.mxu0 0.0
    %1801 = vmatprep.subr.mxu0 0.0
    %1802 = vmatpush1.msra.mxu0 0.0
    %1803 = vmatprep.subr.mxu0 0.0
    %1804 = vmatpush1.msra.mxu0 0.0
    %1805 = vmatprep.subr.mxu0 0.0
    %1806 = vmatpush1.msra.mxu0 0.0
    %1807 = vmatprep.subr.mxu0 0.0
    %1808 = vmatpush1.msra.mxu0 0.0
    %1809 = vmatprep.mubr.f32.mxu0 0.0
    %1810 = vmatmul.mubr.f32.gmra.mrb[0].mxu0 %v1673
    %v1811 = vpop.f32.mrb[0].mxu0
    %v1812 = vadd.f32 0.0, %v1811
    %v1813 = vpop.f32.mrb[0].mxu0
    %1814 = vdwg.mxu0
    %1815 = vmatprep.subr.mxu0 0.0
    %1816 = vmatpush1.msra.mxu0 %v89
    %1817 = vmatprep.subr.mxu0 0.0
    %1818 = vmatpush1.msra.mxu0 0.0
    %1819 = vmatprep.subr.mxu0 0.0
    %1820 = vmatpush1.msra.mxu0 0.0
    %1821 = vmatprep.subr.mxu0 0.0
    %1822 = vmatpush1.msra.mxu0 0.0
    %1823 = vmatprep.subr.mxu0 0.0
    %1824 = vmatpush1.msra.mxu0 0.0
    %1825 = vmatprep.subr.mxu0 0.0
    %1826 = vmatpush1.msra.mxu0 0.0
    %1827 = vmatprep.subr.mxu0 0.0
    %1828 = vmatpush1.msra.mxu0 0.0
    %1829 = vmatprep.subr.mxu0 0.0
    %1830 = vmatpush1.msra.mxu0 0.0
    %1831 = vmatprep.subr.mxu0 0.0
    %1832 = vmatpush1.msra.mxu0 0.0
    %1833 = vmatprep.subr.mxu0 0.0
    %1834 = vmatpush1.msra.mxu0 0.0
    %1835 = vmatprep.subr.mxu0 0.0
    %1836 = vmatpush1.msra.mxu0 0.0
    %1837 = vmatprep.subr.mxu0 0.0
    %1838 = vmatpush1.msra.mxu0 0.0
    %1839 = vmatprep.subr.mxu0 0.0
    %1840 = vmatpush1.msra.mxu0 0.0
    %1841 = vmatprep.subr.mxu0 0.0
    %1842 = vmatpush1.msra.mxu0 0.0
    %1843 = vmatprep.subr.mxu0 0.0
    %1844 = vmatpush1.msra.mxu0 0.0
    %1845 = vmatprep.subr.mxu0 0.0
    %1846 = vmatpush1.msra.mxu0 0.0
    %1847 = vmatprep.subr.mxu0 0.0
    %1848 = vmatpush1.msra.mxu0 0.0
    %1849 = vmatprep.subr.mxu0 0.0
    %1850 = vmatpush1.msra.mxu0 0.0
    %1851 = vmatprep.subr.mxu0 0.0
    %1852 = vmatpush1.msra.mxu0 0.0
    %1853 = vmatprep.subr.mxu0 0.0
    %1854 = vmatpush1.msra.mxu0 0.0
    %1855 = vmatprep.subr.mxu0 0.0
    %1856 = vmatpush1.msra.mxu0 0.0
    %1857 = vmatprep.subr.mxu0 0.0
    %1858 = vmatpush1.msra.mxu0 0.0
    %1859 = vmatprep.subr.mxu0 0.0
    %1860 = vmatpush1.msra.mxu0 0.0
    %1861 = vmatprep.subr.mxu0 0.0
    %1862 = vmatpush1.msra.mxu0 0.0
    %1863 = vmatprep.subr.mxu0 0.0
    %1864 = vmatpush1.msra.mxu0 0.0
    %1865 = vmatprep.subr.mxu0 0.0
    %1866 = vmatpush1.msra.mxu0 0.0
    %1867 = vmatprep.subr.mxu0 0.0
    %1868 = vmatpush1.msra.mxu0 0.0
    %1869 = vmatprep.subr.mxu0 0.0
    %1870 = vmatpush1.msra.mxu0 0.0
    %1871 = vmatprep.subr.mxu0 0.0
    %1872 = vmatpush1.msra.mxu0 0.0
    %1873 = vmatprep.subr.mxu0 0.0
    %1874 = vmatpush1.msra.mxu0 0.0
    %1875 = vmatprep.subr.mxu0 0.0
    %1876 = vmatpush1.msra.mxu0 0.0
    %1877 = vmatprep.subr.mxu0 0.0
    %1878 = vmatpush1.msra.mxu0 0.0
    %1879 = vmatprep.mubr.f32.mxu0 0.0
    %1880 = vmatmul.mubr.f32.gmra.mrb[0].mxu0 %v1673
    %v1881 = vpop.f32.mrb[0].mxu0
    %v1882 = vadd.f32 %v991, %v1881
    %v1883 = vpop.f32.mrb[0].mxu0
    %1884 = vdwg.mxu0
    %v1886 = vrot.slane %v1742, 5
    %v1887 = vrot.slane %v1742, 6
    %v1890 = vadd.f32 %v235, %v1886
    %v1891 = vadd.f32 %v236, %v1887
    %v1892 = vxor.u32 %v1890, 2147483648
    %v1893 = vxor.u32 %v1891, 2147483648
    %v1894 = vmul.f32 %v1892, 1.442695
    %v1895 = vpow.pop %v1894
    %v1896 = vmul.f32 %v1893, 1.442695
    %v1897 = vpow.pop %v1896
    %v1898 = vadd.f32 %v1895, 1.0
    %v1899 = vadd.f32 %v1897, 1.0
    %v1900 = vrcp.pop %v1898
    %v1901 = vmul.f32 1.0, %v1900
    %v1902 = vrcp.pop %v1899
    %v1903 = vmul.f32 1.0, %v1902
    %v1905 = vrot.slane %v1812, 5
    %v1906 = vrot.slane %v1812, 6
    %v1909 = vadd.f32 %v327, %v1905
    %v1910 = vadd.f32 %v328, %v1906
    %v1911 = vxor.u32 %v1909, 2147483648
    %v1912 = vxor.u32 %v1910, 2147483648
    %v1913 = vmul.f32 %v1911, 1.442695
    %v1914 = vpow.pop %v1913
    %v1915 = vmul.f32 %v1912, 1.442695
    %v1916 = vpow.pop %v1915
    %v1917 = vadd.f32 %v1914, 1.0
    %v1918 = vadd.f32 %v1916, 1.0
    %v1919 = vrcp.pop %v1917
    %v1920 = vmul.f32 1.0, %v1919
    %v1921 = vrcp.pop %v1918
    %v1922 = vmul.f32 1.0, %v1921
    %v1924 = vrot.slane %v1882, 5
    %v1925 = vrot.slane %v1882, 6
    %v1928 = vmul.f32 %v1901, %v1924
    %v1929 = vmul.f32 %v1903, %v1925
    %v1930 = vadd.f32 %v405, %v1928
    %v1931 = vadd.f32 %v410, %v1929
    %v1932 = vtanh.pop %v1930
    %v1933 = vtanh.pop %v1931
    %v1934 = vsub.f32 1.0, %v1920
    %v1935 = vsub.f32 1.0, %v1922
    %v1936 = vmul.f32 %v1934, %v1932
    %v1937 = vmul.f32 %v1935, %v1933
    %v1938 = vrot.slane %v1666, 7
    %v1939 = vrot.slane %v1667, 7
    %v1942 = vmul.f32 %v1920, %v1938
    %v1943 = vmul.f32 %v1922, %v1939
    %v1944 = vadd.f32 %v1936, %v1942
    %v1945 = vadd.f32 %v1937, %v1943
    %v1948 = vrot.slane %v1944, 3
    %v1949 = vrot.slane %v1945, 2
    %v1950 = vsel %vm1120, %v1949, %v1948
    %v1951 = vsel %vm843, %v1950, 0
    %1953 = vmatprep.subr.mxu0 0.0
    %1954 = vmatpush1.msra.mxu0 %v87
    %1955 = vmatprep.subr.mxu0 0.0
    %1956 = vmatpush1.msra.mxu0 0.0
    %1957 = vmatprep.subr.mxu0 0.0
    %1958 = vmatpush1.msra.mxu0 0.0
    %1959 = vmatprep.subr.mxu0 0.0
    %1960 = vmatpush1.msra.mxu0 0.0
    %1961 = vmatprep.subr.mxu0 0.0
    %1962 = vmatpush1.msra.mxu0 0.0
    %1963 = vmatprep.subr.mxu0 0.0
    %1964 = vmatpush1.msra.mxu0 0.0
    %1965 = vmatprep.subr.mxu0 0.0
    %1966 = vmatpush1.msra.mxu0 0.0
    %1967 = vmatprep.subr.mxu0 0.0
    %1968 = vmatpush1.msra.mxu0 0.0
    %1969 = vmatprep.subr.mxu0 0.0
    %1970 = vmatpush1.msra.mxu0 0.0
    %1971 = vmatprep.subr.mxu0 0.0
    %1972 = vmatpush1.msra.mxu0 0.0
    %1973 = vmatprep.subr.mxu0 0.0
    %1974 = vmatpush1.msra.mxu0 0.0
    %1975 = vmatprep.subr.mxu0 0.0
    %1976 = vmatpush1.msra.mxu0 0.0
    %1977 = vmatprep.subr.mxu0 0.0
    %1978 = vmatpush1.msra.mxu0 0.0
    %1979 = vmatprep.subr.mxu0 0.0
    %1980 = vmatpush1.msra.mxu0 0.0
    %1981 = vmatprep.subr.mxu0 0.0
    %1982 = vmatpush1.msra.mxu0 0.0
    %1983 = vmatprep.subr.mxu0 0.0
    %1984 = vmatpush1.msra.mxu0 0.0
    %1985 = vmatprep.subr.mxu0 0.0
    %1986 = vmatpush1.msra.mxu0 0.0
    %1987 = vmatprep.subr.mxu0 0.0
    %1988 = vmatpush1.msra.mxu0 0.0
    %1989 = vmatprep.subr.mxu0 0.0
    %1990 = vmatpush1.msra.mxu0 0.0
    %1991 = vmatprep.subr.mxu0 0.0
    %1992 = vmatpush1.msra.mxu0 0.0
    %1993 = vmatprep.subr.mxu0 0.0
    %1994 = vmatpush1.msra.mxu0 0.0
    %1995 = vmatprep.subr.mxu0 0.0
    %1996 = vmatpush1.msra.mxu0 0.0
    %1997 = vmatprep.subr.mxu0 0.0
    %1998 = vmatpush1.msra.mxu0 0.0
    %1999 = vmatprep.subr.mxu0 0.0
    %2000 = vmatpush1.msra.mxu0 0.0
    %2001 = vmatprep.subr.mxu0 0.0
    %2002 = vmatpush1.msra.mxu0 0.0
    %2003 = vmatprep.subr.mxu0 0.0
    %2004 = vmatpush1.msra.mxu0 0.0
    %2005 = vmatprep.subr.mxu0 0.0
    %2006 = vmatpush1.msra.mxu0 0.0
    %2007 = vmatprep.subr.mxu0 0.0
    %2008 = vmatpush1.msra.mxu0 0.0
    %2009 = vmatprep.subr.mxu0 0.0
    %2010 = vmatpush1.msra.mxu0 0.0
    %2011 = vmatprep.subr.mxu0 0.0
    %2012 = vmatpush1.msra.mxu0 0.0
    %2013 = vmatprep.subr.mxu0 0.0
    %2014 = vmatpush1.msra.mxu0 0.0
    %2015 = vmatprep.subr.mxu0 0.0
    %2016 = vmatpush1.msra.mxu0 0.0
    %2017 = vmatprep.mubr.f32.mxu0 0.0
    %2018 = vmatmul.mubr.f32.gmra.mrb[0].mxu0 %v1951
    %v2019 = vpop.f32.mrb[0].mxu0
    %v2020 = vadd.f32 0.0, %v2019
    %v2021 = vpop.f32.mrb[0].mxu0
    %2022 = vdwg.mxu0
    %2023 = vmatprep.subr.mxu0 0.0
    %2024 = vmatpush1.msra.mxu0 %v88
    %2025 = vmatprep.subr.mxu0 0.0
    %2026 = vmatpush1.msra.mxu0 0.0
    %2027 = vmatprep.subr.mxu0 0.0
    %2028 = vmatpush1.msra.mxu0 0.0
    %2029 = vmatprep.subr.mxu0 0.0
    %2030 = vmatpush1.msra.mxu0 0.0
    %2031 = vmatprep.subr.mxu0 0.0
    %2032 = vmatpush1.msra.mxu0 0.0
    %2033 = vmatprep.subr.mxu0 0.0
    %2034 = vmatpush1.msra.mxu0 0.0
    %2035 = vmatprep.subr.mxu0 0.0
    %2036 = vmatpush1.msra.mxu0 0.0
    %2037 = vmatprep.subr.mxu0 0.0
    %2038 = vmatpush1.msra.mxu0 0.0
    %2039 = vmatprep.subr.mxu0 0.0
    %2040 = vmatpush1.msra.mxu0 0.0
    %2041 = vmatprep.subr.mxu0 0.0
    %2042 = vmatpush1.msra.mxu0 0.0
    %2043 = vmatprep.subr.mxu0 0.0
    %2044 = vmatpush1.msra.mxu0 0.0
    %2045 = vmatprep.subr.mxu0 0.0
    %2046 = vmatpush1.msra.mxu0 0.0
    %2047 = vmatprep.subr.mxu0 0.0
    %2048 = vmatpush1.msra.mxu0 0.0
    %2049 = vmatprep.subr.mxu0 0.0
    %2050 = vmatpush1.msra.mxu0 0.0
    %2051 = vmatprep.subr.mxu0 0.0
    %2052 = vmatpush1.msra.mxu0 0.0
    %2053 = vmatprep.subr.mxu0 0.0
    %2054 = vmatpush1.msra.mxu0 0.0
    %2055 = vmatprep.subr.mxu0 0.0
    %2056 = vmatpush1.msra.mxu0 0.0
    %2057 = vmatprep.subr.mxu0 0.0
    %2058 = vmatpush1.msra.mxu0 0.0
    %2059 = vmatprep.subr.mxu0 0.0
    %2060 = vmatpush1.msra.mxu0 0.0
    %2061 = vmatprep.subr.mxu0 0.0
    %2062 = vmatpush1.msra.mxu0 0.0
    %2063 = vmatprep.subr.mxu0 0.0
    %2064 = vmatpush1.msra.mxu0 0.0
    %2065 = vmatprep.subr.mxu0 0.0
    %2066 = vmatpush1.msra.mxu0 0.0
    %2067 = vmatprep.subr.mxu0 0.0
    %2068 = vmatpush1.msra.mxu0 0.0
    %2069 = vmatprep.subr.mxu0 0.0
    %2070 = vmatpush1.msra.mxu0 0.0
    %2071 = vmatprep.subr.mxu0 0.0
    %2072 = vmatpush1.msra.mxu0 0.0
    %2073 = vmatprep.subr.mxu0 0.0
    %2074 = vmatpush1.msra.mxu0 0.0
    %2075 = vmatprep.subr.mxu0 0.0
    %2076 = vmatpush1.msra.mxu0 0.0
    %2077 = vmatprep.subr.mxu0 0.0
    %2078 = vmatpush1.msra.mxu0 0.0
    %2079 = vmatprep.subr.mxu0 0.0
    %2080 = vmatpush1.msra.mxu0 0.0
    %2081 = vmatprep.subr.mxu0 0.0
    %2082 = vmatpush1.msra.mxu0 0.0
    %2083 = vmatprep.subr.mxu0 0.0
    %2084 = vmatpush1.msra.mxu0 0.0
    %2085 = vmatprep.subr.mxu0 0.0
    %2086 = vmatpush1.msra.mxu0 0.0
    %2087 = vmatprep.mubr.f32.mxu0 0.0
    %2088 = vmatmul.mubr.f32.gmra.mrb[0].mxu0 %v1951
    %v2089 = vpop.f32.mrb[0].mxu0
    %v2090 = vadd.f32 0.0, %v2089
    %v2091 = vpop.f32.mrb[0].mxu0
    %2092 = vdwg.mxu0
    %2093 = vmatprep.subr.mxu0 0.0
    %2094 = vmatpush1.msra.mxu0 %v89
    %2095 = vmatprep.subr.mxu0 0.0
    %2096 = vmatpush1.msra.mxu0 0.0
    %2097 = vmatprep.subr.mxu0 0.0
    %2098 = vmatpush1.msra.mxu0 0.0
    %2099 = vmatprep.subr.mxu0 0.0
    %2100 = vmatpush1.msra.mxu0 0.0
    %2101 = vmatprep.subr.mxu0 0.0
    %2102 = vmatpush1.msra.mxu0 0.0
    %2103 = vmatprep.subr.mxu0 0.0
    %2104 = vmatpush1.msra.mxu0 0.0
    %2105 = vmatprep.subr.mxu0 0.0
    %2106 = vmatpush1.msra.mxu0 0.0
    %2107 = vmatprep.subr.mxu0 0.0
    %2108 = vmatpush1.msra.mxu0 0.0
    %2109 = vmatprep.subr.mxu0 0.0
    %2110 = vmatpush1.msra.mxu0 0.0
    %2111 = vmatprep.subr.mxu0 0.0
    %2112 = vmatpush1.msra.mxu0 0.0
    %2113 = vmatprep.subr.mxu0 0.0
    %2114 = vmatpush1.msra.mxu0 0.0
    %2115 = vmatprep.subr.mxu0 0.0
    %2116 = vmatpush1.msra.mxu0 0.0
    %2117 = vmatprep.subr.mxu0 0.0
    %2118 = vmatpush1.msra.mxu0 0.0
    %2119 = vmatprep.subr.mxu0 0.0
    %2120 = vmatpush1.msra.mxu0 0.0
    %2121 = vmatprep.subr.mxu0 0.0
    %2122 = vmatpush1.msra.mxu0 0.0
    %2123 = vmatprep.subr.mxu0 0.0
    %2124 = vmatpush1.msra.mxu0 0.0
    %2125 = vmatprep.subr.mxu0 0.0
    %2126 = vmatpush1.msra.mxu0 0.0
    %2127 = vmatprep.subr.mxu0 0.0
    %2128 = vmatpush1.msra.mxu0 0.0
    %2129 = vmatprep.subr.mxu0 0.0
    %2130 = vmatpush1.msra.mxu0 0.0
    %2131 = vmatprep.subr.mxu0 0.0
    %2132 = vmatpush1.msra.mxu0 0.0
    %2133 = vmatprep.subr.mxu0 0.0
    %2134 = vmatpush1.msra.mxu0 0.0
    %2135 = vmatprep.subr.mxu0 0.0
    %2136 = vmatpush1.msra.mxu0 0.0
    %2137 = vmatprep.subr.mxu0 0.0
    %2138 = vmatpush1.msra.mxu0 0.0
    %2139 = vmatprep.subr.mxu0 0.0
    %2140 = vmatpush1.msra.mxu0 0.0
    %2141 = vmatprep.subr.mxu0 0.0
    %2142 = vmatpush1.msra.mxu0 0.0
    %2143 = vmatprep.subr.mxu0 0.0
    %2144 = vmatpush1.msra.mxu0 0.0
    %2145 = vmatprep.subr.mxu0 0.0
    %2146 = vmatpush1.msra.mxu0 0.0
    %2147 = vmatprep.subr.mxu0 0.0
    %2148 = vmatpush1.msra.mxu0 0.0
    %2149 = vmatprep.subr.mxu0 0.0
    %2150 = vmatpush1.msra.mxu0 0.0
    %2151 = vmatprep.subr.mxu0 0.0
    %2152 = vmatpush1.msra.mxu0 0.0
    %2153 = vmatprep.subr.mxu0 0.0
    %2154 = vmatpush1.msra.mxu0 0.0
    %2155 = vmatprep.subr.mxu0 0.0
    %2156 = vmatpush1.msra.mxu0 0.0
    %2157 = vmatprep.mubr.f32.mxu0 0.0
    %2158 = vmatmul.mubr.f32.gmra.mrb[0].mxu0 %v1951
    %v2159 = vpop.f32.mrb[0].mxu0
    %v2160 = vadd.f32 %v991, %v2159
    %v2161 = vpop.f32.mrb[0].mxu0
    %2162 = vdwg.mxu0
    %v2164 = vrot.slane %v2020, 4
    %v2165 = vrot.slane %v2020, 5
    %v2168 = vadd.f32 %v235, %v2164
    %v2169 = vadd.f32 %v236, %v2165
    %v2170 = vxor.u32 %v2168, 2147483648
    %v2171 = vxor.u32 %v2169, 2147483648
    %v2172 = vmul.f32 %v2170, 1.442695
    %v2173 = vpow.pop %v2172
    %v2174 = vmul.f32 %v2171, 1.442695
    %v2175 = vpow.pop %v2174
    %v2176 = vadd.f32 %v2173, 1.0
    %v2177 = vadd.f32 %v2175, 1.0
    %v2178 = vrcp.pop %v2176
    %v2179 = vmul.f32 1.0, %v2178
    %v2180 = vrcp.pop %v2177
    %v2181 = vmul.f32 1.0, %v2180
    %v2183 = vrot.slane %v2090, 4
    %v2184 = vrot.slane %v2090, 5
    %v2187 = vadd.f32 %v327, %v2183
    %v2188 = vadd.f32 %v328, %v2184
    %v2189 = vxor.u32 %v2187, 2147483648
    %v2190 = vxor.u32 %v2188, 2147483648
    %v2191 = vmul.f32 %v2189, 1.442695
    %v2192 = vpow.pop %v2191
    %v2193 = vmul.f32 %v2190, 1.442695
    %v2194 = vpow.pop %v2193
    %v2195 = vadd.f32 %v2192, 1.0
    %v2196 = vadd.f32 %v2194, 1.0
    %v2197 = vrcp.pop %v2195
    %v2198 = vmul.f32 1.0, %v2197
    %v2199 = vrcp.pop %v2196
    %v2200 = vmul.f32 1.0, %v2199
    %v2202 = vrot.slane %v2160, 4
    %v2203 = vrot.slane %v2160, 5
    %v2206 = vmul.f32 %v2179, %v2202
    %v2207 = vmul.f32 %v2181, %v2203
    %v2208 = vadd.f32 %v405, %v2206
    %v2209 = vadd.f32 %v410, %v2207
    %v2210 = vtanh.pop %v2208
    %v2211 = vtanh.pop %v2209
    %v2212 = vsub.f32 1.0, %v2198
    %v2213 = vsub.f32 1.0, %v2200
    %v2214 = vmul.f32 %v2212, %v2210
    %v2215 = vmul.f32 %v2213, %v2211
    %v2216 = vrot.slane %v1944, 7
    %v2217 = vrot.slane %v1945, 7
    %v2220 = vmul.f32 %v2198, %v2216
    %v2221 = vmul.f32 %v2200, %v2217
    %v2222 = vadd.f32 %v2214, %v2220
    %v2223 = vadd.f32 %v2215, %v2221
    %v2226 = vrot.slane %v2222, 4
    %v2227 = vrot.slane %v2223, 3
    %v2228 = vsel %vm1120, %v2227, %v2226
    %v2229 = vsel %vm843, %v2228, 0
    %2231 = vmatprep.subr.mxu0 0.0
    %2232 = vmatpush1.msra.mxu0 %v87
    %2233 = vmatprep.subr.mxu0 0.0
    %2234 = vmatpush1.msra.mxu0 0.0
    %2235 = vmatprep.subr.mxu0 0.0
    %2236 = vmatpush1.msra.mxu0 0.0
    %2237 = vmatprep.subr.mxu0 0.0
    %2238 = vmatpush1.msra.mxu0 0.0
    %2239 = vmatprep.subr.mxu0 0.0
    %2240 = vmatpush1.msra.mxu0 0.0
    %2241 = vmatprep.subr.mxu0 0.0
    %2242 = vmatpush1.msra.mxu0 0.0
    %2243 = vmatprep.subr.mxu0 0.0
    %2244 = vmatpush1.msra.mxu0 0.0
    %2245 = vmatprep.subr.mxu0 0.0
    %2246 = vmatpush1.msra.mxu0 0.0
    %2247 = vmatprep.subr.mxu0 0.0
    %2248 = vmatpush1.msra.mxu0 0.0
    %2249 = vmatprep.subr.mxu0 0.0
    %2250 = vmatpush1.msra.mxu0 0.0
    %2251 = vmatprep.subr.mxu0 0.0
    %2252 = vmatpush1.msra.mxu0 0.0
    %2253 = vmatprep.subr.mxu0 0.0
    %2254 = vmatpush1.msra.mxu0 0.0
    %2255 = vmatprep.subr.mxu0 0.0
    %2256 = vmatpush1.msra.mxu0 0.0
    %2257 = vmatprep.subr.mxu0 0.0
    %2258 = vmatpush1.msra.mxu0 0.0
    %2259 = vmatprep.subr.mxu0 0.0
    %2260 = vmatpush1.msra.mxu0 0.0
    %2261 = vmatprep.subr.mxu0 0.0
    %2262 = vmatpush1.msra.mxu0 0.0
    %2263 = vmatprep.subr.mxu0 0.0
    %2264 = vmatpush1.msra.mxu0 0.0
    %2265 = vmatprep.subr.mxu0 0.0
    %2266 = vmatpush1.msra.mxu0 0.0
    %2267 = vmatprep.subr.mxu0 0.0
    %2268 = vmatpush1.msra.mxu0 0.0
    %2269 = vmatprep.subr.mxu0 0.0
    %2270 = vmatpush1.msra.mxu0 0.0
    %2271 = vmatprep.subr.mxu0 0.0
    %2272 = vmatpush1.msra.mxu0 0.0
    %2273 = vmatprep.subr.mxu0 0.0
    %2274 = vmatpush1.msra.mxu0 0.0
    %2275 = vmatprep.subr.mxu0 0.0
    %2276 = vmatpush1.msra.mxu0 0.0
    %2277 = vmatprep.subr.mxu0 0.0
    %2278 = vmatpush1.msra.mxu0 0.0
    %2279 = vmatprep.subr.mxu0 0.0
    %2280 = vmatpush1.msra.mxu0 0.0
    %2281 = vmatprep.subr.mxu0 0.0
    %2282 = vmatpush1.msra.mxu0 0.0
    %2283 = vmatprep.subr.mxu0 0.0
    %2284 = vmatpush1.msra.mxu0 0.0
    %2285 = vmatprep.subr.mxu0 0.0
    %2286 = vmatpush1.msra.mxu0 0.0
    %2287 = vmatprep.subr.mxu0 0.0
    %2288 = vmatpush1.msra.mxu0 0.0
    %2289 = vmatprep.subr.mxu0 0.0
    %2290 = vmatpush1.msra.mxu0 0.0
    %2291 = vmatprep.subr.mxu0 0.0
    %2292 = vmatpush1.msra.mxu0 0.0
    %2293 = vmatprep.subr.mxu0 0.0
    %2294 = vmatpush1.msra.mxu0 0.0
    %2295 = vmatprep.mubr.f32.mxu0 0.0
    %2296 = vmatmul.mubr.f32.gmra.mrb[0].mxu0 %v2229
    %v2297 = vpop.f32.mrb[0].mxu0
    %v2298 = vadd.f32 0.0, %v2297
    %v2299 = vpop.f32.mrb[0].mxu0
    %2300 = vdwg.mxu0
    %2301 = vmatprep.subr.mxu0 0.0
    %2302 = vmatpush1.msra.mxu0 %v88
    %2303 = vmatprep.subr.mxu0 0.0
    %2304 = vmatpush1.msra.mxu0 0.0
    %2305 = vmatprep.subr.mxu0 0.0
    %2306 = vmatpush1.msra.mxu0 0.0
    %2307 = vmatprep.subr.mxu0 0.0
    %2308 = vmatpush1.msra.mxu0 0.0
    %2309 = vmatprep.subr.mxu0 0.0
    %2310 = vmatpush1.msra.mxu0 0.0
    %2311 = vmatprep.subr.mxu0 0.0
    %2312 = vmatpush1.msra.mxu0 0.0
    %2313 = vmatprep.subr.mxu0 0.0
    %2314 = vmatpush1.msra.mxu0 0.0
    %2315 = vmatprep.subr.mxu0 0.0
    %2316 = vmatpush1.msra.mxu0 0.0
    %2317 = vmatprep.subr.mxu0 0.0
    %2318 = vmatpush1.msra.mxu0 0.0
    %2319 = vmatprep.subr.mxu0 0.0
    %2320 = vmatpush1.msra.mxu0 0.0
    %2321 = vmatprep.subr.mxu0 0.0
    %2322 = vmatpush1.msra.mxu0 0.0
    %2323 = vmatprep.subr.mxu0 0.0
    %2324 = vmatpush1.msra.mxu0 0.0
    %2325 = vmatprep.subr.mxu0 0.0
    %2326 = vmatpush1.msra.mxu0 0.0
    %2327 = vmatprep.subr.mxu0 0.0
    %2328 = vmatpush1.msra.mxu0 0.0
    %2329 = vmatprep.subr.mxu0 0.0
    %2330 = vmatpush1.msra.mxu0 0.0
    %2331 = vmatprep.subr.mxu0 0.0
    %2332 = vmatpush1.msra.mxu0 0.0
    %2333 = vmatprep.subr.mxu0 0.0
    %2334 = vmatpush1.msra.mxu0 0.0
    %2335 = vmatprep.subr.mxu0 0.0
    %2336 = vmatpush1.msra.mxu0 0.0
    %2337 = vmatprep.subr.mxu0 0.0
    %2338 = vmatpush1.msra.mxu0 0.0
    %2339 = vmatprep.subr.mxu0 0.0
    %2340 = vmatpush1.msra.mxu0 0.0
    %2341 = vmatprep.subr.mxu0 0.0
    %2342 = vmatpush1.msra.mxu0 0.0
    %2343 = vmatprep.subr.mxu0 0.0
    %2344 = vmatpush1.msra.mxu0 0.0
    %2345 = vmatprep.subr.mxu0 0.0
    %2346 = vmatpush1.msra.mxu0 0.0
    %2347 = vmatprep.subr.mxu0 0.0
    %2348 = vmatpush1.msra.mxu0 0.0
    %2349 = vmatprep.subr.mxu0 0.0
    %2350 = vmatpush1.msra.mxu0 0.0
    %2351 = vmatprep.subr.mxu0 0.0
    %2352 = vmatpush1.msra.mxu0 0.0
    %2353 = vmatprep.subr.mxu0 0.0
    %2354 = vmatpush1.msra.mxu0 0.0
    %2355 = vmatprep.subr.mxu0 0.0
    %2356 = vmatpush1.msra.mxu0 0.0
    %2357 = vmatprep.subr.mxu0 0.0
    %2358 = vmatpush1.msra.mxu0 0.0
    %2359 = vmatprep.subr.mxu0 0.0
    %2360 = vmatpush1.msra.mxu0 0.0
    %2361 = vmatprep.subr.mxu0 0.0
    %2362 = vmatpush1.msra.mxu0 0.0
    %2363 = vmatprep.subr.mxu0 0.0
    %2364 = vmatpush1.msra.mxu0 0.0
    %2365 = vmatprep.mubr.f32.mxu0 0.0
    %2366 = vmatmul.mubr.f32.gmra.mrb[0].mxu0 %v2229
    %v2367 = vpop.f32.mrb[0].mxu0
    %v2368 = vadd.f32 0.0, %v2367
    %v2369 = vpop.f32.mrb[0].mxu0
    %2370 = vdwg.mxu0
    %2371 = vmatprep.subr.mxu0 0.0
    %2372 = vmatpush1.msra.mxu0 %v89
    %2373 = vmatprep.subr.mxu0 0.0
    %2374 = vmatpush1.msra.mxu0 0.0
    %2375 = vmatprep.subr.mxu0 0.0
    %2376 = vmatpush1.msra.mxu0 0.0
    %2377 = vmatprep.subr.mxu0 0.0
    %2378 = vmatpush1.msra.mxu0 0.0
    %2379 = vmatprep.subr.mxu0 0.0
    %2380 = vmatpush1.msra.mxu0 0.0
    %2381 = vmatprep.subr.mxu0 0.0
    %2382 = vmatpush1.msra.mxu0 0.0
    %2383 = vmatprep.subr.mxu0 0.0
    %2384 = vmatpush1.msra.mxu0 0.0
    %2385 = vmatprep.subr.mxu0 0.0
    %2386 = vmatpush1.msra.mxu0 0.0
    %2387 = vmatprep.subr.mxu0 0.0
    %2388 = vmatpush1.msra.mxu0 0.0
    %2389 = vmatprep.subr.mxu0 0.0
    %2390 = vmatpush1.msra.mxu0 0.0
    %2391 = vmatprep.subr.mxu0 0.0
    %2392 = vmatpush1.msra.mxu0 0.0
    %2393 = vmatprep.subr.mxu0 0.0
    %2394 = vmatpush1.msra.mxu0 0.0
    %2395 = vmatprep.subr.mxu0 0.0
    %2396 = vmatpush1.msra.mxu0 0.0
    %2397 = vmatprep.subr.mxu0 0.0
    %2398 = vmatpush1.msra.mxu0 0.0
    %2399 = vmatprep.subr.mxu0 0.0
    %2400 = vmatpush1.msra.mxu0 0.0
    %2401 = vmatprep.subr.mxu0 0.0
    %2402 = vmatpush1.msra.mxu0 0.0
    %2403 = vmatprep.subr.mxu0 0.0
    %2404 = vmatpush1.msra.mxu0 0.0
    %2405 = vmatprep.subr.mxu0 0.0
    %2406 = vmatpush1.msra.mxu0 0.0
    %2407 = vmatprep.subr.mxu0 0.0
    %2408 = vmatpush1.msra.mxu0 0.0
    %2409 = vmatprep.subr.mxu0 0.0
    %2410 = vmatpush1.msra.mxu0 0.0
    %2411 = vmatprep.subr.mxu0 0.0
    %2412 = vmatpush1.msra.mxu0 0.0
    %2413 = vmatprep.subr.mxu0 0.0
    %2414 = vmatpush1.msra.mxu0 0.0
    %2415 = vmatprep.subr.mxu0 0.0
    %2416 = vmatpush1.msra.mxu0 0.0
    %2417 = vmatprep.subr.mxu0 0.0
    %2418 = vmatpush1.msra.mxu0 0.0
    %2419 = vmatprep.subr.mxu0 0.0
    %2420 = vmatpush1.msra.mxu0 0.0
    %2421 = vmatprep.subr.mxu0 0.0
    %2422 = vmatpush1.msra.mxu0 0.0
    %2423 = vmatprep.subr.mxu0 0.0
    %2424 = vmatpush1.msra.mxu0 0.0
    %2425 = vmatprep.subr.mxu0 0.0
    %2426 = vmatpush1.msra.mxu0 0.0
    %2427 = vmatprep.subr.mxu0 0.0
    %2428 = vmatpush1.msra.mxu0 0.0
    %2429 = vmatprep.subr.mxu0 0.0
    %2430 = vmatpush1.msra.mxu0 0.0
    %2431 = vmatprep.subr.mxu0 0.0
    %2432 = vmatpush1.msra.mxu0 0.0
    %2433 = vmatprep.subr.mxu0 0.0
    %2434 = vmatpush1.msra.mxu0 0.0
    %2435 = vmatprep.mubr.f32.mxu0 0.0
    %2436 = vmatmul.mubr.f32.gmra.mrb[0].mxu0 %v2229
    %v2437 = vpop.f32.mrb[0].mxu0
    %v2438 = vadd.f32 %v991, %v2437
    %v2439 = vpop.f32.mrb[0].mxu0
    %2440 = vdwg.mxu0
    %v2442 = vrot.slane %v2298, 3
    %v2443 = vrot.slane %v2298, 4
    %v2446 = vadd.f32 %v235, %v2442
    %v2447 = vadd.f32 %v236, %v2443
    %v2448 = vxor.u32 %v2446, 2147483648
    %v2449 = vxor.u32 %v2447, 2147483648
    %v2450 = vmul.f32 %v2448, 1.442695
    %v2451 = vpow.pop %v2450
    %v2452 = vmul.f32 %v2449, 1.442695
    %v2453 = vpow.pop %v2452
    %v2454 = vadd.f32 %v2451, 1.0
    %v2455 = vadd.f32 %v2453, 1.0
    %v2456 = vrcp.pop %v2454
    %v2457 = vmul.f32 1.0, %v2456
    %v2458 = vrcp.pop %v2455
    %v2459 = vmul.f32 1.0, %v2458
    %v2461 = vrot.slane %v2368, 3
    %v2462 = vrot.slane %v2368, 4
    %v2465 = vadd.f32 %v327, %v2461
    %v2466 = vadd.f32 %v328, %v2462
    %v2467 = vxor.u32 %v2465, 2147483648
    %v2468 = vxor.u32 %v2466, 2147483648
    %v2469 = vmul.f32 %v2467, 1.442695
    %v2470 = vpow.pop %v2469
    %v2471 = vmul.f32 %v2468, 1.442695
    %v2472 = vpow.pop %v2471
    %v2473 = vadd.f32 %v2470, 1.0
    %v2474 = vadd.f32 %v2472, 1.0
    %v2475 = vrcp.pop %v2473
    %v2476 = vmul.f32 1.0, %v2475
    %v2477 = vrcp.pop %v2474
    %v2478 = vmul.f32 1.0, %v2477
    %v2480 = vrot.slane %v2438, 3
    %v2481 = vrot.slane %v2438, 4
    %v2484 = vmul.f32 %v2457, %v2480
    %v2485 = vmul.f32 %v2459, %v2481
    %v2486 = vadd.f32 %v405, %v2484
    %v2487 = vadd.f32 %v410, %v2485
    %v2488 = vtanh.pop %v2486
    %v2489 = vtanh.pop %v2487
    %v2490 = vsub.f32 1.0, %v2476
    %v2491 = vsub.f32 1.0, %v2478
    %v2492 = vmul.f32 %v2490, %v2488
    %v2493 = vmul.f32 %v2491, %v2489
    %v2494 = vrot.slane %v2222, 7
    %v2495 = vrot.slane %v2223, 7
    %v2498 = vmul.f32 %v2476, %v2494
    %v2499 = vmul.f32 %v2478, %v2495
    %v2500 = vadd.f32 %v2492, %v2498
    %v2501 = vadd.f32 %v2493, %v2499
    %v2504 = vrot.slane %v2500, 5
    %v2505 = vrot.slane %v2501, 4
    %v2506 = vsel %vm1120, %v2505, %v2504
    %v2507 = vsel %vm843, %v2506, 0
    %2509 = vmatprep.subr.mxu0 0.0
    %2510 = vmatpush1.msra.mxu0 %v87
    %2511 = vmatprep.subr.mxu0 0.0
    %2512 = vmatpush1.msra.mxu0 0.0
    %2513 = vmatprep.subr.mxu0 0.0
    %2514 = vmatpush1.msra.mxu0 0.0
    %2515 = vmatprep.subr.mxu0 0.0
    %2516 = vmatpush1.msra.mxu0 0.0
    %2517 = vmatprep.subr.mxu0 0.0
    %2518 = vmatpush1.msra.mxu0 0.0
    %2519 = vmatprep.subr.mxu0 0.0
    %2520 = vmatpush1.msra.mxu0 0.0
    %2521 = vmatprep.subr.mxu0 0.0
    %2522 = vmatpush1.msra.mxu0 0.0
    %2523 = vmatprep.subr.mxu0 0.0
    %2524 = vmatpush1.msra.mxu0 0.0
    %2525 = vmatprep.subr.mxu0 0.0
    %2526 = vmatpush1.msra.mxu0 0.0
    %2527 = vmatprep.subr.mxu0 0.0
    %2528 = vmatpush1.msra.mxu0 0.0
    %2529 = vmatprep.subr.mxu0 0.0
    %2530 = vmatpush1.msra.mxu0 0.0
    %2531 = vmatprep.subr.mxu0 0.0
    %2532 = vmatpush1.msra.mxu0 0.0
    %2533 = vmatprep.subr.mxu0 0.0
    %2534 = vmatpush1.msra.mxu0 0.0
    %2535 = vmatprep.subr.mxu0 0.0
    %2536 = vmatpush1.msra.mxu0 0.0
    %2537 = vmatprep.subr.mxu0 0.0
    %2538 = vmatpush1.msra.mxu0 0.0
    %2539 = vmatprep.subr.mxu0 0.0
    %2540 = vmatpush1.msra.mxu0 0.0
    %2541 = vmatprep.subr.mxu0 0.0
    %2542 = vmatpush1.msra.mxu0 0.0
    %2543 = vmatprep.subr.mxu0 0.0
    %2544 = vmatpush1.msra.mxu0 0.0
    %2545 = vmatprep.subr.mxu0 0.0
    %2546 = vmatpush1.msra.mxu0 0.0
    %2547 = vmatprep.subr.mxu0 0.0
    %2548 = vmatpush1.msra.mxu0 0.0
    %2549 = vmatprep.subr.mxu0 0.0
    %2550 = vmatpush1.msra.mxu0 0.0
    %2551 = vmatprep.subr.mxu0 0.0
    %2552 = vmatpush1.msra.mxu0 0.0
    %2553 = vmatprep.subr.mxu0 0.0
    %2554 = vmatpush1.msra.mxu0 0.0
    %2555 = vmatprep.subr.mxu0 0.0
    %2556 = vmatpush1.msra.mxu0 0.0
    %2557 = vmatprep.subr.mxu0 0.0
    %2558 = vmatpush1.msra.mxu0 0.0
    %2559 = vmatprep.subr.mxu0 0.0
    %2560 = vmatpush1.msra.mxu0 0.0
    %2561 = vmatprep.subr.mxu0 0.0
    %2562 = vmatpush1.msra.mxu0 0.0
    %2563 = vmatprep.subr.mxu0 0.0
    %2564 = vmatpush1.msra.mxu0 0.0
    %2565 = vmatprep.subr.mxu0 0.0
    %2566 = vmatpush1.msra.mxu0 0.0
    %2567 = vmatprep.subr.mxu0 0.0
    %2568 = vmatpush1.msra.mxu0 0.0
    %2569 = vmatprep.subr.mxu0 0.0
    %2570 = vmatpush1.msra.mxu0 0.0
    %2571 = vmatprep.subr.mxu0 0.0
    %2572 = vmatpush1.msra.mxu0 0.0
    %2573 = vmatprep.mubr.f32.mxu0 0.0
    %2574 = vmatmul.mubr.f32.gmra.mrb[0].mxu0 %v2507
    %v2575 = vpop.f32.mrb[0].mxu0
    %v2576 = vadd.f32 0.0, %v2575
    %v2577 = vpop.f32.mrb[0].mxu0
    %2578 = vdwg.mxu0
    %2579 = vmatprep.subr.mxu0 0.0
    %2580 = vmatpush1.msra.mxu0 %v88
    %2581 = vmatprep.subr.mxu0 0.0
    %2582 = vmatpush1.msra.mxu0 0.0
    %2583 = vmatprep.subr.mxu0 0.0
    %2584 = vmatpush1.msra.mxu0 0.0
    %2585 = vmatprep.subr.mxu0 0.0
    %2586 = vmatpush1.msra.mxu0 0.0
    %2587 = vmatprep.subr.mxu0 0.0
    %2588 = vmatpush1.msra.mxu0 0.0
    %2589 = vmatprep.subr.mxu0 0.0
    %2590 = vmatpush1.msra.mxu0 0.0
    %2591 = vmatprep.subr.mxu0 0.0
    %2592 = vmatpush1.msra.mxu0 0.0
    %2593 = vmatprep.subr.mxu0 0.0
    %2594 = vmatpush1.msra.mxu0 0.0
    %2595 = vmatprep.subr.mxu0 0.0
    %2596 = vmatpush1.msra.mxu0 0.0
    %2597 = vmatprep.subr.mxu0 0.0
    %2598 = vmatpush1.msra.mxu0 0.0
    %2599 = vmatprep.subr.mxu0 0.0
    %2600 = vmatpush1.msra.mxu0 0.0
    %2601 = vmatprep.subr.mxu0 0.0
    %2602 = vmatpush1.msra.mxu0 0.0
    %2603 = vmatprep.subr.mxu0 0.0
    %2604 = vmatpush1.msra.mxu0 0.0
    %2605 = vmatprep.subr.mxu0 0.0
    %2606 = vmatpush1.msra.mxu0 0.0
    %2607 = vmatprep.subr.mxu0 0.0
    %2608 = vmatpush1.msra.mxu0 0.0
    %2609 = vmatprep.subr.mxu0 0.0
    %2610 = vmatpush1.msra.mxu0 0.0
    %2611 = vmatprep.subr.mxu0 0.0
    %2612 = vmatpush1.msra.mxu0 0.0
    %2613 = vmatprep.subr.mxu0 0.0
    %2614 = vmatpush1.msra.mxu0 0.0
    %2615 = vmatprep.subr.mxu0 0.0
    %2616 = vmatpush1.msra.mxu0 0.0
    %2617 = vmatprep.subr.mxu0 0.0
    %2618 = vmatpush1.msra.mxu0 0.0
    %2619 = vmatprep.subr.mxu0 0.0
    %2620 = vmatpush1.msra.mxu0 0.0
    %2621 = vmatprep.subr.mxu0 0.0
    %2622 = vmatpush1.msra.mxu0 0.0
    %2623 = vmatprep.subr.mxu0 0.0
    %2624 = vmatpush1.msra.mxu0 0.0
    %2625 = vmatprep.subr.mxu0 0.0
    %2626 = vmatpush1.msra.mxu0 0.0
    %2627 = vmatprep.subr.mxu0 0.0
    %2628 = vmatpush1.msra.mxu0 0.0
    %2629 = vmatprep.subr.mxu0 0.0
    %2630 = vmatpush1.msra.mxu0 0.0
    %2631 = vmatprep.subr.mxu0 0.0
    %2632 = vmatpush1.msra.mxu0 0.0
    %2633 = vmatprep.subr.mxu0 0.0
    %2634 = vmatpush1.msra.mxu0 0.0
    %2635 = vmatprep.subr.mxu0 0.0
    %2636 = vmatpush1.msra.mxu0 0.0
    %2637 = vmatprep.subr.mxu0 0.0
    %2638 = vmatpush1.msra.mxu0 0.0
    %2639 = vmatprep.subr.mxu0 0.0
    %2640 = vmatpush1.msra.mxu0 0.0
    %2641 = vmatprep.subr.mxu0 0.0
    %2642 = vmatpush1.msra.mxu0 0.0
    %2643 = vmatprep.mubr.f32.mxu0 0.0
    %2644 = vmatmul.mubr.f32.gmra.mrb[0].mxu0 %v2507
    %v2645 = vpop.f32.mrb[0].mxu0
    %v2646 = vadd.f32 0.0, %v2645
    %v2647 = vpop.f32.mrb[0].mxu0
    %2648 = vdwg.mxu0
    %2649 = vmatprep.subr.mxu0 0.0
    %2650 = vmatpush1.msra.mxu0 %v89
    %2651 = vmatprep.subr.mxu0 0.0
    %2652 = vmatpush1.msra.mxu0 0.0
    %2653 = vmatprep.subr.mxu0 0.0
    %2654 = vmatpush1.msra.mxu0 0.0
    %2655 = vmatprep.subr.mxu0 0.0
    %2656 = vmatpush1.msra.mxu0 0.0
    %2657 = vmatprep.subr.mxu0 0.0
    %2658 = vmatpush1.msra.mxu0 0.0
    %2659 = vmatprep.subr.mxu0 0.0
    %2660 = vmatpush1.msra.mxu0 0.0
    %2661 = vmatprep.subr.mxu0 0.0
    %2662 = vmatpush1.msra.mxu0 0.0
    %2663 = vmatprep.subr.mxu0 0.0
    %2664 = vmatpush1.msra.mxu0 0.0
    %2665 = vmatprep.subr.mxu0 0.0
    %2666 = vmatpush1.msra.mxu0 0.0
    %2667 = vmatprep.subr.mxu0 0.0
    %2668 = vmatpush1.msra.mxu0 0.0
    %2669 = vmatprep.subr.mxu0 0.0
    %2670 = vmatpush1.msra.mxu0 0.0
    %2671 = vmatprep.subr.mxu0 0.0
    %2672 = vmatpush1.msra.mxu0 0.0
    %2673 = vmatprep.subr.mxu0 0.0
    %2674 = vmatpush1.msra.mxu0 0.0
    %2675 = vmatprep.subr.mxu0 0.0
    %2676 = vmatpush1.msra.mxu0 0.0
    %2677 = vmatprep.subr.mxu0 0.0
    %2678 = vmatpush1.msra.mxu0 0.0
    %2679 = vmatprep.subr.mxu0 0.0
    %2680 = vmatpush1.msra.mxu0 0.0
    %2681 = vmatprep.subr.mxu0 0.0
    %2682 = vmatpush1.msra.mxu0 0.0
    %2683 = vmatprep.subr.mxu0 0.0
    %2684 = vmatpush1.msra.mxu0 0.0
    %2685 = vmatprep.subr.mxu0 0.0
    %2686 = vmatpush1.msra.mxu0 0.0
    %2687 = vmatprep.subr.mxu0 0.0
    %2688 = vmatpush1.msra.mxu0 0.0
    %2689 = vmatprep.subr.mxu0 0.0
    %2690 = vmatpush1.msra.mxu0 0.0
    %2691 = vmatprep.subr.mxu0 0.0
    %2692 = vmatpush1.msra.mxu0 0.0
    %2693 = vmatprep.subr.mxu0 0.0
    %2694 = vmatpush1.msra.mxu0 0.0
    %2695 = vmatprep.subr.mxu0 0.0
    %2696 = vmatpush1.msra.mxu0 0.0
    %2697 = vmatprep.subr.mxu0 0.0
    %2698 = vmatpush1.msra.mxu0 0.0
    %2699 = vmatprep.subr.mxu0 0.0
    %2700 = vmatpush1.msra.mxu0 0.0
    %2701 = vmatprep.subr.mxu0 0.0
    %2702 = vmatpush1.msra.mxu0 0.0
    %2703 = vmatprep.subr.mxu0 0.0
    %2704 = vmatpush1.msra.mxu0 0.0
    %2705 = vmatprep.subr.mxu0 0.0
    %2706 = vmatpush1.msra.mxu0 0.0
    %2707 = vmatprep.subr.mxu0 0.0
    %2708 = vmatpush1.msra.mxu0 0.0
    %2709 = vmatprep.subr.mxu0 0.0
    %2710 = vmatpush1.msra.mxu0 0.0
    %2711 = vmatprep.subr.mxu0 0.0
    %2712 = vmatpush1.msra.mxu0 0.0
    %2713 = vmatprep.mubr.f32.mxu0 0.0
    %2714 = vmatmul.mubr.f32.gmra.mrb[0].mxu0 %v2507
    %v2715 = vpop.f32.mrb[0].mxu0
    %v2716 = vadd.f32 %v991, %v2715
    %v2717 = vpop.f32.mrb[0].mxu0
    %2718 = vdwg.mxu0
    %v2720 = vrot.slane %v2576, 2
    %v2721 = vrot.slane %v2576, 3
    %v2724 = vadd.f32 %v235, %v2720
    %v2725 = vadd.f32 %v236, %v2721
    %v2726 = vxor.u32 %v2724, 2147483648
    %v2727 = vxor.u32 %v2725, 2147483648
    %v2728 = vmul.f32 %v2726, 1.442695
    %v2729 = vpow.pop %v2728
    %v2730 = vmul.f32 %v2727, 1.442695
    %v2731 = vpow.pop %v2730
    %v2732 = vadd.f32 %v2729, 1.0
    %v2733 = vadd.f32 %v2731, 1.0
    %v2734 = vrcp.pop %v2732
    %v2735 = vmul.f32 1.0, %v2734
    %v2736 = vrcp.pop %v2733
    %v2737 = vmul.f32 1.0, %v2736
    %v2739 = vrot.slane %v2646, 2
    %v2740 = vrot.slane %v2646, 3
    %v2743 = vadd.f32 %v327, %v2739
    %v2744 = vadd.f32 %v328, %v2740
    %v2745 = vxor.u32 %v2743, 2147483648
    %v2746 = vxor.u32 %v2744, 2147483648
    %v2747 = vmul.f32 %v2745, 1.442695
    %v2748 = vpow.pop %v2747
    %v2749 = vmul.f32 %v2746, 1.442695
    %v2750 = vpow.pop %v2749
    %v2751 = vadd.f32 %v2748, 1.0
    %v2752 = vadd.f32 %v2750, 1.0
    %v2753 = vrcp.pop %v2751
    %v2754 = vmul.f32 1.0, %v2753
    %v2755 = vrcp.pop %v2752
    %v2756 = vmul.f32 1.0, %v2755
    %v2758 = vrot.slane %v2716, 2
    %v2759 = vrot.slane %v2716, 3
    %v2762 = vmul.f32 %v2735, %v2758
    %v2763 = vmul.f32 %v2737, %v2759
    %v2764 = vadd.f32 %v405, %v2762
    %v2765 = vadd.f32 %v410, %v2763
    %v2766 = vtanh.pop %v2764
    %v2767 = vtanh.pop %v2765
    %v2768 = vsub.f32 1.0, %v2754
    %v2769 = vsub.f32 1.0, %v2756
    %v2770 = vmul.f32 %v2768, %v2766
    %v2771 = vmul.f32 %v2769, %v2767
    %v2772 = vrot.slane %v2500, 7
    %v2773 = vrot.slane %v2501, 7
    %v2776 = vmul.f32 %v2754, %v2772
    %v2777 = vmul.f32 %v2756, %v2773
    %v2778 = vadd.f32 %v2770, %v2776
    %v2779 = vadd.f32 %v2771, %v2777
    %v2782 = vrot.slane %v2778, 6
    %v2783 = vrot.slane %v2779, 5
    %v2784 = vsel %vm1120, %v2783, %v2782
    %v2785 = vsel %vm843, %v2784, 0
    %2787 = vmatprep.subr.mxu0 0.0
    %2788 = vmatpush1.msra.mxu0 %v87
    %2789 = vmatprep.subr.mxu0 0.0
    %2790 = vmatpush1.msra.mxu0 0.0
    %2791 = vmatprep.subr.mxu0 0.0
    %2792 = vmatpush1.msra.mxu0 0.0
    %2793 = vmatprep.subr.mxu0 0.0
    %2794 = vmatpush1.msra.mxu0 0.0
    %2795 = vmatprep.subr.mxu0 0.0
    %2796 = vmatpush1.msra.mxu0 0.0
    %2797 = vmatprep.subr.mxu0 0.0
    %2798 = vmatpush1.msra.mxu0 0.0
    %2799 = vmatprep.subr.mxu0 0.0
    %2800 = vmatpush1.msra.mxu0 0.0
    %2801 = vmatprep.subr.mxu0 0.0
    %2802 = vmatpush1.msra.mxu0 0.0
    %2803 = vmatprep.subr.mxu0 0.0
    %2804 = vmatpush1.msra.mxu0 0.0
    %2805 = vmatprep.subr.mxu0 0.0
    %2806 = vmatpush1.msra.mxu0 0.0
    %2807 = vmatprep.subr.mxu0 0.0
    %2808 = vmatpush1.msra.mxu0 0.0
    %2809 = vmatprep.subr.mxu0 0.0
    %2810 = vmatpush1.msra.mxu0 0.0
    %2811 = vmatprep.subr.mxu0 0.0
    %2812 = vmatpush1.msra.mxu0 0.0
    %2813 = vmatprep.subr.mxu0 0.0
    %2814 = vmatpush1.msra.mxu0 0.0
    %2815 = vmatprep.subr.mxu0 0.0
    %2816 = vmatpush1.msra.mxu0 0.0
    %2817 = vmatprep.subr.mxu0 0.0
    %2818 = vmatpush1.msra.mxu0 0.0
    %2819 = vmatprep.subr.mxu0 0.0
    %2820 = vmatpush1.msra.mxu0 0.0
    %2821 = vmatprep.subr.mxu0 0.0
    %2822 = vmatpush1.msra.mxu0 0.0
    %2823 = vmatprep.subr.mxu0 0.0
    %2824 = vmatpush1.msra.mxu0 0.0
    %2825 = vmatprep.subr.mxu0 0.0
    %2826 = vmatpush1.msra.mxu0 0.0
    %2827 = vmatprep.subr.mxu0 0.0
    %2828 = vmatpush1.msra.mxu0 0.0
    %2829 = vmatprep.subr.mxu0 0.0
    %2830 = vmatpush1.msra.mxu0 0.0
    %2831 = vmatprep.subr.mxu0 0.0
    %2832 = vmatpush1.msra.mxu0 0.0
    %2833 = vmatprep.subr.mxu0 0.0
    %2834 = vmatpush1.msra.mxu0 0.0
    %2835 = vmatprep.subr.mxu0 0.0
    %2836 = vmatpush1.msra.mxu0 0.0
    %2837 = vmatprep.subr.mxu0 0.0
    %2838 = vmatpush1.msra.mxu0 0.0
    %2839 = vmatprep.subr.mxu0 0.0
    %2840 = vmatpush1.msra.mxu0 0.0
    %2841 = vmatprep.subr.mxu0 0.0
    %2842 = vmatpush1.msra.mxu0 0.0
    %2843 = vmatprep.subr.mxu0 0.0
    %2844 = vmatpush1.msra.mxu0 0.0
    %2845 = vmatprep.subr.mxu0 0.0
    %2846 = vmatpush1.msra.mxu0 0.0
    %2847 = vmatprep.subr.mxu0 0.0
    %2848 = vmatpush1.msra.mxu0 0.0
    %2849 = vmatprep.subr.mxu0 0.0
    %2850 = vmatpush1.msra.mxu0 0.0
    %2851 = vmatprep.mubr.f32.mxu0 0.0
    %2852 = vmatmul.mubr.f32.gmra.mrb[0].mxu0 %v2785
    %v2853 = vpop.f32.mrb[0].mxu0
    %v2854 = vadd.f32 0.0, %v2853
    %v2855 = vpop.f32.mrb[0].mxu0
    %2856 = vdwg.mxu0
    %2857 = vmatprep.subr.mxu0 0.0
    %2858 = vmatpush1.msra.mxu0 %v88
    %2859 = vmatprep.subr.mxu0 0.0
    %2860 = vmatpush1.msra.mxu0 0.0
    %2861 = vmatprep.subr.mxu0 0.0
    %2862 = vmatpush1.msra.mxu0 0.0
    %2863 = vmatprep.subr.mxu0 0.0
    %2864 = vmatpush1.msra.mxu0 0.0
    %2865 = vmatprep.subr.mxu0 0.0
    %2866 = vmatpush1.msra.mxu0 0.0
    %2867 = vmatprep.subr.mxu0 0.0
    %2868 = vmatpush1.msra.mxu0 0.0
    %2869 = vmatprep.subr.mxu0 0.0
    %2870 = vmatpush1.msra.mxu0 0.0
    %2871 = vmatprep.subr.mxu0 0.0
    %2872 = vmatpush1.msra.mxu0 0.0
    %2873 = vmatprep.subr.mxu0 0.0
    %2874 = vmatpush1.msra.mxu0 0.0
    %2875 = vmatprep.subr.mxu0 0.0
    %2876 = vmatpush1.msra.mxu0 0.0
    %2877 = vmatprep.subr.mxu0 0.0
    %2878 = vmatpush1.msra.mxu0 0.0
    %2879 = vmatprep.subr.mxu0 0.0
    %2880 = vmatpush1.msra.mxu0 0.0
    %2881 = vmatprep.subr.mxu0 0.0
    %2882 = vmatpush1.msra.mxu0 0.0
    %2883 = vmatprep.subr.mxu0 0.0
    %2884 = vmatpush1.msra.mxu0 0.0
    %2885 = vmatprep.subr.mxu0 0.0
    %2886 = vmatpush1.msra.mxu0 0.0
    %2887 = vmatprep.subr.mxu0 0.0
    %2888 = vmatpush1.msra.mxu0 0.0
    %2889 = vmatprep.subr.mxu0 0.0
    %2890 = vmatpush1.msra.mxu0 0.0
    %2891 = vmatprep.subr.mxu0 0.0
    %2892 = vmatpush1.msra.mxu0 0.0
    %2893 = vmatprep.subr.mxu0 0.0
    %2894 = vmatpush1.msra.mxu0 0.0
    %2895 = vmatprep.subr.mxu0 0.0
    %2896 = vmatpush1.msra.mxu0 0.0
    %2897 = vmatprep.subr.mxu0 0.0
    %2898 = vmatpush1.msra.mxu0 0.0
    %2899 = vmatprep.subr.mxu0 0.0
    %2900 = vmatpush1.msra.mxu0 0.0
    %2901 = vmatprep.subr.mxu0 0.0
    %2902 = vmatpush1.msra.mxu0 0.0
    %2903 = vmatprep.subr.mxu0 0.0
    %2904 = vmatpush1.msra.mxu0 0.0
    %2905 = vmatprep.subr.mxu0 0.0
    %2906 = vmatpush1.msra.mxu0 0.0
    %2907 = vmatprep.subr.mxu0 0.0
    %2908 = vmatpush1.msra.mxu0 0.0
    %2909 = vmatprep.subr.mxu0 0.0
    %2910 = vmatpush1.msra.mxu0 0.0
    %2911 = vmatprep.subr.mxu0 0.0
    %2912 = vmatpush1.msra.mxu0 0.0
    %2913 = vmatprep.subr.mxu0 0.0
    %2914 = vmatpush1.msra.mxu0 0.0
    %2915 = vmatprep.subr.mxu0 0.0
    %2916 = vmatpush1.msra.mxu0 0.0
    %2917 = vmatprep.subr.mxu0 0.0
    %2918 = vmatpush1.msra.mxu0 0.0
    %2919 = vmatprep.subr.mxu0 0.0
    %2920 = vmatpush1.msra.mxu0 0.0
    %2921 = vmatprep.mubr.f32.mxu0 0.0
    %2922 = vmatmul.mubr.f32.gmra.mrb[0].mxu0 %v2785
    %v2923 = vpop.f32.mrb[0].mxu0
    %v2924 = vadd.f32 0.0, %v2923
    %v2925 = vpop.f32.mrb[0].mxu0
    %2926 = vdwg.mxu0
    %2927 = vmatprep.subr.mxu0 0.0
    %2928 = vmatpush1.msra.mxu0 %v89
    %2929 = vmatprep.subr.mxu0 0.0
    %2930 = vmatpush1.msra.mxu0 0.0
    %2931 = vmatprep.subr.mxu0 0.0
    %2932 = vmatpush1.msra.mxu0 0.0
    %2933 = vmatprep.subr.mxu0 0.0
    %2934 = vmatpush1.msra.mxu0 0.0
    %2935 = vmatprep.subr.mxu0 0.0
    %2936 = vmatpush1.msra.mxu0 0.0
    %2937 = vmatprep.subr.mxu0 0.0
    %2938 = vmatpush1.msra.mxu0 0.0
    %2939 = vmatprep.subr.mxu0 0.0
    %2940 = vmatpush1.msra.mxu0 0.0
    %2941 = vmatprep.subr.mxu0 0.0
    %2942 = vmatpush1.msra.mxu0 0.0
    %2943 = vmatprep.subr.mxu0 0.0
    %2944 = vmatpush1.msra.mxu0 0.0
    %2945 = vmatprep.subr.mxu0 0.0
    %2946 = vmatpush1.msra.mxu0 0.0
    %2947 = vmatprep.subr.mxu0 0.0
    %2948 = vmatpush1.msra.mxu0 0.0
    %2949 = vmatprep.subr.mxu0 0.0
    %2950 = vmatpush1.msra.mxu0 0.0
    %2951 = vmatprep.subr.mxu0 0.0
    %2952 = vmatpush1.msra.mxu0 0.0
    %2953 = vmatprep.subr.mxu0 0.0
    %2954 = vmatpush1.msra.mxu0 0.0
    %2955 = vmatprep.subr.mxu0 0.0
    %2956 = vmatpush1.msra.mxu0 0.0
    %2957 = vmatprep.subr.mxu0 0.0
    %2958 = vmatpush1.msra.mxu0 0.0
    %2959 = vmatprep.subr.mxu0 0.0
    %2960 = vmatpush1.msra.mxu0 0.0
    %2961 = vmatprep.subr.mxu0 0.0
    %2962 = vmatpush1.msra.mxu0 0.0
    %2963 = vmatprep.subr.mxu0 0.0
    %2964 = vmatpush1.msra.mxu0 0.0
    %2965 = vmatprep.subr.mxu0 0.0
    %2966 = vmatpush1.msra.mxu0 0.0
    %2967 = vmatprep.subr.mxu0 0.0
    %2968 = vmatpush1.msra.mxu0 0.0
    %2969 = vmatprep.subr.mxu0 0.0
    %2970 = vmatpush1.msra.mxu0 0.0
    %2971 = vmatprep.subr.mxu0 0.0
    %2972 = vmatpush1.msra.mxu0 0.0
    %2973 = vmatprep.subr.mxu0 0.0
    %2974 = vmatpush1.msra.mxu0 0.0
    %2975 = vmatprep.subr.mxu0 0.0
    %2976 = vmatpush1.msra.mxu0 0.0
    %2977 = vmatprep.subr.mxu0 0.0
    %2978 = vmatpush1.msra.mxu0 0.0
    %2979 = vmatprep.subr.mxu0 0.0
    %2980 = vmatpush1.msra.mxu0 0.0
    %2981 = vmatprep.subr.mxu0 0.0
    %2982 = vmatpush1.msra.mxu0 0.0
    %2983 = vmatprep.subr.mxu0 0.0
    %2984 = vmatpush1.msra.mxu0 0.0
    %2985 = vmatprep.subr.mxu0 0.0
    %2986 = vmatpush1.msra.mxu0 0.0
    %2987 = vmatprep.subr.mxu0 0.0
    %2988 = vmatpush1.msra.mxu0 0.0
    %2989 = vmatprep.subr.mxu0 0.0
    %2990 = vmatpush1.msra.mxu0 0.0
    %2991 = vmatprep.mubr.f32.mxu0 0.0
    %2992 = vmatmul.mubr.f32.gmra.mrb[0].mxu0 %v2785
    %v2993 = vpop.f32.mrb[0].mxu0
    %v2994 = vadd.f32 %v991, %v2993
    %v2995 = vpop.f32.mrb[0].mxu0
    %2996 = vdwg.mxu0
    %v2998 = vrot.slane %v2854, 1
    %v2999 = vrot.slane %v2854, 2
    %v3002 = vadd.f32 %v235, %v2998
    %v3003 = vadd.f32 %v236, %v2999
    %v3004 = vxor.u32 %v3002, 2147483648
    %v3005 = vxor.u32 %v3003, 2147483648
    %v3006 = vmul.f32 %v3004, 1.442695
    %v3007 = vpow.pop %v3006
    %v3008 = vmul.f32 %v3005, 1.442695
    %v3009 = vpow.pop %v3008
    %v3010 = vadd.f32 %v3007, 1.0
    %v3011 = vadd.f32 %v3009, 1.0
    %v3012 = vrcp.pop %v3010
    %v3013 = vmul.f32 1.0, %v3012
    %v3014 = vrcp.pop %v3011
    %v3015 = vmul.f32 1.0, %v3014
    %v3017 = vrot.slane %v2924, 1
    %v3018 = vrot.slane %v2924, 2
    %v3021 = vadd.f32 %v327, %v3017
    %v3022 = vadd.f32 %v328, %v3018
    %v3023 = vxor.u32 %v3021, 2147483648
    %v3024 = vxor.u32 %v3022, 2147483648
    %v3025 = vmul.f32 %v3023, 1.442695
    %v3026 = vpow.pop %v3025
    %v3027 = vmul.f32 %v3024, 1.442695
    %v3028 = vpow.pop %v3027
    %v3029 = vadd.f32 %v3026, 1.0
    %v3030 = vadd.f32 %v3028, 1.0
    %v3031 = vrcp.pop %v3029
    %v3032 = vmul.f32 1.0, %v3031
    %v3033 = vrcp.pop %v3030
    %v3034 = vmul.f32 1.0, %v3033
    %v3036 = vrot.slane %v2994, 1
    %v3037 = vrot.slane %v2994, 2
    %v3040 = vmul.f32 %v3013, %v3036
    %v3041 = vmul.f32 %v3015, %v3037
    %v3042 = vadd.f32 %v405, %v3040
    %v3043 = vadd.f32 %v410, %v3041
    %v3044 = vtanh.pop %v3042
    %v3045 = vtanh.pop %v3043
    %v3046 = vsub.f32 1.0, %v3032
    %v3047 = vsub.f32 1.0, %v3034
    %v3048 = vmul.f32 %v3046, %v3044
    %v3049 = vmul.f32 %v3047, %v3045
    %v3050 = vrot.slane %v2778, 7
    %v3051 = vrot.slane %v2779, 7
    %v3054 = vmul.f32 %v3032, %v3050
    %v3055 = vmul.f32 %v3034, %v3051
    %v3056 = vadd.f32 %v3048, %v3054
    %v3057 = vadd.f32 %v3049, %v3055
    %v3060 = vrot.slane %v3056, 7
    %v3061 = vrot.slane %v3057, 6
    %v3062 = vsel %vm1120, %v3061, %v3060
    %v3063 = vsel %vm843, %v3062, 0
    %3065 = vmatprep.subr.mxu0 0.0
    %3066 = vmatpush1.msra.mxu0 %v99
    %3067 = vmatprep.subr.mxu0 0.0
    %3068 = vmatpush1.msra.mxu0 0.0
    %3069 = vmatprep.subr.mxu0 0.0
    %3070 = vmatpush1.msra.mxu0 0.0
    %3071 = vmatprep.subr.mxu0 0.0
    %3072 = vmatpush1.msra.mxu0 0.0
    %3073 = vmatprep.subr.mxu0 0.0
    %3074 = vmatpush1.msra.mxu0 0.0
    %3075 = vmatprep.subr.mxu0 0.0
    %3076 = vmatpush1.msra.mxu0 0.0
    %3077 = vmatprep.subr.mxu0 0.0
    %3078 = vmatpush1.msra.mxu0 0.0
    %3079 = vmatprep.subr.mxu0 0.0
    %3080 = vmatpush1.msra.mxu0 0.0
    %3081 = vmatprep.subr.mxu0 0.0
    %3082 = vmatpush1.msra.mxu0 0.0
    %3083 = vmatprep.subr.mxu0 0.0
    %3084 = vmatpush1.msra.mxu0 0.0
    %3085 = vmatprep.subr.mxu0 0.0
    %3086 = vmatpush1.msra.mxu0 0.0
    %3087 = vmatprep.subr.mxu0 0.0
    %3088 = vmatpush1.msra.mxu0 0.0
    %3089 = vmatprep.subr.mxu0 0.0
    %3090 = vmatpush1.msra.mxu0 0.0
    %3091 = vmatprep.subr.mxu0 0.0
    %3092 = vmatpush1.msra.mxu0 0.0
    %3093 = vmatprep.subr.mxu0 0.0
    %3094 = vmatpush1.msra.mxu0 0.0
    %3095 = vmatprep.subr.mxu0 0.0
    %3096 = vmatpush1.msra.mxu0 0.0
    %3097 = vmatprep.subr.mxu0 0.0
    %3098 = vmatpush1.msra.mxu0 0.0
    %3099 = vmatprep.subr.mxu0 0.0
    %3100 = vmatpush1.msra.mxu0 0.0
    %3101 = vmatprep.subr.mxu0 0.0
    %3102 = vmatpush1.msra.mxu0 0.0
    %3103 = vmatprep.subr.mxu0 0.0
    %3104 = vmatpush1.msra.mxu0 0.0
    %3105 = vmatprep.subr.mxu0 0.0
    %3106 = vmatpush1.msra.mxu0 0.0
    %3107 = vmatprep.subr.mxu0 0.0
    %3108 = vmatpush1.msra.mxu0 0.0
    %3109 = vmatprep.subr.mxu0 0.0
    %3110 = vmatpush1.msra.mxu0 0.0
    %3111 = vmatprep.subr.mxu0 0.0
    %3112 = vmatpush1.msra.mxu0 0.0
    %3113 = vmatprep.subr.mxu0 0.0
    %3114 = vmatpush1.msra.mxu0 0.0
    %3115 = vmatprep.subr.mxu0 0.0
    %3116 = vmatpush1.msra.mxu0 0.0
    %3117 = vmatprep.subr.mxu0 0.0
    %3118 = vmatpush1.msra.mxu0 0.0
    %3119 = vmatprep.subr.mxu0 0.0
    %3120 = vmatpush1.msra.mxu0 0.0
    %3121 = vmatprep.subr.mxu0 0.0
    %3122 = vmatpush1.msra.mxu0 0.0
    %3123 = vmatprep.subr.mxu0 0.0
    %3124 = vmatpush1.msra.mxu0 0.0
    %3125 = vmatprep.subr.mxu0 0.0
    %3126 = vmatpush1.msra.mxu0 0.0
    %3127 = vmatprep.subr.mxu0 0.0
    %3128 = vmatpush1.msra.mxu0 0.0
    %3129 = vmatprep.mubr.f32.mxu0 0.0
    %3130 = vmatmul.mubr.f32.gmra.mrb[0].mxu0 %v3063
    %v3131 = vpop.f32.mrb[0].mxu0
    %v3132 = vadd.f32 0.0, %v3131
    %v3133 = vpop.f32.mrb[0].mxu0
    %3134 = vdwg.mxu0
    %3135 = vmatprep.subr.mxu0 0.0
    %3136 = vmatpush1.msra.mxu0 %v100
    %3137 = vmatprep.subr.mxu0 0.0
    %3138 = vmatpush1.msra.mxu0 0.0
    %3139 = vmatprep.subr.mxu0 0.0
    %3140 = vmatpush1.msra.mxu0 0.0
    %3141 = vmatprep.subr.mxu0 0.0
    %3142 = vmatpush1.msra.mxu0 0.0
    %3143 = vmatprep.subr.mxu0 0.0
    %3144 = vmatpush1.msra.mxu0 0.0
    %3145 = vmatprep.subr.mxu0 0.0
    %3146 = vmatpush1.msra.mxu0 0.0
    %3147 = vmatprep.subr.mxu0 0.0
    %3148 = vmatpush1.msra.mxu0 0.0
    %3149 = vmatprep.subr.mxu0 0.0
    %3150 = vmatpush1.msra.mxu0 0.0
    %3151 = vmatprep.subr.mxu0 0.0
    %3152 = vmatpush1.msra.mxu0 0.0
    %3153 = vmatprep.subr.mxu0 0.0
    %3154 = vmatpush1.msra.mxu0 0.0
    %3155 = vmatprep.subr.mxu0 0.0
    %3156 = vmatpush1.msra.mxu0 0.0
    %3157 = vmatprep.subr.mxu0 0.0
    %3158 = vmatpush1.msra.mxu0 0.0
    %3159 = vmatprep.subr.mxu0 0.0
    %3160 = vmatpush1.msra.mxu0 0.0
    %3161 = vmatprep.subr.mxu0 0.0
    %3162 = vmatpush1.msra.mxu0 0.0
    %3163 = vmatprep.subr.mxu0 0.0
    %3164 = vmatpush1.msra.mxu0 0.0
    %3165 = vmatprep.subr.mxu0 0.0
    %3166 = vmatpush1.msra.mxu0 0.0
    %3167 = vmatprep.subr.mxu0 0.0
    %3168 = vmatpush1.msra.mxu0 0.0
    %3169 = vmatprep.subr.mxu0 0.0
    %3170 = vmatpush1.msra.mxu0 0.0
    %3171 = vmatprep.subr.mxu0 0.0
    %3172 = vmatpush1.msra.mxu0 0.0
    %3173 = vmatprep.subr.mxu0 0.0
    %3174 = vmatpush1.msra.mxu0 0.0
    %3175 = vmatprep.subr.mxu0 0.0
    %3176 = vmatpush1.msra.mxu0 0.0
    %3177 = vmatprep.subr.mxu0 0.0
    %3178 = vmatpush1.msra.mxu0 0.0
    %3179 = vmatprep.subr.mxu0 0.0
    %3180 = vmatpush1.msra.mxu0 0.0
    %3181 = vmatprep.subr.mxu0 0.0
    %3182 = vmatpush1.msra.mxu0 0.0
    %3183 = vmatprep.subr.mxu0 0.0
    %3184 = vmatpush1.msra.mxu0 0.0
    %3185 = vmatprep.subr.mxu0 0.0
    %3186 = vmatpush1.msra.mxu0 0.0
    %3187 = vmatprep.subr.mxu0 0.0
    %3188 = vmatpush1.msra.mxu0 0.0
    %3189 = vmatprep.subr.mxu0 0.0
    %3190 = vmatpush1.msra.mxu0 0.0
    %3191 = vmatprep.subr.mxu0 0.0
    %3192 = vmatpush1.msra.mxu0 0.0
    %3193 = vmatprep.subr.mxu0 0.0
    %3194 = vmatpush1.msra.mxu0 0.0
    %3195 = vmatprep.subr.mxu0 0.0
    %3196 = vmatpush1.msra.mxu0 0.0
    %3197 = vmatprep.subr.mxu0 0.0
    %3198 = vmatpush1.msra.mxu0 0.0
    %3199 = vmatprep.mubr.f32.mxu0 0.0
    %3200 = vmatmul.mubr.f32.gmra.mrb[0].mxu0 %v3063
    %v3201 = vpop.f32.mrb[0].mxu0
    %v3202 = vadd.f32 0.0, %v3201
    %v3203 = vpop.f32.mrb[0].mxu0
    %3204 = vdwg.mxu0
    %v3206 = vlaneseq
    %v3207 = vshrl.u32 %v3206, 7
    %v3208 = vsub.s32 0, %v3207
    %v3209 = vrot.slane %v107, %v3208
    %3211 = vmatprep.subr.mxu0 0.0
    %3212 = vmatpush1.msra.mxu0 %v101
    %3213 = vmatprep.subr.mxu0 0.0
    %3214 = vmatpush1.msra.mxu0 0.0
    %3215 = vmatprep.subr.mxu0 0.0
    %3216 = vmatpush1.msra.mxu0 0.0
    %3217 = vmatprep.subr.mxu0 0.0
    %3218 = vmatpush1.msra.mxu0 0.0
    %3219 = vmatprep.subr.mxu0 0.0
    %3220 = vmatpush1.msra.mxu0 0.0
    %3221 = vmatprep.subr.mxu0 0.0
    %3222 = vmatpush1.msra.mxu0 0.0
    %3223 = vmatprep.subr.mxu0 0.0
    %3224 = vmatpush1.msra.mxu0 0.0
    %3225 = vmatprep.subr.mxu0 0.0
    %3226 = vmatpush1.msra.mxu0 0.0
    %3227 = vmatprep.subr.mxu0 0.0
    %3228 = vmatpush1.msra.mxu0 0.0
    %3229 = vmatprep.subr.mxu0 0.0
    %3230 = vmatpush1.msra.mxu0 0.0
    %3231 = vmatprep.subr.mxu0 0.0
    %3232 = vmatpush1.msra.mxu0 0.0
    %3233 = vmatprep.subr.mxu0 0.0
    %3234 = vmatpush1.msra.mxu0 0.0
    %3235 = vmatprep.subr.mxu0 0.0
    %3236 = vmatpush1.msra.mxu0 0.0
    %3237 = vmatprep.subr.mxu0 0.0
    %3238 = vmatpush1.msra.mxu0 0.0
    %3239 = vmatprep.subr.mxu0 0.0
    %3240 = vmatpush1.msra.mxu0 0.0
    %3241 = vmatprep.subr.mxu0 0.0
    %3242 = vmatpush1.msra.mxu0 0.0
    %3243 = vmatprep.subr.mxu0 0.0
    %3244 = vmatpush1.msra.mxu0 0.0
    %3245 = vmatprep.subr.mxu0 0.0
    %3246 = vmatpush1.msra.mxu0 0.0
    %3247 = vmatprep.subr.mxu0 0.0
    %3248 = vmatpush1.msra.mxu0 0.0
    %3249 = vmatprep.subr.mxu0 0.0
    %3250 = vmatpush1.msra.mxu0 0.0
    %3251 = vmatprep.subr.mxu0 0.0
    %3252 = vmatpush1.msra.mxu0 0.0
    %3253 = vmatprep.subr.mxu0 0.0
    %3254 = vmatpush1.msra.mxu0 0.0
    %3255 = vmatprep.subr.mxu0 0.0
    %3256 = vmatpush1.msra.mxu0 0.0
    %3257 = vmatprep.subr.mxu0 0.0
    %3258 = vmatpush1.msra.mxu0 0.0
    %3259 = vmatprep.subr.mxu0 0.0
    %3260 = vmatpush1.msra.mxu0 0.0
    %3261 = vmatprep.subr.mxu0 0.0
    %3262 = vmatpush1.msra.mxu0 0.0
    %3263 = vmatprep.subr.mxu0 0.0
    %3264 = vmatpush1.msra.mxu0 0.0
    %3265 = vmatprep.subr.mxu0 0.0
    %3266 = vmatpush1.msra.mxu0 0.0
    %3267 = vmatprep.subr.mxu0 0.0
    %3268 = vmatpush1.msra.mxu0 0.0
    %3269 = vmatprep.subr.mxu0 0.0
    %3270 = vmatpush1.msra.mxu0 0.0
    %3271 = vmatprep.subr.mxu0 0.0
    %3272 = vmatpush1.msra.mxu0 0.0
    %3273 = vmatprep.subr.mxu0 0.0
    %3274 = vmatpush1.msra.mxu0 0.0
    %3275 = vmatprep.mubr.f32.mxu0 0.0
    %3276 = vmatmul.mubr.f32.gmra.mrb[0].mxu0 %v3063
    %v3277 = vpop.f32.mrb[0].mxu0
    %v3278 = vadd.f32 %v3209, %v3277
    %v3279 = vpop.f32.mrb[0].mxu0
    %3280 = vdwg.mxu0
    %v3283 = vunpack.c.l.s4 1983009808
    %v3284 = vunpack.c.0.s8 %v3283
    %v3285 = vlaneseq
    %v3286 = vshrl.u32 %v3285, 7
    %v3287 = vsub.s32 %v3284, %v3286
    %v3288 = vrot.slane %v3132, %v3287
    %v3289 = vrot.slane %v3288, 1
    %v3292 = vadd.f32 %v577, %v3288
    %v3293 = vadd.f32 %v586, %v3289
    %v3294 = vxor.u32 %v3292, 2147483648
    %v3295 = vxor.u32 %v3293, 2147483648
    %v3296 = vmul.f32 %v3294, 1.442695
    %v3297 = vpow.pop %v3296
    %v3298 = vmul.f32 %v3295, 1.442695
    %v3299 = vpow.pop %v3298
    %v3300 = vadd.f32 %v3297, 1.0
    %v3301 = vadd.f32 %v3299, 1.0
    %v3302 = vrcp.pop %v3300
    %v3303 = vmul.f32 1.0, %v3302
    %v3304 = vrcp.pop %v3301
    %v3305 = vmul.f32 1.0, %v3304
    %v3308 = vunpack.c.l.s4 1983009808
    %v3309 = vunpack.c.0.s8 %v3308
    %v3310 = vlaneseq
    %v3311 = vshrl.u32 %v3310, 7
    %v3312 = vsub.s32 %v3309, %v3311
    %v3313 = vrot.slane %v3202, %v3312
    %v3314 = vrot.slane %v3313, 1
    %v3317 = vadd.f32 %v702, %v3313
    %v3318 = vadd.f32 %v711, %v3314
    %v3319 = vxor.u32 %v3317, 2147483648
    %v3320 = vxor.u32 %v3318, 2147483648
    %v3321 = vmul.f32 %v3319, 1.442695
    %v3322 = vpow.pop %v3321
    %v3323 = vmul.f32 %v3320, 1.442695
    %v3324 = vpow.pop %v3323
    %v3325 = vadd.f32 %v3322, 1.0
    %v3326 = vadd.f32 %v3324, 1.0
    %v3327 = vrcp.pop %v3325
    %v3328 = vmul.f32 1.0, %v3327
    %v3329 = vrcp.pop %v3326
    %v3330 = vmul.f32 1.0, %v3329
    %v3333 = vunpack.c.l.s4 1983009808
    %v3334 = vunpack.c.0.s8 %v3333
    %v3335 = vlaneseq
    %v3336 = vshrl.u32 %v3335, 7
    %v3337 = vsub.s32 %v3334, %v3336
    %v3338 = vrot.slane %v3278, %v3337
    %v3339 = vrot.slane %v3338, 1
    %v3342 = vmul.f32 %v3303, %v3338
    %v3343 = vmul.f32 %v3305, %v3339
    %v3344 = vadd.f32 %v819, %v3342
    %v3345 = vadd.f32 %v828, %v3343
    %v3346 = vtanh.pop %v3344
    %v3347 = vtanh.pop %v3345
    %v3348 = vsub.f32 1.0, %v3328
    %v3349 = vsub.f32 1.0, %v3330
    %v3350 = vmul.f32 %v3348, %v3346
    %v3351 = vmul.f32 %v3349, %v3347
    %v3352 = vcombine.high %v3056, %v3056
    %v3354 = vunpack.c.l.s4 1983009808
    %v3355 = vunpack.c.0.s8 %v3354
    %v3356 = vlaneseq
    %v3357 = vshrl.u32 %v3356, 7
    %v3358 = vsub.s32 %v3355, %v3357
    %v3359 = vrot.slane %v3352, %v3358
    %v3360 = vcombine.high %v3359, %v3359
    %v3361 = vcombine.high %v3057, %v3057
    %v3363 = vunpack.c.l.s4 1983009808
    %v3364 = vunpack.c.0.s8 %v3363
    %v3365 = vlaneseq
    %v3366 = vshrl.u32 %v3365, 7
    %v3367 = vsub.s32 %v3364, %v3366
    %v3368 = vrot.slane %v3361, %v3367
    %v3369 = vcombine.high %v3368, %v3368
    %v3370 = vrot.slane %v3360, 7
    %v3371 = vrot.slane %v3370, 2
    %v3372 = vrot.slane %v3369, 7
    %v3373 = vrot.slane %v3372, 2
    %v3376 = vmul.f32 %v3328, %v3371
    %v3377 = vmul.f32 %v3330, %v3373
    %v3378 = vadd.f32 %v3350, %v3376
    %v3379 = vadd.f32 %v3351, %v3377
    %v3382 = vlaneseq
    %v3383 = vshrl.u32 %v3382, 7
    %v3384 = vsub.s32 0, %v3383
    %v3385 = vrot.slane %v3378, %v3384
    %v3386 = vlaneseq
    %v3387 = vshrl.u32 %v3386, 7
    %v3388 = vsub.s32 0, %v3387
    %v3389 = vrot.slane %v3379, %v3388
    %v3390 = vsel %vm1120, %v3389, %v3385
    %v3391 = vsel %vm843, %v3390, 0
    %3393 = vmatprep.subr.mxu0 0.0
    %3394 = vmatpush1.msra.mxu0 %v99
    %3395 = vmatprep.subr.mxu0 0.0
    %3396 = vmatpush1.msra.mxu0 0.0
    %3397 = vmatprep.subr.mxu0 0.0
    %3398 = vmatpush1.msra.mxu0 0.0
    %3399 = vmatprep.subr.mxu0 0.0
    %3400 = vmatpush1.msra.mxu0 0.0
    %3401 = vmatprep.subr.mxu0 0.0
    %3402 = vmatpush1.msra.mxu0 0.0
    %3403 = vmatprep.subr.mxu0 0.0
    %3404 = vmatpush1.msra.mxu0 0.0
    %3405 = vmatprep.subr.mxu0 0.0
    %3406 = vmatpush1.msra.mxu0 0.0
    %3407 = vmatprep.subr.mxu0 0.0
    %3408 = vmatpush1.msra.mxu0 0.0
    %3409 = vmatprep.subr.mxu0 0.0
    %3410 = vmatpush1.msra.mxu0 0.0
    %3411 = vmatprep.subr.mxu0 0.0
    %3412 = vmatpush1.msra.mxu0 0.0
    %3413 = vmatprep.subr.mxu0 0.0
    %3414 = vmatpush1.msra.mxu0 0.0
    %3415 = vmatprep.subr.mxu0 0.0
    %3416 = vmatpush1.msra.mxu0 0.0
    %3417 = vmatprep.subr.mxu0 0.0
    %3418 = vmatpush1.msra.mxu0 0.0
    %3419 = vmatprep.subr.mxu0 0.0
    %3420 = vmatpush1.msra.mxu0 0.0
    %3421 = vmatprep.subr.mxu0 0.0
    %3422 = vmatpush1.msra.mxu0 0.0
    %3423 = vmatprep.subr.mxu0 0.0
    %3424 = vmatpush1.msra.mxu0 0.0
    %3425 = vmatprep.subr.mxu0 0.0
    %3426 = vmatpush1.msra.mxu0 0.0
    %3427 = vmatprep.subr.mxu0 0.0
    %3428 = vmatpush1.msra.mxu0 0.0
    %3429 = vmatprep.subr.mxu0 0.0
    %3430 = vmatpush1.msra.mxu0 0.0
    %3431 = vmatprep.subr.mxu0 0.0
    %3432 = vmatpush1.msra.mxu0 0.0
    %3433 = vmatprep.subr.mxu0 0.0
    %3434 = vmatpush1.msra.mxu0 0.0
    %3435 = vmatprep.subr.mxu0 0.0
    %3436 = vmatpush1.msra.mxu0 0.0
    %3437 = vmatprep.subr.mxu0 0.0
    %3438 = vmatpush1.msra.mxu0 0.0
    %3439 = vmatprep.subr.mxu0 0.0
    %3440 = vmatpush1.msra.mxu0 0.0
    %3441 = vmatprep.subr.mxu0 0.0
    %3442 = vmatpush1.msra.mxu0 0.0
    %3443 = vmatprep.subr.mxu0 0.0
    %3444 = vmatpush1.msra.mxu0 0.0
    %3445 = vmatprep.subr.mxu0 0.0
    %3446 = vmatpush1.msra.mxu0 0.0
    %3447 = vmatprep.subr.mxu0 0.0
    %3448 = vmatpush1.msra.mxu0 0.0
    %3449 = vmatprep.subr.mxu0 0.0
    %3450 = vmatpush1.msra.mxu0 0.0
    %3451 = vmatprep.subr.mxu0 0.0
    %3452 = vmatpush1.msra.mxu0 0.0
    %3453 = vmatprep.subr.mxu0 0.0
    %3454 = vmatpush1.msra.mxu0 0.0
    %3455 = vmatprep.subr.mxu0 0.0
    %3456 = vmatpush1.msra.mxu0 0.0
    %3457 = vmatprep.mubr.f32.mxu0 0.0
    %3458 = vmatmul.mubr.f32.gmra.mrb[0].mxu0 %v3391
    %v3459 = vpop.f32.mrb[0].mxu0
    %v3460 = vadd.f32 0.0, %v3459
    %v3461 = vpop.f32.mrb[0].mxu0
    %3462 = vdwg.mxu0
    %3463 = vmatprep.subr.mxu0 0.0
    %3464 = vmatpush1.msra.mxu0 %v100
    %3465 = vmatprep.subr.mxu0 0.0
    %3466 = vmatpush1.msra.mxu0 0.0
    %3467 = vmatprep.subr.mxu0 0.0
    %3468 = vmatpush1.msra.mxu0 0.0
    %3469 = vmatprep.subr.mxu0 0.0
    %3470 = vmatpush1.msra.mxu0 0.0
    %3471 = vmatprep.subr.mxu0 0.0
    %3472 = vmatpush1.msra.mxu0 0.0
    %3473 = vmatprep.subr.mxu0 0.0
    %3474 = vmatpush1.msra.mxu0 0.0
    %3475 = vmatprep.subr.mxu0 0.0
    %3476 = vmatpush1.msra.mxu0 0.0
    %3477 = vmatprep.subr.mxu0 0.0
    %3478 = vmatpush1.msra.mxu0 0.0
    %3479 = vmatprep.subr.mxu0 0.0
    %3480 = vmatpush1.msra.mxu0 0.0
    %3481 = vmatprep.subr.mxu0 0.0
    %3482 = vmatpush1.msra.mxu0 0.0
    %3483 = vmatprep.subr.mxu0 0.0
    %3484 = vmatpush1.msra.mxu0 0.0
    %3485 = vmatprep.subr.mxu0 0.0
    %3486 = vmatpush1.msra.mxu0 0.0
    %3487 = vmatprep.subr.mxu0 0.0
    %3488 = vmatpush1.msra.mxu0 0.0
    %3489 = vmatprep.subr.mxu0 0.0
    %3490 = vmatpush1.msra.mxu0 0.0
    %3491 = vmatprep.subr.mxu0 0.0
    %3492 = vmatpush1.msra.mxu0 0.0
    %3493 = vmatprep.subr.mxu0 0.0
    %3494 = vmatpush1.msra.mxu0 0.0
    %3495 = vmatprep.subr.mxu0 0.0
    %3496 = vmatpush1.msra.mxu0 0.0
    %3497 = vmatprep.subr.mxu0 0.0
    %3498 = vmatpush1.msra.mxu0 0.0
    %3499 = vmatprep.subr.mxu0 0.0
    %3500 = vmatpush1.msra.mxu0 0.0
    %3501 = vmatprep.subr.mxu0 0.0
    %3502 = vmatpush1.msra.mxu0 0.0
    %3503 = vmatprep.subr.mxu0 0.0
    %3504 = vmatpush1.msra.mxu0 0.0
    %3505 = vmatprep.subr.mxu0 0.0
    %3506 = vmatpush1.msra.mxu0 0.0
    %3507 = vmatprep.subr.mxu0 0.0
    %3508 = vmatpush1.msra.mxu0 0.0
    %3509 = vmatprep.subr.mxu0 0.0
    %3510 = vmatpush1.msra.mxu0 0.0
    %3511 = vmatprep.subr.mxu0 0.0
    %3512 = vmatpush1.msra.mxu0 0.0
    %3513 = vmatprep.subr.mxu0 0.0
    %3514 = vmatpush1.msra.mxu0 0.0
    %3515 = vmatprep.subr.mxu0 0.0
    %3516 = vmatpush1.msra.mxu0 0.0
    %3517 = vmatprep.subr.mxu0 0.0
    %3518 = vmatpush1.msra.mxu0 0.0
    %3519 = vmatprep.subr.mxu0 0.0
    %3520 = vmatpush1.msra.mxu0 0.0
    %3521 = vmatprep.subr.mxu0 0.0
    %3522 = vmatpush1.msra.mxu0 0.0
    %3523 = vmatprep.subr.mxu0 0.0
    %3524 = vmatpush1.msra.mxu0 0.0
    %3525 = vmatprep.subr.mxu0 0.0
    %3526 = vmatpush1.msra.mxu0 0.0
    %3527 = vmatprep.mubr.f32.mxu0 0.0
    %3528 = vmatmul.mubr.f32.gmra.mrb[0].mxu0 %v3391
    %v3529 = vpop.f32.mrb[0].mxu0
    %v3530 = vadd.f32 0.0, %v3529
    %v3531 = vpop.f32.mrb[0].mxu0
    %3532 = vdwg.mxu0
    %3533 = vmatprep.subr.mxu0 0.0
    %3534 = vmatpush1.msra.mxu0 %v101
    %3535 = vmatprep.subr.mxu0 0.0
    %3536 = vmatpush1.msra.mxu0 0.0
    %3537 = vmatprep.subr.mxu0 0.0
    %3538 = vmatpush1.msra.mxu0 0.0
    %3539 = vmatprep.subr.mxu0 0.0
    %3540 = vmatpush1.msra.mxu0 0.0
    %3541 = vmatprep.subr.mxu0 0.0
    %3542 = vmatpush1.msra.mxu0 0.0
    %3543 = vmatprep.subr.mxu0 0.0
    %3544 = vmatpush1.msra.mxu0 0.0
    %3545 = vmatprep.subr.mxu0 0.0
    %3546 = vmatpush1.msra.mxu0 0.0
    %3547 = vmatprep.subr.mxu0 0.0
    %3548 = vmatpush1.msra.mxu0 0.0
    %3549 = vmatprep.subr.mxu0 0.0
    %3550 = vmatpush1.msra.mxu0 0.0
    %3551 = vmatprep.subr.mxu0 0.0
    %3552 = vmatpush1.msra.mxu0 0.0
    %3553 = vmatprep.subr.mxu0 0.0
    %3554 = vmatpush1.msra.mxu0 0.0
    %3555 = vmatprep.subr.mxu0 0.0
    %3556 = vmatpush1.msra.mxu0 0.0
    %3557 = vmatprep.subr.mxu0 0.0
    %3558 = vmatpush1.msra.mxu0 0.0
    %3559 = vmatprep.subr.mxu0 0.0
    %3560 = vmatpush1.msra.mxu0 0.0
    %3561 = vmatprep.subr.mxu0 0.0
    %3562 = vmatpush1.msra.mxu0 0.0
    %3563 = vmatprep.subr.mxu0 0.0
    %3564 = vmatpush1.msra.mxu0 0.0
    %3565 = vmatprep.subr.mxu0 0.0
    %3566 = vmatpush1.msra.mxu0 0.0
    %3567 = vmatprep.subr.mxu0 0.0
    %3568 = vmatpush1.msra.mxu0 0.0
    %3569 = vmatprep.subr.mxu0 0.0
    %3570 = vmatpush1.msra.mxu0 0.0
    %3571 = vmatprep.subr.mxu0 0.0
    %3572 = vmatpush1.msra.mxu0 0.0
    %3573 = vmatprep.subr.mxu0 0.0
    %3574 = vmatpush1.msra.mxu0 0.0
    %3575 = vmatprep.subr.mxu0 0.0
    %3576 = vmatpush1.msra.mxu0 0.0
    %3577 = vmatprep.subr.mxu0 0.0
    %3578 = vmatpush1.msra.mxu0 0.0
    %3579 = vmatprep.subr.mxu0 0.0
    %3580 = vmatpush1.msra.mxu0 0.0
    %3581 = vmatprep.subr.mxu0 0.0
    %3582 = vmatpush1.msra.mxu0 0.0
    %3583 = vmatprep.subr.mxu0 0.0
    %3584 = vmatpush1.msra.mxu0 0.0
    %3585 = vmatprep.subr.mxu0 0.0
    %3586 = vmatpush1.msra.mxu0 0.0
    %3587 = vmatprep.subr.mxu0 0.0
    %3588 = vmatpush1.msra.mxu0 0.0
    %3589 = vmatprep.subr.mxu0 0.0
    %3590 = vmatpush1.msra.mxu0 0.0
    %3591 = vmatprep.subr.mxu0 0.0
    %3592 = vmatpush1.msra.mxu0 0.0
    %3593 = vmatprep.subr.mxu0 0.0
    %3594 = vmatpush1.msra.mxu0 0.0
    %3595 = vmatprep.subr.mxu0 0.0
    %3596 = vmatpush1.msra.mxu0 0.0
    %3597 = vmatprep.mubr.f32.mxu0 0.0
    %3598 = vmatmul.mubr.f32.gmra.mrb[0].mxu0 %v3391
    %v3599 = vpop.f32.mrb[0].mxu0
    %v3600 = vadd.f32 %v3209, %v3599
    %v3601 = vpop.f32.mrb[0].mxu0
    %3602 = vdwg.mxu0
    %v3605 = vunpack.c.l.s4 1983009808
    %v3606 = vunpack.c.0.s8 %v3605
    %v3607 = vlaneseq
    %v3608 = vshrl.u32 %v3607, 7
    %v3609 = vsub.s32 %v3606, %v3608
    %v3610 = vrot.slane %v3460, %v3609
    %v3611 = vrot.slane %v3610, 7
    %v3614 = vadd.f32 %v577, %v3611
    %v3615 = vadd.f32 %v586, %v3610
    %v3616 = vxor.u32 %v3614, 2147483648
    %v3617 = vxor.u32 %v3615, 2147483648
    %v3618 = vmul.f32 %v3616, 1.442695
    %v3619 = vpow.pop %v3618
    %v3620 = vmul.f32 %v3617, 1.442695
    %v3621 = vpow.pop %v3620
    %v3622 = vadd.f32 %v3619, 1.0
    %v3623 = vadd.f32 %v3621, 1.0
    %v3624 = vrcp.pop %v3622
    %v3625 = vmul.f32 1.0, %v3624
    %v3626 = vrcp.pop %v3623
    %v3627 = vmul.f32 1.0, %v3626
    %v3630 = vunpack.c.l.s4 1983009808
    %v3631 = vunpack.c.0.s8 %v3630
    %v3632 = vlaneseq
    %v3633 = vshrl.u32 %v3632, 7
    %v3634 = vsub.s32 %v3631, %v3633
    %v3635 = vrot.slane %v3530, %v3634
    %v3636 = vrot.slane %v3635, 7
    %v3639 = vadd.f32 %v702, %v3636
    %v3640 = vadd.f32 %v711, %v3635
    %v3641 = vxor.u32 %v3639, 2147483648
    %v3642 = vxor.u32 %v3640, 2147483648
    %v3643 = vmul.f32 %v3641, 1.442695
    %v3644 = vpow.pop %v3643
    %v3645 = vmul.f32 %v3642, 1.442695
    %v3646 = vpow.pop %v3645
    %v3647 = vadd.f32 %v3644, 1.0
    %v3648 = vadd.f32 %v3646, 1.0
    %v3649 = vrcp.pop %v3647
    %v3650 = vmul.f32 1.0, %v3649
    %v3651 = vrcp.pop %v3648
    %v3652 = vmul.f32 1.0, %v3651
    %v3655 = vunpack.c.l.s4 1983009808
    %v3656 = vunpack.c.0.s8 %v3655
    %v3657 = vlaneseq
    %v3658 = vshrl.u32 %v3657, 7
    %v3659 = vsub.s32 %v3656, %v3658
    %v3660 = vrot.slane %v3600, %v3659
    %v3661 = vrot.slane %v3660, 7
    %v3664 = vmul.f32 %v3625, %v3661
    %v3665 = vmul.f32 %v3627, %v3660
    %v3666 = vadd.f32 %v819, %v3664
    %v3667 = vadd.f32 %v828, %v3665
    %v3668 = vtanh.pop %v3666
    %v3669 = vtanh.pop %v3667
    %v3670 = vsub.f32 1.0, %v3650
    %v3671 = vsub.f32 1.0, %v3652
    %v3672 = vmul.f32 %v3670, %v3668
    %v3673 = vmul.f32 %v3671, %v3669
    %v3674 = vrot.slane %v3378, 7
    %v3675 = vrot.slane %v3379, 7
    %v3678 = vmul.f32 %v3650, %v3674
    %v3679 = vmul.f32 %v3652, %v3675
    %v3680 = vadd.f32 %v3672, %v3678
    %v3681 = vadd.f32 %v3673, %v3679
    %v3684 = vlaneseq
    %v3685 = vshrl.u32 %v3684, 7
    %v3686 = vsub.s32 1, %v3685
    %v3687 = vrot.slane %v3680, %v3686
    %v3688 = vlaneseq
    %v3689 = vshrl.u32 %v3688, 7
    %v3690 = vsub.s32 1, %v3689
    %v3691 = vrot.slane %v3681, %v3690
    %v3692 = vsel %vm1120, %v3691, %v3687
    %v3693 = vsel %vm843, %v3692, 0
    %3695 = vmatprep.subr.mxu0 0.0
    %3696 = vmatpush1.msra.mxu0 %v99
    %3697 = vmatprep.subr.mxu0 0.0
    %3698 = vmatpush1.msra.mxu0 0.0
    %3699 = vmatprep.subr.mxu0 0.0
    %3700 = vmatpush1.msra.mxu0 0.0
    %3701 = vmatprep.subr.mxu0 0.0
    %3702 = vmatpush1.msra.mxu0 0.0
    %3703 = vmatprep.subr.mxu0 0.0
    %3704 = vmatpush1.msra.mxu0 0.0
    %3705 = vmatprep.subr.mxu0 0.0
    %3706 = vmatpush1.msra.mxu0 0.0
    %3707 = vmatprep.subr.mxu0 0.0
    %3708 = vmatpush1.msra.mxu0 0.0
    %3709 = vmatprep.subr.mxu0 0.0
    %3710 = vmatpush1.msra.mxu0 0.0
    %3711 = vmatprep.subr.mxu0 0.0
    %3712 = vmatpush1.msra.mxu0 0.0
    %3713 = vmatprep.subr.mxu0 0.0
    %3714 = vmatpush1.msra.mxu0 0.0
    %3715 = vmatprep.subr.mxu0 0.0
    %3716 = vmatpush1.msra.mxu0 0.0
    %3717 = vmatprep.subr.mxu0 0.0
    %3718 = vmatpush1.msra.mxu0 0.0
    %3719 = vmatprep.subr.mxu0 0.0
    %3720 = vmatpush1.msra.mxu0 0.0
    %3721 = vmatprep.subr.mxu0 0.0
    %3722 = vmatpush1.msra.mxu0 0.0
    %3723 = vmatprep.subr.mxu0 0.0
    %3724 = vmatpush1.msra.mxu0 0.0
    %3725 = vmatprep.subr.mxu0 0.0
    %3726 = vmatpush1.msra.mxu0 0.0
    %3727 = vmatprep.subr.mxu0 0.0
    %3728 = vmatpush1.msra.mxu0 0.0
    %3729 = vmatprep.subr.mxu0 0.0
    %3730 = vmatpush1.msra.mxu0 0.0
    %3731 = vmatprep.subr.mxu0 0.0
    %3732 = vmatpush1.msra.mxu0 0.0
    %3733 = vmatprep.subr.mxu0 0.0
    %3734 = vmatpush1.msra.mxu0 0.0
    %3735 = vmatprep.subr.mxu0 0.0
    %3736 = vmatpush1.msra.mxu0 0.0
    %3737 = vmatprep.subr.mxu0 0.0
    %3738 = vmatpush1.msra.mxu0 0.0
    %3739 = vmatprep.subr.mxu0 0.0
    %3740 = vmatpush1.msra.mxu0 0.0
    %3741 = vmatprep.subr.mxu0 0.0
    %3742 = vmatpush1.msra.mxu0 0.0
    %3743 = vmatprep.subr.mxu0 0.0
    %3744 = vmatpush1.msra.mxu0 0.0
    %3745 = vmatprep.subr.mxu0 0.0
    %3746 = vmatpush1.msra.mxu0 0.0
    %3747 = vmatprep.subr.mxu0 0.0
    %3748 = vmatpush1.msra.mxu0 0.0
    %3749 = vmatprep.subr.mxu0 0.0
    %3750 = vmatpush1.msra.mxu0 0.0
    %3751 = vmatprep.subr.mxu0 0.0
    %3752 = vmatpush1.msra.mxu0 0.0
    %3753 = vmatprep.subr.mxu0 0.0
    %3754 = vmatpush1.msra.mxu0 0.0
    %3755 = vmatprep.subr.mxu0 0.0
    %3756 = vmatpush1.msra.mxu0 0.0
    %3757 = vmatprep.subr.mxu0 0.0
    %3758 = vmatpush1.msra.mxu0 0.0
    %3759 = vmatprep.mubr.f32.mxu0 0.0
    %3760 = vmatmul.mubr.f32.gmra.mrb[0].mxu0 %v3693
    %v3761 = vpop.f32.mrb[0].mxu0
    %v3762 = vadd.f32 0.0, %v3761
    %v3763 = vpop.f32.mrb[0].mxu0
    %3764 = vdwg.mxu0
    %3765 = vmatprep.subr.mxu0 0.0
    %3766 = vmatpush1.msra.mxu0 %v100
    %3767 = vmatprep.subr.mxu0 0.0
    %3768 = vmatpush1.msra.mxu0 0.0
    %3769 = vmatprep.subr.mxu0 0.0
    %3770 = vmatpush1.msra.mxu0 0.0
    %3771 = vmatprep.subr.mxu0 0.0
    %3772 = vmatpush1.msra.mxu0 0.0
    %3773 = vmatprep.subr.mxu0 0.0
    %3774 = vmatpush1.msra.mxu0 0.0
    %3775 = vmatprep.subr.mxu0 0.0
    %3776 = vmatpush1.msra.mxu0 0.0
    %3777 = vmatprep.subr.mxu0 0.0
    %3778 = vmatpush1.msra.mxu0 0.0
    %3779 = vmatprep.subr.mxu0 0.0
    %3780 = vmatpush1.msra.mxu0 0.0
    %3781 = vmatprep.subr.mxu0 0.0
    %3782 = vmatpush1.msra.mxu0 0.0
    %3783 = vmatprep.subr.mxu0 0.0
    %3784 = vmatpush1.msra.mxu0 0.0
    %3785 = vmatprep.subr.mxu0 0.0
    %3786 = vmatpush1.msra.mxu0 0.0
    %3787 = vmatprep.subr.mxu0 0.0
    %3788 = vmatpush1.msra.mxu0 0.0
    %3789 = vmatprep.subr.mxu0 0.0
    %3790 = vmatpush1.msra.mxu0 0.0
    %3791 = vmatprep.subr.mxu0 0.0
    %3792 = vmatpush1.msra.mxu0 0.0
    %3793 = vmatprep.subr.mxu0 0.0
    %3794 = vmatpush1.msra.mxu0 0.0
    %3795 = vmatprep.subr.mxu0 0.0
    %3796 = vmatpush1.msra.mxu0 0.0
    %3797 = vmatprep.subr.mxu0 0.0
    %3798 = vmatpush1.msra.mxu0 0.0
    %3799 = vmatprep.subr.mxu0 0.0
    %3800 = vmatpush1.msra.mxu0 0.0
    %3801 = vmatprep.subr.mxu0 0.0
    %3802 = vmatpush1.msra.mxu0 0.0
    %3803 = vmatprep.subr.mxu0 0.0
    %3804 = vmatpush1.msra.mxu0 0.0
    %3805 = vmatprep.subr.mxu0 0.0
    %3806 = vmatpush1.msra.mxu0 0.0
    %3807 = vmatprep.subr.mxu0 0.0
    %3808 = vmatpush1.msra.mxu0 0.0
    %3809 = vmatprep.subr.mxu0 0.0
    %3810 = vmatpush1.msra.mxu0 0.0
    %3811 = vmatprep.subr.mxu0 0.0
    %3812 = vmatpush1.msra.mxu0 0.0
    %3813 = vmatprep.subr.mxu0 0.0
    %3814 = vmatpush1.msra.mxu0 0.0
    %3815 = vmatprep.subr.mxu0 0.0
    %3816 = vmatpush1.msra.mxu0 0.0
    %3817 = vmatprep.subr.mxu0 0.0
    %3818 = vmatpush1.msra.mxu0 0.0
    %3819 = vmatprep.subr.mxu0 0.0
    %3820 = vmatpush1.msra.mxu0 0.0
    %3821 = vmatprep.subr.mxu0 0.0
    %3822 = vmatpush1.msra.mxu0 0.0
    %3823 = vmatprep.subr.mxu0 0.0
    %3824 = vmatpush1.msra.mxu0 0.0
    %3825 = vmatprep.subr.mxu0 0.0
    %3826 = vmatpush1.msra.mxu0 0.0
    %3827 = vmatprep.subr.mxu0 0.0
    %3828 = vmatpush1.msra.mxu0 0.0
    %3829 = vmatprep.mubr.f32.mxu0 0.0
    %3830 = vmatmul.mubr.f32.gmra.mrb[0].mxu0 %v3693
    %v3831 = vpop.f32.mrb[0].mxu0
    %v3832 = vadd.f32 0.0, %v3831
    %v3833 = vpop.f32.mrb[0].mxu0
    %3834 = vdwg.mxu0
    %3835 = vmatprep.subr.mxu0 0.0
    %3836 = vmatpush1.msra.mxu0 %v101
    %3837 = vmatprep.subr.mxu0 0.0
    %3838 = vmatpush1.msra.mxu0 0.0
    %3839 = vmatprep.subr.mxu0 0.0
    %3840 = vmatpush1.msra.mxu0 0.0
    %3841 = vmatprep.subr.mxu0 0.0
    %3842 = vmatpush1.msra.mxu0 0.0
    %3843 = vmatprep.subr.mxu0 0.0
    %3844 = vmatpush1.msra.mxu0 0.0
    %3845 = vmatprep.subr.mxu0 0.0
    %3846 = vmatpush1.msra.mxu0 0.0
    %3847 = vmatprep.subr.mxu0 0.0
    %3848 = vmatpush1.msra.mxu0 0.0
    %3849 = vmatprep.subr.mxu0 0.0
    %3850 = vmatpush1.msra.mxu0 0.0
    %3851 = vmatprep.subr.mxu0 0.0
    %3852 = vmatpush1.msra.mxu0 0.0
    %3853 = vmatprep.subr.mxu0 0.0
    %3854 = vmatpush1.msra.mxu0 0.0
    %3855 = vmatprep.subr.mxu0 0.0
    %3856 = vmatpush1.msra.mxu0 0.0
    %3857 = vmatprep.subr.mxu0 0.0
    %3858 = vmatpush1.msra.mxu0 0.0
    %3859 = vmatprep.subr.mxu0 0.0
    %3860 = vmatpush1.msra.mxu0 0.0
    %3861 = vmatprep.subr.mxu0 0.0
    %3862 = vmatpush1.msra.mxu0 0.0
    %3863 = vmatprep.subr.mxu0 0.0
    %3864 = vmatpush1.msra.mxu0 0.0
    %3865 = vmatprep.subr.mxu0 0.0
    %3866 = vmatpush1.msra.mxu0 0.0
    %3867 = vmatprep.subr.mxu0 0.0
    %3868 = vmatpush1.msra.mxu0 0.0
    %3869 = vmatprep.subr.mxu0 0.0
    %3870 = vmatpush1.msra.mxu0 0.0
    %3871 = vmatprep.subr.mxu0 0.0
    %3872 = vmatpush1.msra.mxu0 0.0
    %3873 = vmatprep.subr.mxu0 0.0
    %3874 = vmatpush1.msra.mxu0 0.0
    %3875 = vmatprep.subr.mxu0 0.0
    %3876 = vmatpush1.msra.mxu0 0.0
    %3877 = vmatprep.subr.mxu0 0.0
    %3878 = vmatpush1.msra.mxu0 0.0
    %3879 = vmatprep.subr.mxu0 0.0
    %3880 = vmatpush1.msra.mxu0 0.0
    %3881 = vmatprep.subr.mxu0 0.0
    %3882 = vmatpush1.msra.mxu0 0.0
    %3883 = vmatprep.subr.mxu0 0.0
    %3884 = vmatpush1.msra.mxu0 0.0
    %3885 = vmatprep.subr.mxu0 0.0
    %3886 = vmatpush1.msra.mxu0 0.0
    %3887 = vmatprep.subr.mxu0 0.0
    %3888 = vmatpush1.msra.mxu0 0.0
    %3889 = vmatprep.subr.mxu0 0.0
    %3890 = vmatpush1.msra.mxu0 0.0
    %3891 = vmatprep.subr.mxu0 0.0
    %3892 = vmatpush1.msra.mxu0 0.0
    %3893 = vmatprep.subr.mxu0 0.0
    %3894 = vmatpush1.msra.mxu0 0.0
    %3895 = vmatprep.subr.mxu0 0.0
    %3896 = vmatpush1.msra.mxu0 0.0
    %3897 = vmatprep.subr.mxu0 0.0
    %3898 = vmatpush1.msra.mxu0 0.0
    %3899 = vmatprep.mubr.f32.mxu0 0.0
    %3900 = vmatmul.mubr.f32.gmra.mrb[0].mxu0 %v3693
    %v3901 = vpop.f32.mrb[0].mxu0
    %v3902 = vadd.f32 %v3209, %v3901
    %v3903 = vpop.f32.mrb[0].mxu0
    %3904 = vdwg.mxu0
    %v3907 = vunpack.c.l.s4 1983009808
    %v3908 = vunpack.c.0.s8 %v3907
    %v3909 = vlaneseq
    %v3910 = vshrl.u32 %v3909, 7
    %v3911 = vsub.s32 %v3908, %v3910
    %v3912 = vrot.slane %v3762, %v3911
    %v3913 = vrot.slane %v3912, 1
    %v3916 = vadd.f32 %v585, %v3912
    %v3917 = vadd.f32 %v593, %v3913
    %v3918 = vxor.u32 %v3916, 2147483648
    %v3919 = vxor.u32 %v3917, 2147483648
    %v3920 = vmul.f32 %v3918, 1.442695
    %v3921 = vpow.pop %v3920
    %v3922 = vmul.f32 %v3919, 1.442695
    %v3923 = vpow.pop %v3922
    %v3924 = vadd.f32 %v3921, 1.0
    %v3925 = vadd.f32 %v3923, 1.0
    %v3926 = vrcp.pop %v3924
    %v3927 = vmul.f32 1.0, %v3926
    %v3928 = vrcp.pop %v3925
    %v3929 = vmul.f32 1.0, %v3928
    %v3932 = vunpack.c.l.s4 1983009808
    %v3933 = vunpack.c.0.s8 %v3932
    %v3934 = vlaneseq
    %v3935 = vshrl.u32 %v3934, 7
    %v3936 = vsub.s32 %v3933, %v3935
    %v3937 = vrot.slane %v3832, %v3936
    %v3938 = vrot.slane %v3937, 1
    %v3941 = vadd.f32 %v710, %v3937
    %v3942 = vadd.f32 %v718, %v3938
    %v3943 = vxor.u32 %v3941, 2147483648
    %v3944 = vxor.u32 %v3942, 2147483648
    %v3945 = vmul.f32 %v3943, 1.442695
    %v3946 = vpow.pop %v3945
    %v3947 = vmul.f32 %v3944, 1.442695
    %v3948 = vpow.pop %v3947
    %v3949 = vadd.f32 %v3946, 1.0
    %v3950 = vadd.f32 %v3948, 1.0
    %v3951 = vrcp.pop %v3949
    %v3952 = vmul.f32 1.0, %v3951
    %v3953 = vrcp.pop %v3950
    %v3954 = vmul.f32 1.0, %v3953
    %v3957 = vunpack.c.l.s4 1983009808
    %v3958 = vunpack.c.0.s8 %v3957
    %v3959 = vlaneseq
    %v3960 = vshrl.u32 %v3959, 7
    %v3961 = vsub.s32 %v3958, %v3960
    %v3962 = vrot.slane %v3902, %v3961
    %v3963 = vrot.slane %v3962, 1
    %v3966 = vmul.f32 %v3927, %v3962
    %v3967 = vmul.f32 %v3929, %v3963
    %v3968 = vadd.f32 %v827, %v3966
    %v3969 = vadd.f32 %v835, %v3967
    %v3970 = vtanh.pop %v3968
    %v3971 = vtanh.pop %v3969
    %v3972 = vsub.f32 1.0, %v3952
    %v3973 = vsub.f32 1.0, %v3954
    %v3974 = vmul.f32 %v3972, %v3970
    %v3975 = vmul.f32 %v3973, %v3971
    %v3976 = vrot.slane %v3680, 7
    %v3977 = vrot.slane %v3976, 2
    %v3978 = vrot.slane %v3681, 7
    %v3979 = vrot.slane %v3978, 2
    %v3982 = vmul.f32 %v3952, %v3977
    %v3983 = vmul.f32 %v3954, %v3979
    %v3984 = vadd.f32 %v3974, %v3982
    %v3985 = vadd.f32 %v3975, %v3983
    %v3988 = vlaneseq
    %v3989 = vshrl.u32 %v3988, 7
    %v3990 = vsub.s32 0, %v3989
    %v3991 = vrot.slane %v3984, %v3990
    %v3992 = vlaneseq
    %v3993 = vshrl.u32 %v3992, 7
    %v3994 = vsub.s32 0, %v3993
    %v3995 = vrot.slane %v3985, %v3994
    %v3996 = vsel %vm1120, %v3995, %v3991
    %v3997 = vsel %vm843, %v3996, 0
    %3999 = vmatprep.subr.mxu0 0.0
    %4000 = vmatpush1.msra.mxu0 %v99
    %4001 = vmatprep.subr.mxu0 0.0
    %4002 = vmatpush1.msra.mxu0 0.0
    %4003 = vmatprep.subr.mxu0 0.0
    %4004 = vmatpush1.msra.mxu0 0.0
    %4005 = vmatprep.subr.mxu0 0.0
    %4006 = vmatpush1.msra.mxu0 0.0
    %4007 = vmatprep.subr.mxu0 0.0
    %4008 = vmatpush1.msra.mxu0 0.0
    %4009 = vmatprep.subr.mxu0 0.0
    %4010 = vmatpush1.msra.mxu0 0.0
    %4011 = vmatprep.subr.mxu0 0.0
    %4012 = vmatpush1.msra.mxu0 0.0
    %4013 = vmatprep.subr.mxu0 0.0
    %4014 = vmatpush1.msra.mxu0 0.0
    %4015 = vmatprep.subr.mxu0 0.0
    %4016 = vmatpush1.msra.mxu0 0.0
    %4017 = vmatprep.subr.mxu0 0.0
    %4018 = vmatpush1.msra.mxu0 0.0
    %4019 = vmatprep.subr.mxu0 0.0
    %4020 = vmatpush1.msra.mxu0 0.0
    %4021 = vmatprep.subr.mxu0 0.0
    %4022 = vmatpush1.msra.mxu0 0.0
    %4023 = vmatprep.subr.mxu0 0.0
    %4024 = vmatpush1.msra.mxu0 0.0
    %4025 = vmatprep.subr.mxu0 0.0
    %4026 = vmatpush1.msra.mxu0 0.0
    %4027 = vmatprep.subr.mxu0 0.0
    %4028 = vmatpush1.msra.mxu0 0.0
    %4029 = vmatprep.subr.mxu0 0.0
    %4030 = vmatpush1.msra.mxu0 0.0
    %4031 = vmatprep.subr.mxu0 0.0
    %4032 = vmatpush1.msra.mxu0 0.0
    %4033 = vmatprep.subr.mxu0 0.0
    %4034 = vmatpush1.msra.mxu0 0.0
    %4035 = vmatprep.subr.mxu0 0.0
    %4036 = vmatpush1.msra.mxu0 0.0
    %4037 = vmatprep.subr.mxu0 0.0
    %4038 = vmatpush1.msra.mxu0 0.0
    %4039 = vmatprep.subr.mxu0 0.0
    %4040 = vmatpush1.msra.mxu0 0.0
    %4041 = vmatprep.subr.mxu0 0.0
    %4042 = vmatpush1.msra.mxu0 0.0
    %4043 = vmatprep.subr.mxu0 0.0
    %4044 = vmatpush1.msra.mxu0 0.0
    %4045 = vmatprep.subr.mxu0 0.0
    %4046 = vmatpush1.msra.mxu0 0.0
    %4047 = vmatprep.subr.mxu0 0.0
    %4048 = vmatpush1.msra.mxu0 0.0
    %4049 = vmatprep.subr.mxu0 0.0
    %4050 = vmatpush1.msra.mxu0 0.0
    %4051 = vmatprep.subr.mxu0 0.0
    %4052 = vmatpush1.msra.mxu0 0.0
    %4053 = vmatprep.subr.mxu0 0.0
    %4054 = vmatpush1.msra.mxu0 0.0
    %4055 = vmatprep.subr.mxu0 0.0
    %4056 = vmatpush1.msra.mxu0 0.0
    %4057 = vmatprep.subr.mxu0 0.0
    %4058 = vmatpush1.msra.mxu0 0.0
    %4059 = vmatprep.subr.mxu0 0.0
    %4060 = vmatpush1.msra.mxu0 0.0
    %4061 = vmatprep.subr.mxu0 0.0
    %4062 = vmatpush1.msra.mxu0 0.0
    %4063 = vmatprep.mubr.f32.mxu0 0.0
    %4064 = vmatmul.mubr.f32.gmra.mrb[0].mxu0 %v3997
    %v4065 = vpop.f32.mrb[0].mxu0
    %v4066 = vadd.f32 0.0, %v4065
    %v4067 = vpop.f32.mrb[0].mxu0
    %4068 = vdwg.mxu0
    %4069 = vmatprep.subr.mxu0 0.0
    %4070 = vmatpush1.msra.mxu0 %v100
    %4071 = vmatprep.subr.mxu0 0.0
    %4072 = vmatpush1.msra.mxu0 0.0
    %4073 = vmatprep.subr.mxu0 0.0
    %4074 = vmatpush1.msra.mxu0 0.0
    %4075 = vmatprep.subr.mxu0 0.0
    %4076 = vmatpush1.msra.mxu0 0.0
    %4077 = vmatprep.subr.mxu0 0.0
    %4078 = vmatpush1.msra.mxu0 0.0
    %4079 = vmatprep.subr.mxu0 0.0
    %4080 = vmatpush1.msra.mxu0 0.0
    %4081 = vmatprep.subr.mxu0 0.0
    %4082 = vmatpush1.msra.mxu0 0.0
    %4083 = vmatprep.subr.mxu0 0.0
    %4084 = vmatpush1.msra.mxu0 0.0
    %4085 = vmatprep.subr.mxu0 0.0
    %4086 = vmatpush1.msra.mxu0 0.0
    %4087 = vmatprep.subr.mxu0 0.0
    %4088 = vmatpush1.msra.mxu0 0.0
    %4089 = vmatprep.subr.mxu0 0.0
    %4090 = vmatpush1.msra.mxu0 0.0
    %4091 = vmatprep.subr.mxu0 0.0
    %4092 = vmatpush1.msra.mxu0 0.0
    %4093 = vmatprep.subr.mxu0 0.0
    %4094 = vmatpush1.msra.mxu0 0.0
    %4095 = vmatprep.subr.mxu0 0.0
    %4096 = vmatpush1.msra.mxu0 0.0
    %4097 = vmatprep.subr.mxu0 0.0
    %4098 = vmatpush1.msra.mxu0 0.0
    %4099 = vmatprep.subr.mxu0 0.0
    %4100 = vmatpush1.msra.mxu0 0.0
    %4101 = vmatprep.subr.mxu0 0.0
    %4102 = vmatpush1.msra.mxu0 0.0
    %4103 = vmatprep.subr.mxu0 0.0
    %4104 = vmatpush1.msra.mxu0 0.0
    %4105 = vmatprep.subr.mxu0 0.0
    %4106 = vmatpush1.msra.mxu0 0.0
    %4107 = vmatprep.subr.mxu0 0.0
    %4108 = vmatpush1.msra.mxu0 0.0
    %4109 = vmatprep.subr.mxu0 0.0
    %4110 = vmatpush1.msra.mxu0 0.0
    %4111 = vmatprep.subr.mxu0 0.0
    %4112 = vmatpush1.msra.mxu0 0.0
    %4113 = vmatprep.subr.mxu0 0.0
    %4114 = vmatpush1.msra.mxu0 0.0
    %4115 = vmatprep.subr.mxu0 0.0
    %4116 = vmatpush1.msra.mxu0 0.0
    %4117 = vmatprep.subr.mxu0 0.0
    %4118 = vmatpush1.msra.mxu0 0.0
    %4119 = vmatprep.subr.mxu0 0.0
    %4120 = vmatpush1.msra.mxu0 0.0
    %4121 = vmatprep.subr.mxu0 0.0
    %4122 = vmatpush1.msra.mxu0 0.0
    %4123 = vmatprep.subr.mxu0 0.0
    %4124 = vmatpush1.msra.mxu0 0.0
    %4125 = vmatprep.subr.mxu0 0.0
    %4126 = vmatpush1.msra.mxu0 0.0
    %4127 = vmatprep.subr.mxu0 0.0
    %4128 = vmatpush1.msra.mxu0 0.0
    %4129 = vmatprep.subr.mxu0 0.0
    %4130 = vmatpush1.msra.mxu0 0.0
    %4131 = vmatprep.subr.mxu0 0.0
    %4132 = vmatpush1.msra.mxu0 0.0
    %4133 = vmatprep.mubr.f32.mxu0 0.0
    %4134 = vmatmul.mubr.f32.gmra.mrb[0].mxu0 %v3997
    %v4135 = vpop.f32.mrb[0].mxu0
    %v4136 = vadd.f32 0.0, %v4135
    %v4137 = vpop.f32.mrb[0].mxu0
    %4138 = vdwg.mxu0
    %4139 = vmatprep.subr.mxu0 0.0
    %4140 = vmatpush1.msra.mxu0 %v101
    %4141 = vmatprep.subr.mxu0 0.0
    %4142 = vmatpush1.msra.mxu0 0.0
    %4143 = vmatprep.subr.mxu0 0.0
    %4144 = vmatpush1.msra.mxu0 0.0
    %4145 = vmatprep.subr.mxu0 0.0
    %4146 = vmatpush1.msra.mxu0 0.0
    %4147 = vmatprep.subr.mxu0 0.0
    %4148 = vmatpush1.msra.mxu0 0.0
    %4149 = vmatprep.subr.mxu0 0.0
    %4150 = vmatpush1.msra.mxu0 0.0
    %4151 = vmatprep.subr.mxu0 0.0
    %4152 = vmatpush1.msra.mxu0 0.0
    %4153 = vmatprep.subr.mxu0 0.0
    %4154 = vmatpush1.msra.mxu0 0.0
    %4155 = vmatprep.subr.mxu0 0.0
    %4156 = vmatpush1.msra.mxu0 0.0
    %4157 = vmatprep.subr.mxu0 0.0
    %4158 = vmatpush1.msra.mxu0 0.0
    %4159 = vmatprep.subr.mxu0 0.0
    %4160 = vmatpush1.msra.mxu0 0.0
    %4161 = vmatprep.subr.mxu0 0.0
    %4162 = vmatpush1.msra.mxu0 0.0
    %4163 = vmatprep.subr.mxu0 0.0
    %4164 = vmatpush1.msra.mxu0 0.0
    %4165 = vmatprep.subr.mxu0 0.0
    %4166 = vmatpush1.msra.mxu0 0.0
    %4167 = vmatprep.subr.mxu0 0.0
    %4168 = vmatpush1.msra.mxu0 0.0
    %4169 = vmatprep.subr.mxu0 0.0
    %4170 = vmatpush1.msra.mxu0 0.0
    %4171 = vmatprep.subr.mxu0 0.0
    %4172 = vmatpush1.msra.mxu0 0.0
    %4173 = vmatprep.subr.mxu0 0.0
    %4174 = vmatpush1.msra.mxu0 0.0
    %4175 = vmatprep.subr.mxu0 0.0
    %4176 = vmatpush1.msra.mxu0 0.0
    %4177 = vmatprep.subr.mxu0 0.0
    %4178 = vmatpush1.msra.mxu0 0.0
    %4179 = vmatprep.subr.mxu0 0.0
    %4180 = vmatpush1.msra.mxu0 0.0
    %4181 = vmatprep.subr.mxu0 0.0
    %4182 = vmatpush1.msra.mxu0 0.0
    %4183 = vmatprep.subr.mxu0 0.0
    %4184 = vmatpush1.msra.mxu0 0.0
    %4185 = vmatprep.subr.mxu0 0.0
    %4186 = vmatpush1.msra.mxu0 0.0
    %4187 = vmatprep.subr.mxu0 0.0
    %4188 = vmatpush1.msra.mxu0 0.0
    %4189 = vmatprep.subr.mxu0 0.0
    %4190 = vmatpush1.msra.mxu0 0.0
    %4191 = vmatprep.subr.mxu0 0.0
    %4192 = vmatpush1.msra.mxu0 0.0
    %4193 = vmatprep.subr.mxu0 0.0
    %4194 = vmatpush1.msra.mxu0 0.0
    %4195 = vmatprep.subr.mxu0 0.0
    %4196 = vmatpush1.msra.mxu0 0.0
    %4197 = vmatprep.subr.mxu0 0.0
    %4198 = vmatpush1.msra.mxu0 0.0
    %4199 = vmatprep.subr.mxu0 0.0
    %4200 = vmatpush1.msra.mxu0 0.0
    %4201 = vmatprep.subr.mxu0 0.0
    %4202 = vmatpush1.msra.mxu0 0.0
    %4203 = vmatprep.mubr.f32.mxu0 0.0
    %4204 = vmatmul.mubr.f32.gmra.mrb[0].mxu0 %v3997
    %v4205 = vpop.f32.mrb[0].mxu0
    %v4206 = vadd.f32 %v3209, %v4205
    %v4207 = vpop.f32.mrb[0].mxu0
    %4208 = vdwg.mxu0
    %v4211 = vunpack.c.l.s4 1983009808
    %v4212 = vunpack.c.0.s8 %v4211
    %v4213 = vlaneseq
    %v4214 = vshrl.u32 %v4213, 7
    %v4215 = vsub.s32 %v4212, %v4214
    %v4216 = vrot.slane %v4066, %v4215
    %v4217 = vrot.slane %v4216, 7
    %v4220 = vadd.f32 %v585, %v4217
    %v4221 = vadd.f32 %v593, %v4216
    %v4222 = vxor.u32 %v4220, 2147483648
    %v4223 = vxor.u32 %v4221, 2147483648
    %v4224 = vmul.f32 %v4222, 1.442695
    %v4225 = vpow.pop %v4224
    %v4226 = vmul.f32 %v4223, 1.442695
    %v4227 = vpow.pop %v4226
    %v4228 = vadd.f32 %v4225, 1.0
    %v4229 = vadd.f32 %v4227, 1.0
    %v4230 = vrcp.pop %v4228
    %v4231 = vmul.f32 1.0, %v4230
    %v4232 = vrcp.pop %v4229
    %v4233 = vmul.f32 1.0, %v4232
    %v4236 = vunpack.c.l.s4 1983009808
    %v4237 = vunpack.c.0.s8 %v4236
    %v4238 = vlaneseq
    %v4239 = vshrl.u32 %v4238, 7
    %v4240 = vsub.s32 %v4237, %v4239
    %v4241 = vrot.slane %v4136, %v4240
    %v4242 = vrot.slane %v4241, 7
    %v4245 = vadd.f32 %v710, %v4242
    %v4246 = vadd.f32 %v718, %v4241
    %v4247 = vxor.u32 %v4245, 2147483648
    %v4248 = vxor.u32 %v4246, 2147483648
    %v4249 = vmul.f32 %v4247, 1.442695
    %v4250 = vpow.pop %v4249
    %v4251 = vmul.f32 %v4248, 1.442695
    %v4252 = vpow.pop %v4251
    %v4253 = vadd.f32 %v4250, 1.0
    %v4254 = vadd.f32 %v4252, 1.0
    %v4255 = vrcp.pop %v4253
    %v4256 = vmul.f32 1.0, %v4255
    %v4257 = vrcp.pop %v4254
    %v4258 = vmul.f32 1.0, %v4257
    %v4261 = vunpack.c.l.s4 1983009808
    %v4262 = vunpack.c.0.s8 %v4261
    %v4263 = vlaneseq
    %v4264 = vshrl.u32 %v4263, 7
    %v4265 = vsub.s32 %v4262, %v4264
    %v4266 = vrot.slane %v4206, %v4265
    %v4267 = vrot.slane %v4266, 7
    %v4270 = vmul.f32 %v4231, %v4267
    %v4271 = vmul.f32 %v4233, %v4266
    %v4272 = vadd.f32 %v827, %v4270
    %v4273 = vadd.f32 %v835, %v4271
    %v4274 = vtanh.pop %v4272
    %v4275 = vtanh.pop %v4273
    %v4276 = vsub.f32 1.0, %v4256
    %v4277 = vsub.f32 1.0, %v4258
    %v4278 = vmul.f32 %v4276, %v4274
    %v4279 = vmul.f32 %v4277, %v4275
    %v4280 = vrot.slane %v3984, 7
    %v4281 = vrot.slane %v3985, 7
    %v4284 = vmul.f32 %v4256, %v4280
    %v4285 = vmul.f32 %v4258, %v4281
    %v4286 = vadd.f32 %v4278, %v4284
    %v4287 = vadd.f32 %v4279, %v4285
    %v4290 = vlaneseq
    %v4291 = vshrl.u32 %v4290, 7
    %v4292 = vsub.s32 1, %v4291
    %v4293 = vrot.slane %v4286, %v4292
    %v4294 = vlaneseq
    %v4295 = vshrl.u32 %v4294, 7
    %v4296 = vsub.s32 1, %v4295
    %v4297 = vrot.slane %v4287, %v4296
    %v4298 = vsel %vm1120, %v4297, %v4293
    %v4299 = vsel %vm843, %v4298, 0
    %4301 = vmatprep.subr.mxu0 0.0
    %4302 = vmatpush1.msra.mxu0 %v99
    %4303 = vmatprep.subr.mxu0 0.0
    %4304 = vmatpush1.msra.mxu0 0.0
    %4305 = vmatprep.subr.mxu0 0.0
    %4306 = vmatpush1.msra.mxu0 0.0
    %4307 = vmatprep.subr.mxu0 0.0
    %4308 = vmatpush1.msra.mxu0 0.0
    %4309 = vmatprep.subr.mxu0 0.0
    %4310 = vmatpush1.msra.mxu0 0.0
    %4311 = vmatprep.subr.mxu0 0.0
    %4312 = vmatpush1.msra.mxu0 0.0
    %4313 = vmatprep.subr.mxu0 0.0
    %4314 = vmatpush1.msra.mxu0 0.0
    %4315 = vmatprep.subr.mxu0 0.0
    %4316 = vmatpush1.msra.mxu0 0.0
    %4317 = vmatprep.subr.mxu0 0.0
    %4318 = vmatpush1.msra.mxu0 0.0
    %4319 = vmatprep.subr.mxu0 0.0
    %4320 = vmatpush1.msra.mxu0 0.0
    %4321 = vmatprep.subr.mxu0 0.0
    %4322 = vmatpush1.msra.mxu0 0.0
    %4323 = vmatprep.subr.mxu0 0.0
    %4324 = vmatpush1.msra.mxu0 0.0
    %4325 = vmatprep.subr.mxu0 0.0
    %4326 = vmatpush1.msra.mxu0 0.0
    %4327 = vmatprep.subr.mxu0 0.0
    %4328 = vmatpush1.msra.mxu0 0.0
    %4329 = vmatprep.subr.mxu0 0.0
    %4330 = vmatpush1.msra.mxu0 0.0
    %4331 = vmatprep.subr.mxu0 0.0
    %4332 = vmatpush1.msra.mxu0 0.0
    %4333 = vmatprep.subr.mxu0 0.0
    %4334 = vmatpush1.msra.mxu0 0.0
    %4335 = vmatprep.subr.mxu0 0.0
    %4336 = vmatpush1.msra.mxu0 0.0
    %4337 = vmatprep.subr.mxu0 0.0
    %4338 = vmatpush1.msra.mxu0 0.0
    %4339 = vmatprep.subr.mxu0 0.0
    %4340 = vmatpush1.msra.mxu0 0.0
    %4341 = vmatprep.subr.mxu0 0.0
    %4342 = vmatpush1.msra.mxu0 0.0
    %4343 = vmatprep.subr.mxu0 0.0
    %4344 = vmatpush1.msra.mxu0 0.0
    %4345 = vmatprep.subr.mxu0 0.0
    %4346 = vmatpush1.msra.mxu0 0.0
    %4347 = vmatprep.subr.mxu0 0.0
    %4348 = vmatpush1.msra.mxu0 0.0
    %4349 = vmatprep.subr.mxu0 0.0
    %4350 = vmatpush1.msra.mxu0 0.0
    %4351 = vmatprep.subr.mxu0 0.0
    %4352 = vmatpush1.msra.mxu0 0.0
    %4353 = vmatprep.subr.mxu0 0.0
    %4354 = vmatpush1.msra.mxu0 0.0
    %4355 = vmatprep.subr.mxu0 0.0
    %4356 = vmatpush1.msra.mxu0 0.0
    %4357 = vmatprep.subr.mxu0 0.0
    %4358 = vmatpush1.msra.mxu0 0.0
    %4359 = vmatprep.subr.mxu0 0.0
    %4360 = vmatpush1.msra.mxu0 0.0
    %4361 = vmatprep.subr.mxu0 0.0
    %4362 = vmatpush1.msra.mxu0 0.0
    %4363 = vmatprep.subr.mxu0 0.0
    %4364 = vmatpush1.msra.mxu0 0.0
    %4365 = vmatprep.mubr.f32.mxu0 0.0
    %4366 = vmatmul.mubr.f32.gmra.mrb[0].mxu0 %v4299
    %v4367 = vpop.f32.mrb[0].mxu0
    %v4368 = vadd.f32 0.0, %v4367
    %v4369 = vpop.f32.mrb[0].mxu0
    %4370 = vdwg.mxu0
    %4371 = vmatprep.subr.mxu0 0.0
    %4372 = vmatpush1.msra.mxu0 %v100
    %4373 = vmatprep.subr.mxu0 0.0
    %4374 = vmatpush1.msra.mxu0 0.0
    %4375 = vmatprep.subr.mxu0 0.0
    %4376 = vmatpush1.msra.mxu0 0.0
    %4377 = vmatprep.subr.mxu0 0.0
    %4378 = vmatpush1.msra.mxu0 0.0
    %4379 = vmatprep.subr.mxu0 0.0
    %4380 = vmatpush1.msra.mxu0 0.0
    %4381 = vmatprep.subr.mxu0 0.0
    %4382 = vmatpush1.msra.mxu0 0.0
    %4383 = vmatprep.subr.mxu0 0.0
    %4384 = vmatpush1.msra.mxu0 0.0
    %4385 = vmatprep.subr.mxu0 0.0
    %4386 = vmatpush1.msra.mxu0 0.0
    %4387 = vmatprep.subr.mxu0 0.0
    %4388 = vmatpush1.msra.mxu0 0.0
    %4389 = vmatprep.subr.mxu0 0.0
    %4390 = vmatpush1.msra.mxu0 0.0
    %4391 = vmatprep.subr.mxu0 0.0
    %4392 = vmatpush1.msra.mxu0 0.0
    %4393 = vmatprep.subr.mxu0 0.0
    %4394 = vmatpush1.msra.mxu0 0.0
    %4395 = vmatprep.subr.mxu0 0.0
    %4396 = vmatpush1.msra.mxu0 0.0
    %4397 = vmatprep.subr.mxu0 0.0
    %4398 = vmatpush1.msra.mxu0 0.0
    %4399 = vmatprep.subr.mxu0 0.0
    %4400 = vmatpush1.msra.mxu0 0.0
    %4401 = vmatprep.subr.mxu0 0.0
    %4402 = vmatpush1.msra.mxu0 0.0
    %4403 = vmatprep.subr.mxu0 0.0
    %4404 = vmatpush1.msra.mxu0 0.0
    %4405 = vmatprep.subr.mxu0 0.0
    %4406 = vmatpush1.msra.mxu0 0.0
    %4407 = vmatprep.subr.mxu0 0.0
    %4408 = vmatpush1.msra.mxu0 0.0
    %4409 = vmatprep.subr.mxu0 0.0
    %4410 = vmatpush1.msra.mxu0 0.0
    %4411 = vmatprep.subr.mxu0 0.0
    %4412 = vmatpush1.msra.mxu0 0.0
    %4413 = vmatprep.subr.mxu0 0.0
    %4414 = vmatpush1.msra.mxu0 0.0
    %4415 = vmatprep.subr.mxu0 0.0
    %4416 = vmatpush1.msra.mxu0 0.0
    %4417 = vmatprep.subr.mxu0 0.0
    %4418 = vmatpush1.msra.mxu0 0.0
    %4419 = vmatprep.subr.mxu0 0.0
    %4420 = vmatpush1.msra.mxu0 0.0
    %4421 = vmatprep.subr.mxu0 0.0
    %4422 = vmatpush1.msra.mxu0 0.0
    %4423 = vmatprep.subr.mxu0 0.0
    %4424 = vmatpush1.msra.mxu0 0.0
    %4425 = vmatprep.subr.mxu0 0.0
    %4426 = vmatpush1.msra.mxu0 0.0
    %4427 = vmatprep.subr.mxu0 0.0
    %4428 = vmatpush1.msra.mxu0 0.0
    %4429 = vmatprep.subr.mxu0 0.0
    %4430 = vmatpush1.msra.mxu0 0.0
    %4431 = vmatprep.subr.mxu0 0.0
    %4432 = vmatpush1.msra.mxu0 0.0
    %4433 = vmatprep.subr.mxu0 0.0
    %4434 = vmatpush1.msra.mxu0 0.0
    %4435 = vmatprep.mubr.f32.mxu0 0.0
    %4436 = vmatmul.mubr.f32.gmra.mrb[0].mxu0 %v4299
    %v4437 = vpop.f32.mrb[0].mxu0
    %v4438 = vadd.f32 0.0, %v4437
    %v4439 = vpop.f32.mrb[0].mxu0
    %4440 = vdwg.mxu0
    %4441 = vmatprep.subr.mxu0 0.0
    %4442 = vmatpush1.msra.mxu0 %v101
    %4443 = vmatprep.subr.mxu0 0.0
    %4444 = vmatpush1.msra.mxu0 0.0
    %4445 = vmatprep.subr.mxu0 0.0
    %4446 = vmatpush1.msra.mxu0 0.0
    %4447 = vmatprep.subr.mxu0 0.0
    %4448 = vmatpush1.msra.mxu0 0.0
    %4449 = vmatprep.subr.mxu0 0.0
    %4450 = vmatpush1.msra.mxu0 0.0
    %4451 = vmatprep.subr.mxu0 0.0
    %4452 = vmatpush1.msra.mxu0 0.0
    %4453 = vmatprep.subr.mxu0 0.0
    %4454 = vmatpush1.msra.mxu0 0.0
    %4455 = vmatprep.subr.mxu0 0.0
    %4456 = vmatpush1.msra.mxu0 0.0
    %4457 = vmatprep.subr.mxu0 0.0
    %4458 = vmatpush1.msra.mxu0 0.0
    %4459 = vmatprep.subr.mxu0 0.0
    %4460 = vmatpush1.msra.mxu0 0.0
    %4461 = vmatprep.subr.mxu0 0.0
    %4462 = vmatpush1.msra.mxu0 0.0
    %4463 = vmatprep.subr.mxu0 0.0
    %4464 = vmatpush1.msra.mxu0 0.0
    %4465 = vmatprep.subr.mxu0 0.0
    %4466 = vmatpush1.msra.mxu0 0.0
    %4467 = vmatprep.subr.mxu0 0.0
    %4468 = vmatpush1.msra.mxu0 0.0
    %4469 = vmatprep.subr.mxu0 0.0
    %4470 = vmatpush1.msra.mxu0 0.0
    %4471 = vmatprep.subr.mxu0 0.0
    %4472 = vmatpush1.msra.mxu0 0.0
    %4473 = vmatprep.subr.mxu0 0.0
    %4474 = vmatpush1.msra.mxu0 0.0
    %4475 = vmatprep.subr.mxu0 0.0
    %4476 = vmatpush1.msra.mxu0 0.0
    %4477 = vmatprep.subr.mxu0 0.0
    %4478 = vmatpush1.msra.mxu0 0.0
    %4479 = vmatprep.subr.mxu0 0.0
    %4480 = vmatpush1.msra.mxu0 0.0
    %4481 = vmatprep.subr.mxu0 0.0
    %4482 = vmatpush1.msra.mxu0 0.0
    %4483 = vmatprep.subr.mxu0 0.0
    %4484 = vmatpush1.msra.mxu0 0.0
    %4485 = vmatprep.subr.mxu0 0.0
    %4486 = vmatpush1.msra.mxu0 0.0
    %4487 = vmatprep.subr.mxu0 0.0
    %4488 = vmatpush1.msra.mxu0 0.0
    %4489 = vmatprep.subr.mxu0 0.0
    %4490 = vmatpush1.msra.mxu0 0.0
    %4491 = vmatprep.subr.mxu0 0.0
    %4492 = vmatpush1.msra.mxu0 0.0
    %4493 = vmatprep.subr.mxu0 0.0
    %4494 = vmatpush1.msra.mxu0 0.0
    %4495 = vmatprep.subr.mxu0 0.0
    %4496 = vmatpush1.msra.mxu0 0.0
    %4497 = vmatprep.subr.mxu0 0.0
    %4498 = vmatpush1.msra.mxu0 0.0
    %4499 = vmatprep.subr.mxu0 0.0
    %4500 = vmatpush1.msra.mxu0 0.0
    %4501 = vmatprep.subr.mxu0 0.0
    %4502 = vmatpush1.msra.mxu0 0.0
    %4503 = vmatprep.subr.mxu0 0.0
    %4504 = vmatpush1.msra.mxu0 0.0
    %4505 = vmatprep.mubr.f32.mxu0 0.0
    %4506 = vmatmul.mubr.f32.gmra.mrb[0].mxu0 %v4299
    %v4507 = vpop.f32.mrb[0].mxu0
    %v4508 = vadd.f32 %v3209, %v4507
    %v4509 = vpop.f32.mrb[0].mxu0
    %4510 = vdwg.mxu0
    %v4513 = vunpack.c.l.s4 1983009808
    %v4514 = vunpack.c.0.s8 %v4513
    %v4515 = vlaneseq
    %v4516 = vshrl.u32 %v4515, 7
    %v4517 = vsub.s32 %v4514, %v4516
    %v4518 = vrot.slane %v4368, %v4517
    %v4519 = vrot.slane %v4518, 1
    %v4522 = vadd.f32 %v584, %v4518
    %v4523 = vadd.f32 %v594, %v4519
    %v4524 = vxor.u32 %v4522, 2147483648
    %v4525 = vxor.u32 %v4523, 2147483648
    %v4526 = vmul.f32 %v4524, 1.442695
    %v4527 = vpow.pop %v4526
    %v4528 = vmul.f32 %v4525, 1.442695
    %v4529 = vpow.pop %v4528
    %v4530 = vadd.f32 %v4527, 1.0
    %v4531 = vadd.f32 %v4529, 1.0
    %v4532 = vrcp.pop %v4530
    %v4533 = vmul.f32 1.0, %v4532
    %v4534 = vrcp.pop %v4531
    %v4535 = vmul.f32 1.0, %v4534
    %v4538 = vunpack.c.l.s4 1983009808
    %v4539 = vunpack.c.0.s8 %v4538
    %v4540 = vlaneseq
    %v4541 = vshrl.u32 %v4540, 7
    %v4542 = vsub.s32 %v4539, %v4541
    %v4543 = vrot.slane %v4438, %v4542
    %v4544 = vrot.slane %v4543, 1
    %v4547 = vadd.f32 %v709, %v4543
    %v4548 = vadd.f32 %v719, %v4544
    %v4549 = vxor.u32 %v4547, 2147483648
    %v4550 = vxor.u32 %v4548, 2147483648
    %v4551 = vmul.f32 %v4549, 1.442695
    %v4552 = vpow.pop %v4551
    %v4553 = vmul.f32 %v4550, 1.442695
    %v4554 = vpow.pop %v4553
    %v4555 = vadd.f32 %v4552, 1.0
    %v4556 = vadd.f32 %v4554, 1.0
    %v4557 = vrcp.pop %v4555
    %v4558 = vmul.f32 1.0, %v4557
    %v4559 = vrcp.pop %v4556
    %v4560 = vmul.f32 1.0, %v4559
    %v4563 = vunpack.c.l.s4 1983009808
    %v4564 = vunpack.c.0.s8 %v4563
    %v4565 = vlaneseq
    %v4566 = vshrl.u32 %v4565, 7
    %v4567 = vsub.s32 %v4564, %v4566
    %v4568 = vrot.slane %v4508, %v4567
    %v4569 = vrot.slane %v4568, 1
    %v4572 = vmul.f32 %v4533, %v4568
    %v4573 = vmul.f32 %v4535, %v4569
    %v4574 = vadd.f32 %v826, %v4572
    %v4575 = vadd.f32 %v836, %v4573
    %v4576 = vtanh.pop %v4574
    %v4577 = vtanh.pop %v4575
    %v4578 = vsub.f32 1.0, %v4558
    %v4579 = vsub.f32 1.0, %v4560
    %v4580 = vmul.f32 %v4578, %v4576
    %v4581 = vmul.f32 %v4579, %v4577
    %v4582 = vrot.slane %v4286, 7
    %v4583 = vrot.slane %v4582, 2
    %v4584 = vrot.slane %v4287, 7
    %v4585 = vrot.slane %v4584, 2
    %v4588 = vmul.f32 %v4558, %v4583
    %v4589 = vmul.f32 %v4560, %v4585
    %v4590 = vadd.f32 %v4580, %v4588
    %v4591 = vadd.f32 %v4581, %v4589
    %v4594 = vlaneseq
    %v4595 = vshrl.u32 %v4594, 7
    %v4596 = vsub.s32 0, %v4595
    %v4597 = vrot.slane %v4590, %v4596
    %v4598 = vlaneseq
    %v4599 = vshrl.u32 %v4598, 7
    %v4600 = vsub.s32 0, %v4599
    %v4601 = vrot.slane %v4591, %v4600
    %v4602 = vsel %vm1120, %v4601, %v4597
    %v4603 = vsel %vm843, %v4602, 0
    %4605 = vmatprep.subr.mxu0 0.0
    %4606 = vmatpush1.msra.mxu0 %v99
    %4607 = vmatprep.subr.mxu0 0.0
    %4608 = vmatpush1.msra.mxu0 0.0
    %4609 = vmatprep.subr.mxu0 0.0
    %4610 = vmatpush1.msra.mxu0 0.0
    %4611 = vmatprep.subr.mxu0 0.0
    %4612 = vmatpush1.msra.mxu0 0.0
    %4613 = vmatprep.subr.mxu0 0.0
    %4614 = vmatpush1.msra.mxu0 0.0
    %4615 = vmatprep.subr.mxu0 0.0
    %4616 = vmatpush1.msra.mxu0 0.0
    %4617 = vmatprep.subr.mxu0 0.0
    %4618 = vmatpush1.msra.mxu0 0.0
    %4619 = vmatprep.subr.mxu0 0.0
    %4620 = vmatpush1.msra.mxu0 0.0
    %4621 = vmatprep.subr.mxu0 0.0
    %4622 = vmatpush1.msra.mxu0 0.0
    %4623 = vmatprep.subr.mxu0 0.0
    %4624 = vmatpush1.msra.mxu0 0.0
    %4625 = vmatprep.subr.mxu0 0.0
    %4626 = vmatpush1.msra.mxu0 0.0
    %4627 = vmatprep.subr.mxu0 0.0
    %4628 = vmatpush1.msra.mxu0 0.0
    %4629 = vmatprep.subr.mxu0 0.0
    %4630 = vmatpush1.msra.mxu0 0.0
    %4631 = vmatprep.subr.mxu0 0.0
    %4632 = vmatpush1.msra.mxu0 0.0
    %4633 = vmatprep.subr.mxu0 0.0
    %4634 = vmatpush1.msra.mxu0 0.0
    %4635 = vmatprep.subr.mxu0 0.0
    %4636 = vmatpush1.msra.mxu0 0.0
    %4637 = vmatprep.subr.mxu0 0.0
    %4638 = vmatpush1.msra.mxu0 0.0
    %4639 = vmatprep.subr.mxu0 0.0
    %4640 = vmatpush1.msra.mxu0 0.0
    %4641 = vmatprep.subr.mxu0 0.0
    %4642 = vmatpush1.msra.mxu0 0.0
    %4643 = vmatprep.subr.mxu0 0.0
    %4644 = vmatpush1.msra.mxu0 0.0
    %4645 = vmatprep.subr.mxu0 0.0
    %4646 = vmatpush1.msra.mxu0 0.0
    %4647 = vmatprep.subr.mxu0 0.0
    %4648 = vmatpush1.msra.mxu0 0.0
    %4649 = vmatprep.subr.mxu0 0.0
    %4650 = vmatpush1.msra.mxu0 0.0
    %4651 = vmatprep.subr.mxu0 0.0
    %4652 = vmatpush1.msra.mxu0 0.0
    %4653 = vmatprep.subr.mxu0 0.0
    %4654 = vmatpush1.msra.mxu0 0.0
    %4655 = vmatprep.subr.mxu0 0.0
    %4656 = vmatpush1.msra.mxu0 0.0
    %4657 = vmatprep.subr.mxu0 0.0
    %4658 = vmatpush1.msra.mxu0 0.0
    %4659 = vmatprep.subr.mxu0 0.0
    %4660 = vmatpush1.msra.mxu0 0.0
    %4661 = vmatprep.subr.mxu0 0.0
    %4662 = vmatpush1.msra.mxu0 0.0
    %4663 = vmatprep.subr.mxu0 0.0
    %4664 = vmatpush1.msra.mxu0 0.0
    %4665 = vmatprep.subr.mxu0 0.0
    %4666 = vmatpush1.msra.mxu0 0.0
    %4667 = vmatprep.subr.mxu0 0.0
    %4668 = vmatpush1.msra.mxu0 0.0
    %4669 = vmatprep.mubr.f32.mxu0 0.0
    %4670 = vmatmul.mubr.f32.gmra.mrb[0].mxu0 %v4603
    %v4671 = vpop.f32.mrb[0].mxu0
    %v4672 = vadd.f32 0.0, %v4671
    %v4673 = vpop.f32.mrb[0].mxu0
    %4674 = vdwg.mxu0
    %4675 = vmatprep.subr.mxu0 0.0
    %4676 = vmatpush1.msra.mxu0 %v100
    %4677 = vmatprep.subr.mxu0 0.0
    %4678 = vmatpush1.msra.mxu0 0.0
    %4679 = vmatprep.subr.mxu0 0.0
    %4680 = vmatpush1.msra.mxu0 0.0
    %4681 = vmatprep.subr.mxu0 0.0
    %4682 = vmatpush1.msra.mxu0 0.0
    %4683 = vmatprep.subr.mxu0 0.0
    %4684 = vmatpush1.msra.mxu0 0.0
    %4685 = vmatprep.subr.mxu0 0.0
    %4686 = vmatpush1.msra.mxu0 0.0
    %4687 = vmatprep.subr.mxu0 0.0
    %4688 = vmatpush1.msra.mxu0 0.0
    %4689 = vmatprep.subr.mxu0 0.0
    %4690 = vmatpush1.msra.mxu0 0.0
    %4691 = vmatprep.subr.mxu0 0.0
    %4692 = vmatpush1.msra.mxu0 0.0
    %4693 = vmatprep.subr.mxu0 0.0
    %4694 = vmatpush1.msra.mxu0 0.0
    %4695 = vmatprep.subr.mxu0 0.0
    %4696 = vmatpush1.msra.mxu0 0.0
    %4697 = vmatprep.subr.mxu0 0.0
    %4698 = vmatpush1.msra.mxu0 0.0
    %4699 = vmatprep.subr.mxu0 0.0
    %4700 = vmatpush1.msra.mxu0 0.0
    %4701 = vmatprep.subr.mxu0 0.0
    %4702 = vmatpush1.msra.mxu0 0.0
    %4703 = vmatprep.subr.mxu0 0.0
    %4704 = vmatpush1.msra.mxu0 0.0
    %4705 = vmatprep.subr.mxu0 0.0
    %4706 = vmatpush1.msra.mxu0 0.0
    %4707 = vmatprep.subr.mxu0 0.0
    %4708 = vmatpush1.msra.mxu0 0.0
    %4709 = vmatprep.subr.mxu0 0.0
    %4710 = vmatpush1.msra.mxu0 0.0
    %4711 = vmatprep.subr.mxu0 0.0
    %4712 = vmatpush1.msra.mxu0 0.0
    %4713 = vmatprep.subr.mxu0 0.0
    %4714 = vmatpush1.msra.mxu0 0.0
    %4715 = vmatprep.subr.mxu0 0.0
    %4716 = vmatpush1.msra.mxu0 0.0
    %4717 = vmatprep.subr.mxu0 0.0
    %4718 = vmatpush1.msra.mxu0 0.0
    %4719 = vmatprep.subr.mxu0 0.0
    %4720 = vmatpush1.msra.mxu0 0.0
    %4721 = vmatprep.subr.mxu0 0.0
    %4722 = vmatpush1.msra.mxu0 0.0
    %4723 = vmatprep.subr.mxu0 0.0
    %4724 = vmatpush1.msra.mxu0 0.0
    %4725 = vmatprep.subr.mxu0 0.0
    %4726 = vmatpush1.msra.mxu0 0.0
    %4727 = vmatprep.subr.mxu0 0.0
    %4728 = vmatpush1.msra.mxu0 0.0
    %4729 = vmatprep.subr.mxu0 0.0
    %4730 = vmatpush1.msra.mxu0 0.0
    %4731 = vmatprep.subr.mxu0 0.0
    %4732 = vmatpush1.msra.mxu0 0.0
    %4733 = vmatprep.subr.mxu0 0.0
    %4734 = vmatpush1.msra.mxu0 0.0
    %4735 = vmatprep.subr.mxu0 0.0
    %4736 = vmatpush1.msra.mxu0 0.0
    %4737 = vmatprep.subr.mxu0 0.0
    %4738 = vmatpush1.msra.mxu0 0.0
    %4739 = vmatprep.mubr.f32.mxu0 0.0
    %4740 = vmatmul.mubr.f32.gmra.mrb[0].mxu0 %v4603
    %v4741 = vpop.f32.mrb[0].mxu0
    %v4742 = vadd.f32 0.0, %v4741
    %v4743 = vpop.f32.mrb[0].mxu0
    %4744 = vdwg.mxu0
    %4745 = vmatprep.subr.mxu0 0.0
    %4746 = vmatpush1.msra.mxu0 %v101
    %4747 = vmatprep.subr.mxu0 0.0
    %4748 = vmatpush1.msra.mxu0 0.0
    %4749 = vmatprep.subr.mxu0 0.0
    %4750 = vmatpush1.msra.mxu0 0.0
    %4751 = vmatprep.subr.mxu0 0.0
    %4752 = vmatpush1.msra.mxu0 0.0
    %4753 = vmatprep.subr.mxu0 0.0
    %4754 = vmatpush1.msra.mxu0 0.0
    %4755 = vmatprep.subr.mxu0 0.0
    %4756 = vmatpush1.msra.mxu0 0.0
    %4757 = vmatprep.subr.mxu0 0.0
    %4758 = vmatpush1.msra.mxu0 0.0
    %4759 = vmatprep.subr.mxu0 0.0
    %4760 = vmatpush1.msra.mxu0 0.0
    %4761 = vmatprep.subr.mxu0 0.0
    %4762 = vmatpush1.msra.mxu0 0.0
    %4763 = vmatprep.subr.mxu0 0.0
    %4764 = vmatpush1.msra.mxu0 0.0
    %4765 = vmatprep.subr.mxu0 0.0
    %4766 = vmatpush1.msra.mxu0 0.0
    %4767 = vmatprep.subr.mxu0 0.0
    %4768 = vmatpush1.msra.mxu0 0.0
    %4769 = vmatprep.subr.mxu0 0.0
    %4770 = vmatpush1.msra.mxu0 0.0
    %4771 = vmatprep.subr.mxu0 0.0
    %4772 = vmatpush1.msra.mxu0 0.0
    %4773 = vmatprep.subr.mxu0 0.0
    %4774 = vmatpush1.msra.mxu0 0.0
    %4775 = vmatprep.subr.mxu0 0.0
    %4776 = vmatpush1.msra.mxu0 0.0
    %4777 = vmatprep.subr.mxu0 0.0
    %4778 = vmatpush1.msra.mxu0 0.0
    %4779 = vmatprep.subr.mxu0 0.0
    %4780 = vmatpush1.msra.mxu0 0.0
    %4781 = vmatprep.subr.mxu0 0.0
    %4782 = vmatpush1.msra.mxu0 0.0
    %4783 = vmatprep.subr.mxu0 0.0
    %4784 = vmatpush1.msra.mxu0 0.0
    %4785 = vmatprep.subr.mxu0 0.0
    %4786 = vmatpush1.msra.mxu0 0.0
    %4787 = vmatprep.subr.mxu0 0.0
    %4788 = vmatpush1.msra.mxu0 0.0
    %4789 = vmatprep.subr.mxu0 0.0
    %4790 = vmatpush1.msra.mxu0 0.0
    %4791 = vmatprep.subr.mxu0 0.0
    %4792 = vmatpush1.msra.mxu0 0.0
    %4793 = vmatprep.subr.mxu0 0.0
    %4794 = vmatpush1.msra.mxu0 0.0
    %4795 = vmatprep.subr.mxu0 0.0
    %4796 = vmatpush1.msra.mxu0 0.0
    %4797 = vmatprep.subr.mxu0 0.0
    %4798 = vmatpush1.msra.mxu0 0.0
    %4799 = vmatprep.subr.mxu0 0.0
    %4800 = vmatpush1.msra.mxu0 0.0
    %4801 = vmatprep.subr.mxu0 0.0
    %4802 = vmatpush1.msra.mxu0 0.0
    %4803 = vmatprep.subr.mxu0 0.0
    %4804 = vmatpush1.msra.mxu0 0.0
    %4805 = vmatprep.subr.mxu0 0.0
    %4806 = vmatpush1.msra.mxu0 0.0
    %4807 = vmatprep.subr.mxu0 0.0
    %4808 = vmatpush1.msra.mxu0 0.0
    %4809 = vmatprep.mubr.f32.mxu0 0.0
    %4810 = vmatmul.mubr.f32.gmra.mrb[0].mxu0 %v4603
    %v4811 = vpop.f32.mrb[0].mxu0
    %v4812 = vadd.f32 %v3209, %v4811
    %v4813 = vpop.f32.mrb[0].mxu0
    %4814 = vdwg.mxu0
    %v4817 = vunpack.c.l.s4 1983009808
    %v4818 = vunpack.c.0.s8 %v4817
    %v4819 = vlaneseq
    %v4820 = vshrl.u32 %v4819, 7
    %v4821 = vsub.s32 %v4818, %v4820
    %v4822 = vrot.slane %v4672, %v4821
    %v4823 = vrot.slane %v4822, 7
    %v4826 = vadd.f32 %v584, %v4823
    %v4827 = vadd.f32 %v594, %v4822
    %v4828 = vxor.u32 %v4826, 2147483648
    %v4829 = vxor.u32 %v4827, 2147483648
    %v4830 = vmul.f32 %v4828, 1.442695
    %v4831 = vpow.pop %v4830
    %v4832 = vmul.f32 %v4829, 1.442695
    %v4833 = vpow.pop %v4832
    %v4834 = vadd.f32 %v4831, 1.0
    %v4835 = vadd.f32 %v4833, 1.0
    %v4836 = vrcp.pop %v4834
    %v4837 = vmul.f32 1.0, %v4836
    %v4838 = vrcp.pop %v4835
    %v4839 = vmul.f32 1.0, %v4838
    %v4842 = vunpack.c.l.s4 1983009808
    %v4843 = vunpack.c.0.s8 %v4842
    %v4844 = vlaneseq
    %v4845 = vshrl.u32 %v4844, 7
    %v4846 = vsub.s32 %v4843, %v4845
    %v4847 = vrot.slane %v4742, %v4846
    %v4848 = vrot.slane %v4847, 7
    %v4851 = vadd.f32 %v709, %v4848
    %v4852 = vadd.f32 %v719, %v4847
    %v4853 = vxor.u32 %v4851, 2147483648
    %v4854 = vxor.u32 %v4852, 2147483648
    %v4855 = vmul.f32 %v4853, 1.442695
    %v4856 = vpow.pop %v4855
    %v4857 = vmul.f32 %v4854, 1.442695
    %v4858 = vpow.pop %v4857
    %v4859 = vadd.f32 %v4856, 1.0
    %v4860 = vadd.f32 %v4858, 1.0
    %v4861 = vrcp.pop %v4859
    %v4862 = vmul.f32 1.0, %v4861
    %v4863 = vrcp.pop %v4860
    %v4864 = vmul.f32 1.0, %v4863
    %v4867 = vunpack.c.l.s4 1983009808
    %v4868 = vunpack.c.0.s8 %v4867
    %v4869 = vlaneseq
    %v4870 = vshrl.u32 %v4869, 7
    %v4871 = vsub.s32 %v4868, %v4870
    %v4872 = vrot.slane %v4812, %v4871
    %v4873 = vrot.slane %v4872, 7
    %v4876 = vmul.f32 %v4837, %v4873
    %v4877 = vmul.f32 %v4839, %v4872
    %v4878 = vadd.f32 %v826, %v4876
    %v4879 = vadd.f32 %v836, %v4877
    %v4880 = vtanh.pop %v4878
    %v4881 = vtanh.pop %v4879
    %v4882 = vsub.f32 1.0, %v4862
    %v4883 = vsub.f32 1.0, %v4864
    %v4884 = vmul.f32 %v4882, %v4880
    %v4885 = vmul.f32 %v4883, %v4881
    %v4886 = vrot.slane %v4590, 7
    %v4887 = vrot.slane %v4591, 7
    %v4890 = vmul.f32 %v4862, %v4886
    %v4891 = vmul.f32 %v4864, %v4887
    %v4892 = vadd.f32 %v4884, %v4890
    %v4893 = vadd.f32 %v4885, %v4891
    %v4896 = vlaneseq
    %v4897 = vshrl.u32 %v4896, 7
    %v4898 = vsub.s32 1, %v4897
    %v4899 = vrot.slane %v4892, %v4898
    %v4900 = vlaneseq
    %v4901 = vshrl.u32 %v4900, 7
    %v4902 = vsub.s32 1, %v4901
    %v4903 = vrot.slane %v4893, %v4902
    %vm4904 = vcmask 1042434
    %v4905 = vsel %vm4904, %v4903, %v4899
    %vm4907 = vcmask 59393
    %4908 = vst.msk [vmem:[#allocation7 - $0x1] sm:$0x6] %vm4907, %v4905
    %vm4917 = vcmask 1040384
    %v4918 = vsel %vm4917, %v3378, %v3680
    %v4919 = vsel %vm4917, %v3379, %v3681
    %vm4920 = vcmask 1041408
    %v4921 = vsel %vm4920, %v4918, %v3991
    %v4922 = vsel %vm4920, %v4919, %v3995
    %vm4923 = vcmask 1042432
    %v4924 = vsel %vm4923, %v4921, %v4293
    %v4925 = vsel %vm4923, %v4922, %v4297
    %v4926 = vsel %vm150, %v4924, %v4597
    %v4927 = vsel %vm150, %v4925, %v4601
    %vm4928 = vcmask 1044480
    %v4929 = vsel %vm4928, %v4926, %v4899
    %v4930 = vsel %vm4928, %v4927, %v4903
    %v4933 = vcombine.high %v4929, %v4929
    %v4935 = vunpack.c.l.s4 1983009808
    %v4936 = vunpack.c.0.s8 %v4935
    %v4937 = vlaneseq
    %v4938 = vshrl.u32 %v4937, 7
    %v4939 = vsub.s32 %v4936, %v4938
    %v4940 = vrot.slane %v4929, %v4939
    %v4942 = vunpack.c.l.s4 1983009808
    %v4943 = vunpack.c.0.s8 %v4942
    %v4944 = vlaneseq
    %v4945 = vshrl.u32 %v4944, 7
    %v4946 = vsub.s32 %v4943, %v4945
    %v4947 = vrot.slane %v4933, %v4946
    %v4948 = vcombine.high %v4940, %v4940
    %v4949 = vcombine.high %v4930, %v4930
    %v4951 = vunpack.c.l.s4 1983009808
    %v4952 = vunpack.c.0.s8 %v4951
    %v4953 = vlaneseq
    %v4954 = vshrl.u32 %v4953, 7
    %v4955 = vsub.s32 %v4952, %v4954
    %v4956 = vrot.slane %v4930, %v4955
    %v4958 = vunpack.c.l.s4 1983009808
    %v4959 = vunpack.c.0.s8 %v4958
    %v4960 = vlaneseq
    %v4961 = vshrl.u32 %v4960, 7
    %v4962 = vsub.s32 %v4959, %v4961
    %v4963 = vrot.slane %v4949, %v4962
    %v4964 = vcombine.high %v4956, %v4956
    %v4965 = vld [vmem:[%s12] sm:$0xff]
    %v4966 = vld [vmem:[%s13] sm:$0x1]
    %v4968 = vlaneseq
    %v4969 = vshrl.u32 %v4968, 7
    %v4970 = vsub.s32 0, %v4969
    %v4971 = vrot.slane %v4966, %v4970
    %v4973 = vcombine.low %v4940, %v4948
    %v4974 = vcombine.low %v4947, %v4956
    %v4976 = vunpack.c.l.s4 1983009808
    %v4977 = vunpack.c.0.s8 %v4976
    %v4978 = vlaneseq
    %v4979 = vshrl.u32 %v4978, 7
    %v4980 = vsub.s32 %v4977, %v4979
    %v4981 = vrot.slane %v4973, %v4980
    %v4983 = vunpack.c.l.s4 1983009808
    %v4984 = vunpack.c.0.s8 %v4983
    %v4985 = vlaneseq
    %v4986 = vshrl.u32 %v4985, 7
    %v4987 = vsub.s32 %v4984, %v4986
    %v4988 = vrot.slane %v4974, %v4987
    %v4989 = vcombine.low %v4981, %v4988
    %v4990 = vcombine.low %v4964, %v4963
    %v4992 = vunpack.c.l.s4 1983009808
    %v4993 = vunpack.c.0.s8 %v4992
    %v4994 = vlaneseq
    %v4995 = vshrl.u32 %v4994, 7
    %v4996 = vsub.s32 %v4993, %v4995
    %v4997 = vrot.slane %v4990, %v4996
    %v4998 = vsel %vm843, %v4989, 0
    %v5000 = vsel %vm843, %v4997, 0
    %5002 = vmatprep.subr.mxu0 0.0
    %5003 = vmatpush1.msra.mxu0 %v4965
    %5004 = vmatprep.subr.mxu0 0.0
    %5005 = vmatpush1.msra.mxu0 0.0
    %5006 = vmatprep.subr.mxu0 0.0
    %5007 = vmatpush1.msra.mxu0 0.0
    %5008 = vmatprep.subr.mxu0 0.0
    %5009 = vmatpush1.msra.mxu0 0.0
    %5010 = vmatprep.subr.mxu0 0.0
    %5011 = vmatpush1.msra.mxu0 0.0
    %5012 = vmatprep.subr.mxu0 0.0
    %5013 = vmatpush1.msra.mxu0 0.0
    %5014 = vmatprep.subr.mxu0 0.0
    %5015 = vmatpush1.msra.mxu0 0.0
    %5016 = vmatprep.subr.mxu0 0.0
    %5017 = vmatpush1.msra.mxu0 0.0
    %5018 = vmatprep.subr.mxu0 0.0
    %5019 = vmatpush1.msra.mxu0 0.0
    %5020 = vmatprep.subr.mxu0 0.0
    %5021 = vmatpush1.msra.mxu0 0.0
    %5022 = vmatprep.subr.mxu0 0.0
    %5023 = vmatpush1.msra.mxu0 0.0
    %5024 = vmatprep.subr.mxu0 0.0
    %5025 = vmatpush1.msra.mxu0 0.0
    %5026 = vmatprep.subr.mxu0 0.0
    %5027 = vmatpush1.msra.mxu0 0.0
    %5028 = vmatprep.subr.mxu0 0.0
    %5029 = vmatpush1.msra.mxu0 0.0
    %5030 = vmatprep.subr.mxu0 0.0
    %5031 = vmatpush1.msra.mxu0 0.0
    %5032 = vmatprep.subr.mxu0 0.0
    %5033 = vmatpush1.msra.mxu0 0.0
    %5034 = vmatprep.subr.mxu0 0.0
    %5035 = vmatpush1.msra.mxu0 0.0
    %5036 = vmatprep.subr.mxu0 0.0
    %5037 = vmatpush1.msra.mxu0 0.0
    %5038 = vmatprep.subr.mxu0 0.0
    %5039 = vmatpush1.msra.mxu0 0.0
    %5040 = vmatprep.subr.mxu0 0.0
    %5041 = vmatpush1.msra.mxu0 0.0
    %5042 = vmatprep.subr.mxu0 0.0
    %5043 = vmatpush1.msra.mxu0 0.0
    %5044 = vmatprep.subr.mxu0 0.0
    %5045 = vmatpush1.msra.mxu0 0.0
    %5046 = vmatprep.subr.mxu0 0.0
    %5047 = vmatpush1.msra.mxu0 0.0
    %5048 = vmatprep.subr.mxu0 0.0
    %5049 = vmatpush1.msra.mxu0 0.0
    %5050 = vmatprep.subr.mxu0 0.0
    %5051 = vmatpush1.msra.mxu0 0.0
    %5052 = vmatprep.subr.mxu0 0.0
    %5053 = vmatpush1.msra.mxu0 0.0
    %5054 = vmatprep.subr.mxu0 0.0
    %5055 = vmatpush1.msra.mxu0 0.0
    %5056 = vmatprep.subr.mxu0 0.0
    %5057 = vmatpush1.msra.mxu0 0.0
    %5058 = vmatprep.subr.mxu0 0.0
    %5059 = vmatpush1.msra.mxu0 0.0
    %5060 = vmatprep.subr.mxu0 0.0
    %5061 = vmatpush1.msra.mxu0 0.0
    %5062 = vmatprep.subr.mxu0 0.0
    %5063 = vmatpush1.msra.mxu0 0.0
    %5064 = vmatprep.subr.mxu0 0.0
    %5065 = vmatpush1.msra.mxu0 0.0
    %5066 = vmatprep.mubr.f32.mxu0 0.0
    %5067 = vmatmul.mubr.f32.gmra.mrb[0].mxu0 %v4998
    %v5068 = vpop.f32.mrb[0].mxu0
    %v5069 = vadd.f32 %v4971, %v5068
    %v5070 = vpop.f32.mrb[0].mxu0
    %5071 = vmatprep.mubr.f32.mxu0 0.0
    %5072 = vmatmul.mubr.f32.gmra.mrb[0].mxu0 %v5000
    %v5073 = vpop.f32.mrb[0].mxu0
    %v5074 = vadd.f32 %v4971, %v5073
    %v5075 = vpop.f32.mrb[0].mxu0
    %5076 = vdwg.mxu0
    %vm5077 = vcmp.ge.f32.partialorder %v5069, 0.0
    %vm5078 = vcmp.ge.f32.partialorder %v5074, 0.0
    %v5079 = vmul.f32 %v5069, 0.01
    %v5080 = vmul.f32 %v5074, 0.01
    %v5081 = vsel %vm5077, %v5069, %v5079
    %v5082 = vsel %vm5078, %v5074, %v5080
    %v5083 = vld [vmem:[%s14] sm:$0xff]
    %v5084 = vld [vmem:[%s15] sm:$0x1]
    %v5086 = vlaneseq
    %v5087 = vshrl.u32 %v5086, 7
    %v5088 = vsub.s32 0, %v5087
    %v5089 = vrot.slane %v5084, %v5088
    %v5092 = vsel %vm843, %v5081, 0
    %v5095 = vsel %vm843, %v5082, 0
    %5097 = vmatprep.subr.mxu0 0.0
    %5098 = vmatpush1.msra.mxu0 %v5083
    %5099 = vmatprep.subr.mxu0 0.0
    %5100 = vmatpush1.msra.mxu0 0.0
    %5101 = vmatprep.subr.mxu0 0.0
    %5102 = vmatpush1.msra.mxu0 0.0
    %5103 = vmatprep.subr.mxu0 0.0
    %5104 = vmatpush1.msra.mxu0 0.0
    %5105 = vmatprep.subr.mxu0 0.0
    %5106 = vmatpush1.msra.mxu0 0.0
    %5107 = vmatprep.subr.mxu0 0.0
    %5108 = vmatpush1.msra.mxu0 0.0
    %5109 = vmatprep.subr.mxu0 0.0
    %5110 = vmatpush1.msra.mxu0 0.0
    %5111 = vmatprep.subr.mxu0 0.0
    %5112 = vmatpush1.msra.mxu0 0.0
    %5113 = vmatprep.subr.mxu0 0.0
    %5114 = vmatpush1.msra.mxu0 0.0
    %5115 = vmatprep.subr.mxu0 0.0
    %5116 = vmatpush1.msra.mxu0 0.0
    %5117 = vmatprep.subr.mxu0 0.0
    %5118 = vmatpush1.msra.mxu0 0.0
    %5119 = vmatprep.subr.mxu0 0.0
    %5120 = vmatpush1.msra.mxu0 0.0
    %5121 = vmatprep.subr.mxu0 0.0
    %5122 = vmatpush1.msra.mxu0 0.0
    %5123 = vmatprep.subr.mxu0 0.0
    %5124 = vmatpush1.msra.mxu0 0.0
    %5125 = vmatprep.subr.mxu0 0.0
    %5126 = vmatpush1.msra.mxu0 0.0
    %5127 = vmatprep.subr.mxu0 0.0
    %5128 = vmatpush1.msra.mxu0 0.0
    %5129 = vmatprep.subr.mxu0 0.0
    %5130 = vmatpush1.msra.mxu0 0.0
    %5131 = vmatprep.subr.mxu0 0.0
    %5132 = vmatpush1.msra.mxu0 0.0
    %5133 = vmatprep.subr.mxu0 0.0
    %5134 = vmatpush1.msra.mxu0 0.0
    %5135 = vmatprep.subr.mxu0 0.0
    %5136 = vmatpush1.msra.mxu0 0.0
    %5137 = vmatprep.subr.mxu0 0.0
    %5138 = vmatpush1.msra.mxu0 0.0
    %5139 = vmatprep.subr.mxu0 0.0
    %5140 = vmatpush1.msra.mxu0 0.0
    %5141 = vmatprep.subr.mxu0 0.0
    %5142 = vmatpush1.msra.mxu0 0.0
    %5143 = vmatprep.subr.mxu0 0.0
    %5144 = vmatpush1.msra.mxu0 0.0
    %5145 = vmatprep.subr.mxu0 0.0
    %5146 = vmatpush1.msra.mxu0 0.0
    %5147 = vmatprep.subr.mxu0 0.0
    %5148 = vmatpush1.msra.mxu0 0.0
    %5149 = vmatprep.subr.mxu0 0.0
    %5150 = vmatpush1.msra.mxu0 0.0
    %5151 = vmatprep.subr.mxu0 0.0
    %5152 = vmatpush1.msra.mxu0 0.0
    %5153 = vmatprep.subr.mxu0 0.0
    %5154 = vmatpush1.msra.mxu0 0.0
    %5155 = vmatprep.subr.mxu0 0.0
    %5156 = vmatpush1.msra.mxu0 0.0
    %5157 = vmatprep.subr.mxu0 0.0
    %5158 = vmatpush1.msra.mxu0 0.0
    %5159 = vmatprep.subr.mxu0 0.0
    %5160 = vmatpush1.msra.mxu0 0.0
    %5161 = vmatprep.mubr.f32.mxu0 0.0
    %5162 = vmatmul.mubr.f32.gmra.mrb[0].mxu0 %v5092
    %v5163 = vpop.f32.mrb[0].mxu0
    %v5164 = vadd.f32 %v5089, %v5163
    %v5165 = vpop.f32.mrb[0].mxu0
    %5166 = vmatprep.mubr.f32.mxu0 0.0
    %5167 = vmatmul.mubr.f32.gmra.mrb[0].mxu0 %v5095
    %v5168 = vpop.f32.mrb[0].mxu0
    %v5169 = vadd.f32 %v5089, %v5168
    %v5170 = vpop.f32.mrb[0].mxu0
    %5171 = vdwg.mxu0
    %v5174 = vcombine.high %v5164, %v5164
    %v5176 = vunpack.c.l.s4 1983009808
    %v5177 = vunpack.c.0.s8 %v5176
    %v5178 = vlaneseq
    %v5179 = vshrl.u32 %v5178, 7
    %v5180 = vsub.s32 %v5177, %v5179
    %v5181 = vrot.slane %v5164, %v5180
    %v5183 = vunpack.c.l.s4 1983009808
    %v5184 = vunpack.c.0.s8 %v5183
    %v5185 = vlaneseq
    %v5186 = vshrl.u32 %v5185, 7
    %v5187 = vsub.s32 %v5184, %v5186
    %v5188 = vrot.slane %v5174, %v5187
    %v5189 = vcombine.high %v5181, %v5181
    %v5190 = vcombine.high %v5188, %v5188
    %v5192 = vunpack.c.l.s4 1983009808
    %v5193 = vunpack.c.0.s8 %v5192
    %v5194 = vlaneseq
    %v5195 = vshrl.u32 %v5194, 7
    %v5196 = vsub.s32 %v5193, %v5195
    %v5197 = vrot.slane %v5169, %v5196
    %v5198 = vcombine.high %v5197, %v5197
    %v5199 = vcombine.low %v5181, %v5189
    %v5201 = vunpack.c.l.s4 1983009808
    %v5202 = vunpack.c.0.s8 %v5201
    %v5203 = vlaneseq
    %v5204 = vshrl.u32 %v5203, 7
    %v5205 = vsub.s32 %v5202, %v5204
    %v5206 = vrot.slane %v5199, %v5205
    %v5208 = vunpack.c.l.s4 1983009808
    %v5209 = vunpack.c.0.s8 %v5208
    %v5210 = vlaneseq
    %v5211 = vshrl.u32 %v5210, 7
    %v5212 = vsub.s32 %v5209, %v5211
    %v5213 = vrot.slane %v5188, %v5212
    %v5214 = vcombine.low %v5206, %v5213
    %v5215 = vcombine.low %v5190, %v5197
    %v5217 = vunpack.c.l.s4 1983009808
    %v5218 = vunpack.c.0.s8 %v5217
    %v5219 = vlaneseq
    %v5220 = vshrl.u32 %v5219, 7
    %v5221 = vsub.s32 %v5218, %v5220
    %v5222 = vrot.slane %v5215, %v5221
    %v5224 = vunpack.c.l.s4 1983009808
    %v5225 = vunpack.c.0.s8 %v5224
    %v5226 = vlaneseq
    %v5227 = vshrl.u32 %v5226, 7
    %v5228 = vsub.s32 %v5225, %v5227
    %v5229 = vrot.slane %v5198, %v5228
    %v5230 = vcombine.low %v5222, %v5229
    %vm5233 = vcmask 13312
    %5234 = vst.msk [vmem:[%s16] sm:$0x3f] %vm5233, %v5214
    %5235 = vst.msk [vmem:[%s16 + $0x8] sm:$0x3f] %vm5233, %v5230
    // Predicated region
    $region74: #{encoder_decoder_forward.1} parent=1 // pred_check
      _
    $region75: #{encoder_decoder_forward.1} parent=1 // pred_check_branch
      %5237 = sbr.rel (0) target = $region77
    $region76: #{encoder_decoder_forward.1} parent=1 // pred_region
      _
    $region77: #{encoder_decoder_forward.1} parent=1 // pred_fallthru
      _
    // Predicated region
    $region78: #{encoder_decoder_forward.1} parent=1 // pred_check
      _
    $region79: #{encoder_decoder_forward.1} parent=1 // pred_check_branch
      %5239 = sbr.rel (0) target = $region81
    $region80: #{encoder_decoder_forward.1} parent=1 // pred_region
      %s5241 = ssub.s32 32, 32
      %5242 = vsyncadd [#allocation4], %s5241
      %s5244 = sshll.u32 [#allocation7], 4
      %s5245 = int_to_ptr.vmem [resolvable:$true] %s5244
      %5247 = dma.vmem_to_hbm [thread:$0]  %s5245, 32, %s17, [#allocation4]
    $region81: #{encoder_decoder_forward.1} parent=1 // pred_fallthru
      _
    // Predicated region
    $region82: #{encoder_decoder_forward.1} parent=1 // pred_check
      _
    $region83: #{encoder_decoder_forward.1} parent=1 // pred_check_branch
      %5249 = sbr.rel (0) target = $region85
    $region84: #{encoder_decoder_forward.1} parent=1 // pred_region
      _
    $region85: #{encoder_decoder_forward.1} parent=1 // pred_fallthru
      _
    // Predicated region
    $region86: #{encoder_decoder_forward.1} parent=1 // pred_check
      _
    $region87: #{encoder_decoder_forward.1} parent=1 // pred_check_branch
      %5251 = sbr.rel (0) target = $region89
    $region88: #{encoder_decoder_forward.1} parent=1 // pred_region
      %5252 = dma.done [#allocation4], 32
    $region89: #{encoder_decoder_forward.1} parent=1 // pred_fallthru
      _
    %5253 = vsyncpa [#allocation3], 1
    %5254 = vsyncpa [#allocation6], 1
    %5255 = vsyncpa [#allocation4], 1

</llo_original>
